<compile_context>
chip_gen: v5e
topology: v5e:2x2
jax: 0.10.0
libtpu: 0.0.40
codegen_flags: <defaults>
</compile_context>

<pallas_src>
import jax
import jax.numpy as jnp
from jax.experimental import pallas as pl
from jax.experimental.pallas import tpu as pltpu

EPS = 1e-5
STRIDE = 4
POOL = 4
CP = 128  # lane-padded channel width (48 -> 128, one full vreg of lanes)


def _make_head_kernel(n_rows, n_shift, frame, cp, nvalid, inv_count):
    """Builds the fused conv+BN+ReLU+pool kernel (Python constants baked in).

    n_rows   : N*U, conv rows computed per pool phase (U frames/sample, mult. of 8)
    n_shift  : number of 16-wide frame shifts covering the conv window (6)
    frame    : frame width = STRIDE * POOL = 16
    cp       : lane-padded channel count (128)
    nvalid   : per-phase count of valid conv positions per sample
    inv_count: 1 / (N * L_out), reciprocal of the true BN element count
    """

    def kernel(xf_ref, w_ref, q_ref, gamma_ref, beta_ref, out_ref):
        # xf_ref   : (n_rows + 8, frame) f32  zero-padded raw-signal frames
        # w_ref    : (n_shift * frame, POOL * cp) f32 phase-packed conv weights
        # q_ref    : (n_rows, 1) i32  within-sample frame index of each row
        # gamma_ref, beta_ref : (1, cp) f32 BN affine parameters (zero-padded)
        # out_ref  : (n_rows, cp) f32 pooled output (tail rows / pad lanes junk)
        xf = xf_ref[...]
        q_idx = q_ref[...]

        # Conv1d(1, C, 80, stride=4): for pool phase p, conv position 4q+p of
        # sample n reads x[n, 16q + 4p : 16q + 4p + 80], i.e. frames q..q+5
        # against a phase-shifted, zero-padded weight block.  All 4 phases are
        # packed along lanes, so each shift is ONE wide matmul.
        y = None
        for a in range(n_shift):
            xa = xf[a:a + n_rows, :]                            # (n_rows, 16)
            wa = w_ref[a * frame:(a + 1) * frame, :]            # (16, 4*cp)
            t = jnp.dot(xa, wa, preferred_element_type=jnp.float32)
            y = t if y is None else y + t                       # (n_rows, 4*cp)

        # Vreg-aligned per-phase views (lane offsets are multiples of 128).
        ys = [y[:, p * cp:(p + 1) * cp] for p in range(POOL)]

        # Training-mode BatchNorm statistics (biased variance), single pass,
        # masking rows that are not real conv positions.  Conv bias omitted on
        # purpose: it cancels under the mean subtraction.
        tot = None
        tot_sq = None
        for p in range(POOL):
            mask = (q_idx < nvalid[p]).astype(jnp.float32)      # (n_rows, 1)
            ym = ys[p] * mask
            ps = jnp.sum(ym, axis=0, keepdims=True)
            pq = jnp.sum(ym * ys[p], axis=0, keepdims=True)
            tot = ps if tot is None else tot + ps
            tot_sq = pq if tot_sq is None else tot_sq + pq
        mean = tot * inv_count
        var = tot_sq * inv_count - mean * mean
        scale = gamma_ref[...] * jax.lax.rsqrt(var + EPS)       # folded BN
        shift = beta_ref[...] - mean * scale

        # BN + ReLU + MaxPool1d(4): elementwise max across the 4 phase slabs,
        # one contiguous, lane-dense 2-D store.
        m = ys[0] * scale + shift
        for p in range(1, POOL):
            m = jnp.maximum(m, ys[p] * scale + shift)
        out_ref[...] = jnp.maximum(m, 0.0)

    return kernel


def resnet34_head_pallas(x, w, b, gamma, beta):
    """x: (N, 1, L) f32 (NCL, like PyTorch).  Returns (N, 48, L_pool)."""
    del b  # Conv bias cancels exactly under training-mode BatchNorm.
    n_batch, c_in, length = x.shape
    assert c_in == 1
    c_out, _, k_w = w.shape
    assert c_out <= CP
    l_out = (length - k_w) // STRIDE + 1
    l_pool = l_out // POOL

    frame = STRIDE * POOL                                          # 16
    n_shift = -(-(STRIDE * (POOL - 1) + k_w) // frame)             # 6
    q_max = (l_out - 1) // POOL
    u = -(-(q_max + n_shift) // 8) * 8          # frames per sample, 8-aligned
    n_rows = n_batch * u

    # Raw signal -> (N*U, 16) frames: reshape + zero-pad only (no gather,
    # no im2col expansion on the HBM path).
    x1 = jnp.pad(x[:, 0, :], ((0, 0), (0, frame * u - length)))
    xf = jnp.pad(x1.reshape(n_batch * u, frame), ((0, 8), (0, 0)))

    # Phase-packed conv weight: for pool phase p, the (k_w, C) weight shifted
    # down by STRIDE*p rows inside an (n_shift*frame, CP) block of zeros; the
    # four phase blocks are concatenated along lanes (each padded to 128).
    wt = jnp.transpose(w[:, 0, :])                                 # (k_w, C)
    wpack = jnp.concatenate(
        [jnp.pad(wt, ((STRIDE * p, n_shift * frame - k_w - STRIDE * p),
                      (0, CP - c_out)))
         for p in range(POOL)], axis=1)                            # (96, 4*128)

    # Within-sample frame index of each row (masks pad/tail rows out of BN).
    q_idx = (jnp.arange(n_rows, dtype=jnp.int32) % u)[:, None]

    # BN params, zero-padded to the lane width (pad channels produce exact 0s).
    gpad = jnp.pad(gamma.reshape(1, c_out), ((0, 0), (0, CP - c_out)))
    bpad = jnp.pad(beta.reshape(1, c_out), ((0, 0), (0, CP - c_out)))

    nvalid = tuple(-(-(l_out - p) // POOL) for p in range(POOL))
    inv_count = 1.0 / float(n_batch * l_out)

    kernel = _make_head_kernel(n_rows, n_shift, frame, CP, nvalid, inv_count)
    vmem = lambda: pl.BlockSpec(memory_space=pltpu.MemorySpace.VMEM)
    out = pl.pallas_call(
        kernel,
        out_shape=jax.ShapeDtypeStruct((n_rows, CP), jnp.float32),
        in_specs=[vmem() for _ in range(5)],
        out_specs=vmem(),
    )(xf, wpack, q_idx, gpad, bpad)

    # Drop tail rows and pad lanes, back to (N, C, L_pool).
    out = out.reshape(n_batch, u, CP)[:, :l_pool, :c_out]
    return jnp.transpose(out, (0, 2, 1))


def reference(x, w, b, gamma, beta):
    """Pure-JAX reference reproducing the PyTorch forward (training-mode BN)."""
    n_batch, _, length = x.shape
    c_out, _, k_w = w.shape
    l_out = (length - k_w) // STRIDE + 1
    starts = jnp.arange(l_out) * STRIDE
    idx = starts[:, None] + jnp.arange(k_w)[None, :]
    patches = x[:, 0, :][:, idx]                                   # (N, L_out, K)
    y = jnp.einsum('nlk,ck->ncl', patches, w[:, 0, :]) + b[None, :, None]
    mean = jnp.mean(y, axis=(0, 2), keepdims=True)
    var = jnp.var(y, axis=(0, 2), keepdims=True)                   # biased
    y = (y - mean) / jnp.sqrt(var + EPS) * gamma[None, :, None] + beta[None, :, None]
    r = jnp.maximum(y, 0.0)
    l_pool = l_out // POOL
    return r[:, :, :l_pool * POOL].reshape(n_batch, c_out, l_pool, POOL).max(axis=-1)


if __name__ == "__main__":
    key = jax.random.PRNGKey(0)
    k1, k2, k3, k4, k5 = jax.random.split(key, 5)

    N, L = 2, 1024            # small but >= conv kernel size (80)
    C_OUT, K_W = 48, 80

    x = jax.random.normal(k1, (N, 1, L), jnp.float32)
    # Deterministic synthetic parameters (shapes from Conv1d(1,48,80)/BN(48)).
    w = jax.random.normal(k2, (C_OUT, 1, K_W), jnp.float32) / jnp.sqrt(K_W)
    b = 0.1 * jax.random.normal(k3, (C_OUT,), jnp.float32)
    gamma = 1.0 + 0.1 * jax.random.normal(k4, (C_OUT,), jnp.float32)
    beta = 0.1 * jax.random.normal(k5, (C_OUT,), jnp.float32)

    out = jax.jit(resnet34_head_pallas)(x, w, b, gamma, beta)
    out = jax.block_until_ready(out)

    l_pool = ((L - K_W) // STRIDE + 1) // POOL
    assert out.shape == (N, C_OUT, l_pool), out.shape

    ref = reference(x, w, b, gamma, beta)
    err = float(jnp.max(jnp.abs(out - ref)))
    assert err < 1e-2, f"max abs err {err}"

    print("KERNEL_OK")
</pallas_src>

<mosaic_0001>
module attributes {stable_mosaic.version = 11 : i64} {
  func.func @kernel(%arg0: memref<152x16xf32, #tpu.memory_space<vmem>>, %arg1: memref<96x512xf32, #tpu.memory_space<vmem>>, %arg2: memref<144x1xi32, #tpu.memory_space<vmem>>, %arg3: memref<1x128xf32, #tpu.memory_space<vmem>>, %arg4: memref<1x128xf32, #tpu.memory_space<vmem>>, %arg5: memref<144x128xf32, #tpu.memory_space<vmem>>) attributes {dimension_semantics = [], scalar_prefetch = 0 : i64, scratch_operands = 0 : i64, tpu.core_type = #tpu.core_type<tc>} {
    %c0 = arith.constant 0 : index
    %c0_0 = arith.constant 0 : index
    %0 = vector.load %arg0[%c0, %c0_0] : memref<152x16xf32, #tpu.memory_space<vmem>>, vector<152x16xf32>
    %c0_1 = arith.constant 0 : index
    %c0_2 = arith.constant 0 : index
    %1 = vector.load %arg2[%c0_1, %c0_2] : memref<144x1xi32, #tpu.memory_space<vmem>>, vector<144x1xi32>
    %2 = vector.extract_strided_slice %0 {offsets = [0, 0], sizes = [144, 16], strides = [1, 1]} : vector<152x16xf32> to vector<144x16xf32>
    %c0_3 = arith.constant 0 : index
    %c0_4 = arith.constant 0 : index
    %3 = vector.load %arg1[%c0_3, %c0_4] : memref<96x512xf32, #tpu.memory_space<vmem>>, vector<16x512xf32>
    %cst = arith.constant dense<0.000000e+00> : vector<144x512xf32>
    %4 = tpu.matmul %2, %3, %cst {dimension_numbers = #tpu.dot_dimension_numbers<[1], [0], [0], [1], [0, 0, 1, 1], [], []>} : vector<144x16xf32>, vector<16x512xf32>, vector<144x512xf32> -> vector<144x512xf32>
    %5 = vector.extract_strided_slice %0 {offsets = [1, 0], sizes = [144, 16], strides = [1, 1]} : vector<152x16xf32> to vector<144x16xf32>
    %c16 = arith.constant 16 : index
    %c0_5 = arith.constant 0 : index
    %6 = vector.load %arg1[%c16, %c0_5] : memref<96x512xf32, #tpu.memory_space<vmem>>, vector<16x512xf32>
    %cst_6 = arith.constant dense<0.000000e+00> : vector<144x512xf32>
    %7 = tpu.matmul %5, %6, %cst_6 {dimension_numbers = #tpu.dot_dimension_numbers<[1], [0], [0], [1], [0, 0, 1, 1], [], []>} : vector<144x16xf32>, vector<16x512xf32>, vector<144x512xf32> -> vector<144x512xf32>
    %8 = arith.addf %4, %7 : vector<144x512xf32>
    %9 = vector.extract_strided_slice %0 {offsets = [2, 0], sizes = [144, 16], strides = [1, 1]} : vector<152x16xf32> to vector<144x16xf32>
    %c32 = arith.constant 32 : index
    %c0_7 = arith.constant 0 : index
    %10 = vector.load %arg1[%c32, %c0_7] : memref<96x512xf32, #tpu.memory_space<vmem>>, vector<16x512xf32>
    %cst_8 = arith.constant dense<0.000000e+00> : vector<144x512xf32>
    %11 = tpu.matmul %9, %10, %cst_8 {dimension_numbers = #tpu.dot_dimension_numbers<[1], [0], [0], [1], [0, 0, 1, 1], [], []>} : vector<144x16xf32>, vector<16x512xf32>, vector<144x512xf32> -> vector<144x512xf32>
    %12 = arith.addf %8, %11 : vector<144x512xf32>
    %13 = vector.extract_strided_slice %0 {offsets = [3, 0], sizes = [144, 16], strides = [1, 1]} : vector<152x16xf32> to vector<144x16xf32>
    %c48 = arith.constant 48 : index
    %c0_9 = arith.constant 0 : index
    %14 = vector.load %arg1[%c48, %c0_9] : memref<96x512xf32, #tpu.memory_space<vmem>>, vector<16x512xf32>
    %cst_10 = arith.constant dense<0.000000e+00> : vector<144x512xf32>
    %15 = tpu.matmul %13, %14, %cst_10 {dimension_numbers = #tpu.dot_dimension_numbers<[1], [0], [0], [1], [0, 0, 1, 1], [], []>} : vector<144x16xf32>, vector<16x512xf32>, vector<144x512xf32> -> vector<144x512xf32>
    %16 = arith.addf %12, %15 : vector<144x512xf32>
    %17 = vector.extract_strided_slice %0 {offsets = [4, 0], sizes = [144, 16], strides = [1, 1]} : vector<152x16xf32> to vector<144x16xf32>
    %c64 = arith.constant 64 : index
    %c0_11 = arith.constant 0 : index
    %18 = vector.load %arg1[%c64, %c0_11] : memref<96x512xf32, #tpu.memory_space<vmem>>, vector<16x512xf32>
    %cst_12 = arith.constant dense<0.000000e+00> : vector<144x512xf32>
    %19 = tpu.matmul %17, %18, %cst_12 {dimension_numbers = #tpu.dot_dimension_numbers<[1], [0], [0], [1], [0, 0, 1, 1], [], []>} : vector<144x16xf32>, vector<16x512xf32>, vector<144x512xf32> -> vector<144x512xf32>
    %20 = arith.addf %16, %19 : vector<144x512xf32>
    %21 = vector.extract_strided_slice %0 {offsets = [5, 0], sizes = [144, 16], strides = [1, 1]} : vector<152x16xf32> to vector<144x16xf32>
    %c80 = arith.constant 80 : index
    %c0_13 = arith.constant 0 : index
    %22 = vector.load %arg1[%c80, %c0_13] : memref<96x512xf32, #tpu.memory_space<vmem>>, vector<16x512xf32>
    %cst_14 = arith.constant dense<0.000000e+00> : vector<144x512xf32>
    %23 = tpu.matmul %21, %22, %cst_14 {dimension_numbers = #tpu.dot_dimension_numbers<[1], [0], [0], [1], [0, 0, 1, 1], [], []>} : vector<144x16xf32>, vector<16x512xf32>, vector<144x512xf32> -> vector<144x512xf32>
    %24 = arith.addf %20, %23 : vector<144x512xf32>
    %25 = vector.extract_strided_slice %24 {offsets = [0, 0], sizes = [144, 128], strides = [1, 1]} : vector<144x512xf32> to vector<144x128xf32>
    %26 = vector.extract_strided_slice %24 {offsets = [0, 128], sizes = [144, 128], strides = [1, 1]} : vector<144x512xf32> to vector<144x128xf32>
    %27 = vector.extract_strided_slice %24 {offsets = [0, 256], sizes = [144, 128], strides = [1, 1]} : vector<144x512xf32> to vector<144x128xf32>
    %28 = vector.extract_strided_slice %24 {offsets = [0, 384], sizes = [144, 128], strides = [1, 1]} : vector<144x512xf32> to vector<144x128xf32>
    %c60_i32 = arith.constant 60 : i32
    %29 = vector.broadcast %c60_i32 : i32 to vector<144x1xi32>
    %30 = arith.cmpi slt, %1, %29 : vector<144x1xi32>
    %31 = arith.extui %30 : vector<144x1xi1> to vector<144x1xi32>
    %32 = arith.sitofp %31 : vector<144x1xi32> to vector<144x1xf32>
    %33 = vector.broadcast %32 : vector<144x1xf32> to vector<144x128xf32>
    %34 = arith.mulf %25, %33 : vector<144x128xf32>
    %cst_15 = arith.constant dense<0.000000e+00> : vector<128xf32>
    %35 = vector.multi_reduction <add>, %34, %cst_15 [0] : vector<144x128xf32> to vector<128xf32>
    %36 = vector.shape_cast %35 : vector<128xf32> to vector<1x128xf32>
    %37 = arith.mulf %34, %25 : vector<144x128xf32>
    %cst_16 = arith.constant dense<0.000000e+00> : vector<128xf32>
    %38 = vector.multi_reduction <add>, %37, %cst_16 [0] : vector<144x128xf32> to vector<128xf32>
    %39 = vector.shape_cast %38 : vector<128xf32> to vector<1x128xf32>
    %c59_i32 = arith.constant 59 : i32
    %40 = vector.broadcast %c59_i32 : i32 to vector<144x1xi32>
    %41 = arith.cmpi slt, %1, %40 : vector<144x1xi32>
    %42 = arith.extui %41 : vector<144x1xi1> to vector<144x1xi32>
    %43 = arith.sitofp %42 : vector<144x1xi32> to vector<144x1xf32>
    %44 = vector.broadcast %43 : vector<144x1xf32> to vector<144x128xf32>
    %45 = arith.mulf %26, %44 : vector<144x128xf32>
    %cst_17 = arith.constant dense<0.000000e+00> : vector<128xf32>
    %46 = vector.multi_reduction <add>, %45, %cst_17 [0] : vector<144x128xf32> to vector<128xf32>
    %47 = vector.shape_cast %46 : vector<128xf32> to vector<1x128xf32>
    %48 = arith.mulf %45, %26 : vector<144x128xf32>
    %cst_18 = arith.constant dense<0.000000e+00> : vector<128xf32>
    %49 = vector.multi_reduction <add>, %48, %cst_18 [0] : vector<144x128xf32> to vector<128xf32>
    %50 = vector.shape_cast %49 : vector<128xf32> to vector<1x128xf32>
    %51 = arith.addf %36, %47 : vector<1x128xf32>
    %52 = arith.addf %39, %50 : vector<1x128xf32>
    %c59_i32_19 = arith.constant 59 : i32
    %53 = vector.broadcast %c59_i32_19 : i32 to vector<144x1xi32>
    %54 = arith.cmpi slt, %1, %53 : vector<144x1xi32>
    %55 = arith.extui %54 : vector<144x1xi1> to vector<144x1xi32>
    %56 = arith.sitofp %55 : vector<144x1xi32> to vector<144x1xf32>
    %57 = vector.broadcast %56 : vector<144x1xf32> to vector<144x128xf32>
    %58 = arith.mulf %27, %57 : vector<144x128xf32>
    %cst_20 = arith.constant dense<0.000000e+00> : vector<128xf32>
    %59 = vector.multi_reduction <add>, %58, %cst_20 [0] : vector<144x128xf32> to vector<128xf32>
    %60 = vector.shape_cast %59 : vector<128xf32> to vector<1x128xf32>
    %61 = arith.mulf %58, %27 : vector<144x128xf32>
    %cst_21 = arith.constant dense<0.000000e+00> : vector<128xf32>
    %62 = vector.multi_reduction <add>, %61, %cst_21 [0] : vector<144x128xf32> to vector<128xf32>
    %63 = vector.shape_cast %62 : vector<128xf32> to vector<1x128xf32>
    %64 = arith.addf %51, %60 : vector<1x128xf32>
    %65 = arith.addf %52, %63 : vector<1x128xf32>
    %c59_i32_22 = arith.constant 59 : i32
    %66 = vector.broadcast %c59_i32_22 : i32 to vector<144x1xi32>
    %67 = arith.cmpi slt, %1, %66 : vector<144x1xi32>
    %68 = arith.extui %67 : vector<144x1xi1> to vector<144x1xi32>
    %69 = arith.sitofp %68 : vector<144x1xi32> to vector<144x1xf32>
    %70 = vector.broadcast %69 : vector<144x1xf32> to vector<144x128xf32>
    %71 = arith.mulf %28, %70 : vector<144x128xf32>
    %cst_23 = arith.constant dense<0.000000e+00> : vector<128xf32>
    %72 = vector.multi_reduction <add>, %71, %cst_23 [0] : vector<144x128xf32> to vector<128xf32>
    %73 = vector.shape_cast %72 : vector<128xf32> to vector<1x128xf32>
    %74 = arith.mulf %71, %28 : vector<144x128xf32>
    %cst_24 = arith.constant dense<0.000000e+00> : vector<128xf32>
    %75 = vector.multi_reduction <add>, %74, %cst_24 [0] : vector<144x128xf32> to vector<128xf32>
    %76 = vector.shape_cast %75 : vector<128xf32> to vector<1x128xf32>
    %77 = arith.addf %64, %73 : vector<1x128xf32>
    %78 = arith.addf %65, %76 : vector<1x128xf32>
    %cst_25 = arith.constant 0.00210970454 : f32
    %79 = vector.broadcast %cst_25 : f32 to vector<1x128xf32>
    %80 = arith.mulf %77, %79 : vector<1x128xf32>
    %cst_26 = arith.constant 0.00210970454 : f32
    %81 = vector.broadcast %cst_26 : f32 to vector<1x128xf32>
    %82 = arith.mulf %78, %81 : vector<1x128xf32>
    %83 = arith.mulf %80, %80 : vector<1x128xf32>
    %84 = arith.subf %82, %83 : vector<1x128xf32>
    %c0_27 = arith.constant 0 : index
    %c0_28 = arith.constant 0 : index
    %85 = vector.load %arg3[%c0_27, %c0_28] : memref<1x128xf32, #tpu.memory_space<vmem>>, vector<1x128xf32>
    %cst_29 = arith.constant 9.99999974E-6 : f32
    %86 = vector.broadcast %cst_29 : f32 to vector<1x128xf32>
    %87 = arith.addf %84, %86 : vector<1x128xf32>
    %88 = math.rsqrt %87 : vector<1x128xf32>
    %89 = arith.mulf %85, %88 : vector<1x128xf32>
    %c0_30 = arith.constant 0 : index
    %c0_31 = arith.constant 0 : index
    %90 = vector.load %arg4[%c0_30, %c0_31] : memref<1x128xf32, #tpu.memory_space<vmem>>, vector<1x128xf32>
    %91 = arith.mulf %80, %89 : vector<1x128xf32>
    %92 = arith.subf %90, %91 : vector<1x128xf32>
    %93 = vector.broadcast %89 : vector<1x128xf32> to vector<144x128xf32>
    %94 = arith.mulf %25, %93 : vector<144x128xf32>
    %95 = vector.broadcast %92 : vector<1x128xf32> to vector<144x128xf32>
    %96 = arith.addf %94, %95 : vector<144x128xf32>
    %97 = vector.broadcast %89 : vector<1x128xf32> to vector<144x128xf32>
    %98 = arith.mulf %26, %97 : vector<144x128xf32>
    %99 = vector.broadcast %92 : vector<1x128xf32> to vector<144x128xf32>
    %100 = arith.addf %98, %99 : vector<144x128xf32>
    %101 = arith.maximumf %96, %100 : vector<144x128xf32>
    %102 = vector.broadcast %89 : vector<1x128xf32> to vector<144x128xf32>
    %103 = arith.mulf %27, %102 : vector<144x128xf32>
    %104 = vector.broadcast %92 : vector<1x128xf32> to vector<144x128xf32>
    %105 = arith.addf %103, %104 : vector<144x128xf32>
    %106 = arith.maximumf %101, %105 : vector<144x128xf32>
    %107 = vector.broadcast %89 : vector<1x128xf32> to vector<144x128xf32>
    %108 = arith.mulf %28, %107 : vector<144x128xf32>
    %109 = vector.broadcast %92 : vector<1x128xf32> to vector<144x128xf32>
    %110 = arith.addf %108, %109 : vector<144x128xf32>
    %111 = arith.maximumf %106, %110 : vector<144x128xf32>
    %cst_32 = arith.constant 0.000000e+00 : f32
    %112 = vector.broadcast %cst_32 : f32 to vector<144x128xf32>
    %113 = arith.maximumf %111, %112 : vector<144x128xf32>
    %c0_33 = arith.constant 0 : index
    %c0_34 = arith.constant 0 : index
    %114 = vector.load %arg5[%c0_33, %c0_34] : memref<144x128xf32, #tpu.memory_space<vmem>>, vector<144x128xf32>
    tpu.vector_store %arg5[%c0_33, %c0_34], %113 {strides = array<i32>} : memref<144x128xf32, #tpu.memory_space<vmem>>, vector<144x128xf32>,
    return
  }
}

</mosaic_0001>

<llo_original>
// kernel: resnet34_head_pallas.1
$region0: #{resnet34_head_pallas.1}
  #allocation0 [shape = 'u32[]', space=smem, size = 0x4, offset = 0x4, fixed_abs, tag = 'smem constant byte address 0x4 - core index']
  #allocation1 [shape = 'u32[72,128]{1,0:T(1,128)}', space=vmem, size = 0x9000, scoped, tag = 'internal scratch']
  %s0 = inlined_call_operand.vmem [shape: f32[152,16], index: 0, kind: input, shape index: {}]
  %s1 = inlined_call_operand.vmem [shape: f32[96,512], index: 1, kind: input, shape index: {}]
  %s2 = inlined_call_operand.vmem [shape: s32[144,1], index: 2, kind: input, shape index: {}]
  %s3 = inlined_call_operand.vmem [shape: f32[1,128], index: 3, kind: input, shape index: {}]
  %s4 = inlined_call_operand.vmem [shape: f32[1,128], index: 4, kind: input, shape index: {}]
  %s5 = inlined_call_operand.vmem [shape: f32[144,128], index: 5, kind: output, shape index: {}]
  %s6 = sld [smem:[#allocation0]]
  $region30: #{resnet34_head_pallas.1} parent=0
    _
  %s8 = ssub.s32 1, %s6
  %s9 = scalar_select 0, %s8, %s6
  // Predicated region
  $region2: #{resnet34_head_pallas.1} parent=0 // pred_check
    _
  $region3: #{resnet34_head_pallas.1} parent=0 // pred_check_branch
    %11 = sbr.rel (0) target = $region5
  $region4: #{resnet34_head_pallas.1} parent=0 // pred_region
    _
  $region5: #{resnet34_head_pallas.1} parent=0 // pred_fallthru
    _
  // Predicated region
  $region6: #{resnet34_head_pallas.1} parent=0 // pred_check
    _
  $region7: #{resnet34_head_pallas.1} parent=0 // pred_check_branch
    %13 = sbr.rel (0) target = $region9
  $region8: #{resnet34_head_pallas.1} parent=0 // pred_region
    _
  $region9: #{resnet34_head_pallas.1} parent=0 // pred_fallthru
    _
  // Predicated region
  $region10: #{resnet34_head_pallas.1} parent=0 // pred_check
    _
  $region11: #{resnet34_head_pallas.1} parent=0 // pred_check_branch
    %15 = sbr.rel (0) target = $region13
  $region12: #{resnet34_head_pallas.1} parent=0 // pred_region
    _
  $region13: #{resnet34_head_pallas.1} parent=0 // pred_fallthru
    _
  // Predicated region
  $region14: #{resnet34_head_pallas.1} parent=0 // pred_check
    _
  $region15: #{resnet34_head_pallas.1} parent=0 // pred_check_branch
    %17 = sbr.rel (0) target = $region17
  $region16: #{resnet34_head_pallas.1} parent=0 // pred_region
    _
  $region17: #{resnet34_head_pallas.1} parent=0 // pred_fallthru
    _
  // Predicated region
  $region18: #{resnet34_head_pallas.1} parent=0 // pred_check
    _
  $region19: #{resnet34_head_pallas.1} parent=0 // pred_check_branch
    %19 = sbr.rel (0) target = $region21
  $region20: #{resnet34_head_pallas.1} parent=0 // pred_region
    _
  $region21: #{resnet34_head_pallas.1} parent=0 // pred_fallthru
    _
  %v20 = vld [vmem:[%s0] sm:$0xff]
  %v21 = vld [vmem:[%s0 + $0x8] sm:$0xff]
  %v22 = vld [vmem:[%s0 + $0x10] sm:$0xff]
  %v23 = vld [vmem:[%s0 + $0x18] sm:$0xff]
  %v24 = vld [vmem:[%s0 + $0x20] sm:$0xff]
  %v25 = vld [vmem:[%s0 + $0x28] sm:$0xff]
  %v26 = vld [vmem:[%s0 + $0x30] sm:$0xff]
  %v27 = vld [vmem:[%s0 + $0x38] sm:$0xff]
  %v28 = vld [vmem:[%s0 + $0x40] sm:$0xff]
  %v29 = vld [vmem:[%s0 + $0x48] sm:$0xff]
  %v30 = vld [vmem:[%s0 + $0x50] sm:$0xff]
  %v31 = vld [vmem:[%s0 + $0x58] sm:$0xff]
  %v32 = vld [vmem:[%s0 + $0x60] sm:$0xff]
  %v33 = vld [vmem:[%s0 + $0x68] sm:$0xff]
  %v34 = vld [vmem:[%s0 + $0x70] sm:$0xff]
  %v35 = vld [vmem:[%s0 + $0x78] sm:$0xff]
  %v36 = vld [vmem:[%s0 + $0x80] sm:$0xff]
  %v37 = vld [vmem:[%s0 + $0x88] sm:$0xff]
  %v38 = vld [vmem:[%s0 + $0x90] sm:$0xff]
  %v39 = vld [vmem:[%s2] sm:$0xff]
  %v40 = vld [vmem:[%s2 + $0x8] sm:$0xff]
  %v41 = vld [vmem:[%s2 + $0x10] sm:$0xff]
  %v42 = vld [vmem:[%s2 + $0x18] sm:$0xff]
  %v43 = vld [vmem:[%s2 + $0x20] sm:$0xff]
  %v44 = vld [vmem:[%s2 + $0x28] sm:$0xff]
  %v45 = vld [vmem:[%s2 + $0x30] sm:$0xff]
  %v46 = vld [vmem:[%s2 + $0x38] sm:$0xff]
  %v47 = vld [vmem:[%s2 + $0x40] sm:$0xff]
  %v48 = vld [vmem:[%s2 + $0x48] sm:$0xff]
  %v49 = vld [vmem:[%s2 + $0x50] sm:$0xff]
  %v50 = vld [vmem:[%s2 + $0x58] sm:$0xff]
  %v51 = vld [vmem:[%s2 + $0x60] sm:$0xff]
  %v52 = vld [vmem:[%s2 + $0x68] sm:$0xff]
  %v53 = vld [vmem:[%s2 + $0x70] sm:$0xff]
  %v54 = vld [vmem:[%s2 + $0x78] sm:$0xff]
  %v55 = vld [vmem:[%s2 + $0x80] sm:$0xff]
  %v56 = vld [vmem:[%s2 + $0x88] sm:$0xff]
  %v57 = vld [vmem:[%s1] sm:$0xff]
  %v58 = vld [vmem:[%s1 + $0x8] sm:$0xff]
  %v59 = vld [vmem:[%s1 + $0x10] sm:$0xff]
  %v60 = vld [vmem:[%s1 + $0x18] sm:$0xff]
  %v61 = vld [vmem:[%s1 + $0x20] sm:$0xff]
  %v62 = vld [vmem:[%s1 + $0x28] sm:$0xff]
  %v63 = vld [vmem:[%s1 + $0x30] sm:$0xff]
  %v64 = vld [vmem:[%s1 + $0x38] sm:$0xff]
  %v65 = vld [vmem:[%s1 + $0x40] sm:$0xff]
  %v66 = vld [vmem:[%s1 + $0x48] sm:$0xff]
  %v67 = vld [vmem:[%s1 + $0x50] sm:$0xff]
  %v68 = vld [vmem:[%s1 + $0x58] sm:$0xff]
  %v69 = vld [vmem:[%s1 + $0x60] sm:$0xff]
  %v70 = vld [vmem:[%s1 + $0x68] sm:$0xff]
  %v71 = vld [vmem:[%s1 + $0x70] sm:$0xff]
  %v72 = vld [vmem:[%s1 + $0x78] sm:$0xff]
  %vm92 = vcmask 1046528
  %v93 = vrot.slane %v20, 1
  %v94 = vrot.slane %v21, 1
  %v95 = vsel %vm92, %v93, %v94
  %v96 = vrot.slane %v22, 1
  %v97 = vsel %vm92, %v94, %v96
  %v98 = vrot.slane %v23, 1
  %v99 = vsel %vm92, %v96, %v98
  %v100 = vrot.slane %v24, 1
  %v101 = vsel %vm92, %v98, %v100
  %v102 = vrot.slane %v25, 1
  %v103 = vsel %vm92, %v100, %v102
  %v104 = vrot.slane %v26, 1
  %v105 = vsel %vm92, %v102, %v104
  %v106 = vrot.slane %v27, 1
  %v107 = vsel %vm92, %v104, %v106
  %v108 = vrot.slane %v28, 1
  %v109 = vsel %vm92, %v106, %v108
  %v110 = vrot.slane %v29, 1
  %v111 = vsel %vm92, %v108, %v110
  %v112 = vrot.slane %v30, 1
  %v113 = vsel %vm92, %v110, %v112
  %v114 = vrot.slane %v31, 1
  %v115 = vsel %vm92, %v112, %v114
  %v116 = vrot.slane %v32, 1
  %v117 = vsel %vm92, %v114, %v116
  %v118 = vrot.slane %v33, 1
  %v119 = vsel %vm92, %v116, %v118
  %v120 = vrot.slane %v34, 1
  %v121 = vsel %vm92, %v118, %v120
  %v122 = vrot.slane %v35, 1
  %v123 = vsel %vm92, %v120, %v122
  %v124 = vrot.slane %v36, 1
  %v125 = vsel %vm92, %v122, %v124
  %v126 = vrot.slane %v37, 1
  %v127 = vsel %vm92, %v124, %v126
  %v128 = vrot.slane %v38, 1
  %v129 = vsel %vm92, %v126, %v128
  %vm130 = vcmask 130048
  %v131 = vsel %vm130, %v95, 0
  %v133 = vsel %vm130, %v97, 0
  %v135 = vsel %vm130, %v99, 0
  %v137 = vsel %vm130, %v101, 0
  %v139 = vsel %vm130, %v103, 0
  %v141 = vsel %vm130, %v105, 0
  %v143 = vsel %vm130, %v107, 0
  %v145 = vsel %vm130, %v109, 0
  %v147 = vsel %vm130, %v111, 0
  %v149 = vsel %vm130, %v113, 0
  %v151 = vsel %vm130, %v115, 0
  %v153 = vsel %vm130, %v117, 0
  %v155 = vsel %vm130, %v119, 0
  %v157 = vsel %vm130, %v121, 0
  %v159 = vsel %vm130, %v123, 0
  %v161 = vsel %vm130, %v125, 0
  %v163 = vsel %vm130, %v127, 0
  %v165 = vsel %vm130, %v129, 0
  %167 = vmatpush.msra.mxu0 0.0
  %168 = vmatpush.msra.mxu0 0.0
  %169 = vmatpush.msra.mxu0 0.0
  %170 = vmatpush.msra.mxu0 0.0
  %171 = vmatpush.msra.mxu0 0.0
  %172 = vmatpush.msra.mxu0 0.0
  %173 = vmatpush.msra.mxu0 0.0
  %174 = vmatpush.msra.mxu0 0.0
  %175 = vmatpush.msra.mxu0 0.0
  %176 = vmatpush.msra.mxu0 0.0
  %177 = vmatpush.msra.mxu0 0.0
  %178 = vmatpush.msra.mxu0 0.0
  %179 = vmatpush.msra.mxu0 0.0
  %180 = vmatpush.msra.mxu0 0.0
  %181 = vmatpush.msra.mxu0 %v69
  %182 = vmatpush.msra.mxu0 %v65
  %183 = vmatmul.f32.gmra.mxu0 %v131
  %v184 = vpop.f32.mrf.mxu0
  %v185 = vadd.f32 0.0, %v184
  %186 = vmatmul.f32.gmra.mxu0 %v133
  %v187 = vpop.f32.mrf.mxu0
  %v188 = vadd.f32 0.0, %v187
  %189 = vmatmul.f32.gmra.mxu0 %v135
  %v190 = vpop.f32.mrf.mxu0
  %v191 = vadd.f32 0.0, %v190
  %192 = vmatmul.f32.gmra.mxu0 %v137
  %v193 = vpop.f32.mrf.mxu0
  %v194 = vadd.f32 0.0, %v193
  %195 = vmatmul.f32.gmra.mxu0 %v139
  %v196 = vpop.f32.mrf.mxu0
  %v197 = vadd.f32 0.0, %v196
  %198 = vmatmul.f32.gmra.mxu0 %v141
  %v199 = vpop.f32.mrf.mxu0
  %v200 = vadd.f32 0.0, %v199
  %201 = vmatmul.f32.gmra.mxu0 %v143
  %v202 = vpop.f32.mrf.mxu0
  %v203 = vadd.f32 0.0, %v202
  %204 = vmatmul.f32.gmra.mxu0 %v145
  %v205 = vpop.f32.mrf.mxu0
  %v206 = vadd.f32 0.0, %v205
  %207 = vmatmul.f32.gmra.mxu0 %v147
  %v208 = vpop.f32.mrf.mxu0
  %v209 = vadd.f32 0.0, %v208
  %210 = vmatmul.f32.gmra.mxu0 %v149
  %v211 = vpop.f32.mrf.mxu0
  %v212 = vadd.f32 0.0, %v211
  %213 = vmatmul.f32.gmra.mxu0 %v151
  %v214 = vpop.f32.mrf.mxu0
  %v215 = vadd.f32 0.0, %v214
  %216 = vmatmul.f32.gmra.mxu0 %v153
  %v217 = vpop.f32.mrf.mxu0
  %v218 = vadd.f32 0.0, %v217
  %219 = vmatmul.f32.gmra.mxu0 %v155
  %v220 = vpop.f32.mrf.mxu0
  %v221 = vadd.f32 0.0, %v220
  %222 = vmatmul.f32.gmra.mxu0 %v157
  %v223 = vpop.f32.mrf.mxu0
  %v224 = vadd.f32 0.0, %v223
  %225 = vmatmul.f32.gmra.mxu0 %v159
  %v226 = vpop.f32.mrf.mxu0
  %v227 = vadd.f32 0.0, %v226
  %228 = vmatmul.f32.gmra.mxu0 %v161
  %v229 = vpop.f32.mrf.mxu0
  %v230 = vadd.f32 0.0, %v229
  %231 = vmatmul.f32.gmra.mxu0 %v163
  %v232 = vpop.f32.mrf.mxu0
  %v233 = vadd.f32 0.0, %v232
  %234 = vmatmul.f32.gmra.mxu0 %v165
  %v235 = vpop.f32.mrf.mxu0
  %v236 = vadd.f32 0.0, %v235
  %237 = vdwg.mxu0
  %238 = vmatpush.msra.mxu0 0.0
  %239 = vmatpush.msra.mxu0 0.0
  %240 = vmatpush.msra.mxu0 0.0
  %241 = vmatpush.msra.mxu0 0.0
  %242 = vmatpush.msra.mxu0 0.0
  %243 = vmatpush.msra.mxu0 0.0
  %244 = vmatpush.msra.mxu0 0.0
  %245 = vmatpush.msra.mxu0 0.0
  %246 = vmatpush.msra.mxu0 0.0
  %247 = vmatpush.msra.mxu0 0.0
  %248 = vmatpush.msra.mxu0 0.0
  %249 = vmatpush.msra.mxu0 0.0
  %250 = vmatpush.msra.mxu0 0.0
  %251 = vmatpush.msra.mxu0 0.0
  %252 = vmatpush.msra.mxu0 %v70
  %253 = vmatpush.msra.mxu0 %v66
  %254 = vmatmul.f32.gmra.mxu0 %v131
  %v255 = vpop.f32.mrf.mxu0
  %v256 = vadd.f32 0.0, %v255
  %257 = vmatmul.f32.gmra.mxu0 %v133
  %v258 = vpop.f32.mrf.mxu0
  %v259 = vadd.f32 0.0, %v258
  %260 = vmatmul.f32.gmra.mxu0 %v135
  %v261 = vpop.f32.mrf.mxu0
  %v262 = vadd.f32 0.0, %v261
  %263 = vmatmul.f32.gmra.mxu0 %v137
  %v264 = vpop.f32.mrf.mxu0
  %v265 = vadd.f32 0.0, %v264
  %266 = vmatmul.f32.gmra.mxu0 %v139
  %v267 = vpop.f32.mrf.mxu0
  %v268 = vadd.f32 0.0, %v267
  %269 = vmatmul.f32.gmra.mxu0 %v141
  %v270 = vpop.f32.mrf.mxu0
  %v271 = vadd.f32 0.0, %v270
  %272 = vmatmul.f32.gmra.mxu0 %v143
  %v273 = vpop.f32.mrf.mxu0
  %v274 = vadd.f32 0.0, %v273
  %275 = vmatmul.f32.gmra.mxu0 %v145
  %v276 = vpop.f32.mrf.mxu0
  %v277 = vadd.f32 0.0, %v276
  %278 = vmatmul.f32.gmra.mxu0 %v147
  %v279 = vpop.f32.mrf.mxu0
  %v280 = vadd.f32 0.0, %v279
  %281 = vmatmul.f32.gmra.mxu0 %v149
  %v282 = vpop.f32.mrf.mxu0
  %v283 = vadd.f32 0.0, %v282
  %284 = vmatmul.f32.gmra.mxu0 %v151
  %v285 = vpop.f32.mrf.mxu0
  %v286 = vadd.f32 0.0, %v285
  %287 = vmatmul.f32.gmra.mxu0 %v153
  %v288 = vpop.f32.mrf.mxu0
  %v289 = vadd.f32 0.0, %v288
  %290 = vmatmul.f32.gmra.mxu0 %v155
  %v291 = vpop.f32.mrf.mxu0
  %v292 = vadd.f32 0.0, %v291
  %293 = vmatmul.f32.gmra.mxu0 %v157
  %v294 = vpop.f32.mrf.mxu0
  %v295 = vadd.f32 0.0, %v294
  %296 = vmatmul.f32.gmra.mxu0 %v159
  %v297 = vpop.f32.mrf.mxu0
  %v298 = vadd.f32 0.0, %v297
  %299 = vmatmul.f32.gmra.mxu0 %v161
  %v300 = vpop.f32.mrf.mxu0
  %v301 = vadd.f32 0.0, %v300
  %302 = vmatmul.f32.gmra.mxu0 %v163
  %v303 = vpop.f32.mrf.mxu0
  %v304 = vadd.f32 0.0, %v303
  %305 = vmatmul.f32.gmra.mxu0 %v165
  %v306 = vpop.f32.mrf.mxu0
  %v307 = vadd.f32 0.0, %v306
  %308 = vdwg.mxu0
  %309 = vmatpush.msra.mxu0 0.0
  %310 = vmatpush.msra.mxu0 0.0
  %311 = vmatpush.msra.mxu0 0.0
  %312 = vmatpush.msra.mxu0 0.0
  %313 = vmatpush.msra.mxu0 0.0
  %314 = vmatpush.msra.mxu0 0.0
  %315 = vmatpush.msra.mxu0 0.0
  %316 = vmatpush.msra.mxu0 0.0
  %317 = vmatpush.msra.mxu0 0.0
  %318 = vmatpush.msra.mxu0 0.0
  %319 = vmatpush.msra.mxu0 0.0
  %320 = vmatpush.msra.mxu0 0.0
  %321 = vmatpush.msra.mxu0 0.0
  %322 = vmatpush.msra.mxu0 0.0
  %323 = vmatpush.msra.mxu0 %v71
  %324 = vmatpush.msra.mxu0 %v67
  %325 = vmatmul.f32.gmra.mxu0 %v131
  %v326 = vpop.f32.mrf.mxu0
  %v327 = vadd.f32 0.0, %v326
  %328 = vmatmul.f32.gmra.mxu0 %v133
  %v329 = vpop.f32.mrf.mxu0
  %v330 = vadd.f32 0.0, %v329
  %331 = vmatmul.f32.gmra.mxu0 %v135
  %v332 = vpop.f32.mrf.mxu0
  %v333 = vadd.f32 0.0, %v332
  %334 = vmatmul.f32.gmra.mxu0 %v137
  %v335 = vpop.f32.mrf.mxu0
  %v336 = vadd.f32 0.0, %v335
  %337 = vmatmul.f32.gmra.mxu0 %v139
  %v338 = vpop.f32.mrf.mxu0
  %v339 = vadd.f32 0.0, %v338
  %340 = vmatmul.f32.gmra.mxu0 %v141
  %v341 = vpop.f32.mrf.mxu0
  %v342 = vadd.f32 0.0, %v341
  %343 = vmatmul.f32.gmra.mxu0 %v143
  %v344 = vpop.f32.mrf.mxu0
  %v345 = vadd.f32 0.0, %v344
  %346 = vmatmul.f32.gmra.mxu0 %v145
  %v347 = vpop.f32.mrf.mxu0
  %v348 = vadd.f32 0.0, %v347
  %349 = vmatmul.f32.gmra.mxu0 %v147
  %v350 = vpop.f32.mrf.mxu0
  %v351 = vadd.f32 0.0, %v350
  %352 = vmatmul.f32.gmra.mxu0 %v149
  %v353 = vpop.f32.mrf.mxu0
  %v354 = vadd.f32 0.0, %v353
  %355 = vmatmul.f32.gmra.mxu0 %v151
  %v356 = vpop.f32.mrf.mxu0
  %v357 = vadd.f32 0.0, %v356
  %358 = vmatmul.f32.gmra.mxu0 %v153
  %v359 = vpop.f32.mrf.mxu0
  %v360 = vadd.f32 0.0, %v359
  %361 = vmatmul.f32.gmra.mxu0 %v155
  %v362 = vpop.f32.mrf.mxu0
  %v363 = vadd.f32 0.0, %v362
  %364 = vmatmul.f32.gmra.mxu0 %v157
  %v365 = vpop.f32.mrf.mxu0
  %v366 = vadd.f32 0.0, %v365
  %367 = vmatmul.f32.gmra.mxu0 %v159
  %v368 = vpop.f32.mrf.mxu0
  %v369 = vadd.f32 0.0, %v368
  %370 = vmatmul.f32.gmra.mxu0 %v161
  %v371 = vpop.f32.mrf.mxu0
  %v372 = vadd.f32 0.0, %v371
  %373 = vmatmul.f32.gmra.mxu0 %v163
  %v374 = vpop.f32.mrf.mxu0
  %v375 = vadd.f32 0.0, %v374
  %376 = vmatmul.f32.gmra.mxu0 %v165
  %v377 = vpop.f32.mrf.mxu0
  %v378 = vadd.f32 0.0, %v377
  %379 = vdwg.mxu0
  %380 = vmatpush.msra.mxu0 0.0
  %381 = vmatpush.msra.mxu0 0.0
  %382 = vmatpush.msra.mxu0 0.0
  %383 = vmatpush.msra.mxu0 0.0
  %384 = vmatpush.msra.mxu0 0.0
  %385 = vmatpush.msra.mxu0 0.0
  %386 = vmatpush.msra.mxu0 0.0
  %387 = vmatpush.msra.mxu0 0.0
  %388 = vmatpush.msra.mxu0 0.0
  %389 = vmatpush.msra.mxu0 0.0
  %390 = vmatpush.msra.mxu0 0.0
  %391 = vmatpush.msra.mxu0 0.0
  %392 = vmatpush.msra.mxu0 0.0
  %393 = vmatpush.msra.mxu0 0.0
  %394 = vmatpush.msra.mxu0 %v72
  %395 = vmatpush.msra.mxu0 %v68
  %396 = vmatmul.f32.gmra.mxu0 %v131
  %v397 = vpop.f32.mrf.mxu0
  %v398 = vadd.f32 0.0, %v397
  %399 = vmatmul.f32.gmra.mxu0 %v133
  %v400 = vpop.f32.mrf.mxu0
  %v401 = vadd.f32 0.0, %v400
  %402 = vmatmul.f32.gmra.mxu0 %v135
  %v403 = vpop.f32.mrf.mxu0
  %v404 = vadd.f32 0.0, %v403
  %405 = vmatmul.f32.gmra.mxu0 %v137
  %v406 = vpop.f32.mrf.mxu0
  %v407 = vadd.f32 0.0, %v406
  %408 = vmatmul.f32.gmra.mxu0 %v139
  %v409 = vpop.f32.mrf.mxu0
  %v410 = vadd.f32 0.0, %v409
  %411 = vmatmul.f32.gmra.mxu0 %v141
  %v412 = vpop.f32.mrf.mxu0
  %v413 = vadd.f32 0.0, %v412
  %414 = vmatmul.f32.gmra.mxu0 %v143
  %v415 = vpop.f32.mrf.mxu0
  %v416 = vadd.f32 0.0, %v415
  %417 = vmatmul.f32.gmra.mxu0 %v145
  %v418 = vpop.f32.mrf.mxu0
  %v419 = vadd.f32 0.0, %v418
  %420 = vmatmul.f32.gmra.mxu0 %v147
  %v421 = vpop.f32.mrf.mxu0
  %v422 = vadd.f32 0.0, %v421
  %423 = vmatmul.f32.gmra.mxu0 %v149
  %v424 = vpop.f32.mrf.mxu0
  %v425 = vadd.f32 0.0, %v424
  %426 = vmatmul.f32.gmra.mxu0 %v151
  %v427 = vpop.f32.mrf.mxu0
  %v428 = vadd.f32 0.0, %v427
  %429 = vmatmul.f32.gmra.mxu0 %v153
  %v430 = vpop.f32.mrf.mxu0
  %v431 = vadd.f32 0.0, %v430
  %432 = vmatmul.f32.gmra.mxu0 %v155
  %v433 = vpop.f32.mrf.mxu0
  %v434 = vadd.f32 0.0, %v433
  %435 = vmatmul.f32.gmra.mxu0 %v157
  %v436 = vpop.f32.mrf.mxu0
  %v437 = vadd.f32 0.0, %v436
  %438 = vmatmul.f32.gmra.mxu0 %v159
  %v439 = vpop.f32.mrf.mxu0
  %v440 = vadd.f32 0.0, %v439
  %441 = vmatmul.f32.gmra.mxu0 %v161
  %v442 = vpop.f32.mrf.mxu0
  %v443 = vadd.f32 0.0, %v442
  %444 = vmatmul.f32.gmra.mxu0 %v163
  %v445 = vpop.f32.mrf.mxu0
  %v446 = vadd.f32 0.0, %v445
  %447 = vmatmul.f32.gmra.mxu0 %v165
  %v448 = vpop.f32.mrf.mxu0
  %v449 = vadd.f32 0.0, %v448
  %450 = vdwg.mxu0
  %v451 = vsel %vm130, %v20, 0
  %v453 = vsel %vm130, %v21, 0
  %v455 = vsel %vm130, %v22, 0
  %v457 = vsel %vm130, %v23, 0
  %v459 = vsel %vm130, %v24, 0
  %v461 = vsel %vm130, %v25, 0
  %v463 = vsel %vm130, %v26, 0
  %v465 = vsel %vm130, %v27, 0
  %v467 = vsel %vm130, %v28, 0
  %v469 = vsel %vm130, %v29, 0
  %v471 = vsel %vm130, %v30, 0
  %v473 = vsel %vm130, %v31, 0
  %v475 = vsel %vm130, %v32, 0
  %v477 = vsel %vm130, %v33, 0
  %v479 = vsel %vm130, %v34, 0
  %v481 = vsel %vm130, %v35, 0
  %v483 = vsel %vm130, %v36, 0
  %v485 = vsel %vm130, %v37, 0
  %487 = vmatpush.msra.mxu0 0.0
  %488 = vmatpush.msra.mxu0 0.0
  %489 = vmatpush.msra.mxu0 0.0
  %490 = vmatpush.msra.mxu0 0.0
  %491 = vmatpush.msra.mxu0 0.0
  %492 = vmatpush.msra.mxu0 0.0
  %493 = vmatpush.msra.mxu0 0.0
  %494 = vmatpush.msra.mxu0 0.0
  %495 = vmatpush.msra.mxu0 0.0
  %496 = vmatpush.msra.mxu0 0.0
  %497 = vmatpush.msra.mxu0 0.0
  %498 = vmatpush.msra.mxu0 0.0
  %499 = vmatpush.msra.mxu0 0.0
  %500 = vmatpush.msra.mxu0 0.0
  %501 = vmatpush.msra.mxu0 %v61
  %502 = vmatpush.msra.mxu0 %v57
  %503 = vmatmul.f32.gmra.mxu0 %v451
  %v504 = vpop.f32.mrf.mxu0
  %v505 = vadd.f32 %v185, %v504
  %506 = vmatmul.f32.gmra.mxu0 %v453
  %v507 = vpop.f32.mrf.mxu0
  %v508 = vadd.f32 %v188, %v507
  %509 = vmatmul.f32.gmra.mxu0 %v455
  %v510 = vpop.f32.mrf.mxu0
  %v511 = vadd.f32 %v191, %v510
  %512 = vmatmul.f32.gmra.mxu0 %v457
  %v513 = vpop.f32.mrf.mxu0
  %v514 = vadd.f32 %v194, %v513
  %515 = vmatmul.f32.gmra.mxu0 %v459
  %v516 = vpop.f32.mrf.mxu0
  %v517 = vadd.f32 %v197, %v516
  %518 = vmatmul.f32.gmra.mxu0 %v461
  %v519 = vpop.f32.mrf.mxu0
  %v520 = vadd.f32 %v200, %v519
  %521 = vmatmul.f32.gmra.mxu0 %v463
  %v522 = vpop.f32.mrf.mxu0
  %v523 = vadd.f32 %v203, %v522
  %524 = vmatmul.f32.gmra.mxu0 %v465
  %v525 = vpop.f32.mrf.mxu0
  %v526 = vadd.f32 %v206, %v525
  %527 = vmatmul.f32.gmra.mxu0 %v467
  %v528 = vpop.f32.mrf.mxu0
  %v529 = vadd.f32 %v209, %v528
  %530 = vmatmul.f32.gmra.mxu0 %v469
  %v531 = vpop.f32.mrf.mxu0
  %v532 = vadd.f32 %v212, %v531
  %533 = vmatmul.f32.gmra.mxu0 %v471
  %v534 = vpop.f32.mrf.mxu0
  %v535 = vadd.f32 %v215, %v534
  %536 = vmatmul.f32.gmra.mxu0 %v473
  %v537 = vpop.f32.mrf.mxu0
  %v538 = vadd.f32 %v218, %v537
  %539 = vmatmul.f32.gmra.mxu0 %v475
  %v540 = vpop.f32.mrf.mxu0
  %v541 = vadd.f32 %v221, %v540
  %542 = vmatmul.f32.gmra.mxu0 %v477
  %v543 = vpop.f32.mrf.mxu0
  %v544 = vadd.f32 %v224, %v543
  %545 = vmatmul.f32.gmra.mxu0 %v479
  %v546 = vpop.f32.mrf.mxu0
  %v547 = vadd.f32 %v227, %v546
  %548 = vmatmul.f32.gmra.mxu0 %v481
  %v549 = vpop.f32.mrf.mxu0
  %v550 = vadd.f32 %v230, %v549
  %551 = vmatmul.f32.gmra.mxu0 %v483
  %v552 = vpop.f32.mrf.mxu0
  %v553 = vadd.f32 %v233, %v552
  %554 = vmatmul.f32.gmra.mxu0 %v485
  %v555 = vpop.f32.mrf.mxu0
  %v556 = vadd.f32 %v236, %v555
  %557 = vdwg.mxu0
  %558 = vmatpush.msra.mxu0 0.0
  %559 = vmatpush.msra.mxu0 0.0
  %560 = vmatpush.msra.mxu0 0.0
  %561 = vmatpush.msra.mxu0 0.0
  %562 = vmatpush.msra.mxu0 0.0
  %563 = vmatpush.msra.mxu0 0.0
  %564 = vmatpush.msra.mxu0 0.0
  %565 = vmatpush.msra.mxu0 0.0
  %566 = vmatpush.msra.mxu0 0.0
  %567 = vmatpush.msra.mxu0 0.0
  %568 = vmatpush.msra.mxu0 0.0
  %569 = vmatpush.msra.mxu0 0.0
  %570 = vmatpush.msra.mxu0 0.0
  %571 = vmatpush.msra.mxu0 0.0
  %572 = vmatpush.msra.mxu0 %v62
  %573 = vmatpush.msra.mxu0 %v58
  %574 = vmatmul.f32.gmra.mxu0 %v451
  %v575 = vpop.f32.mrf.mxu0
  %v576 = vadd.f32 %v256, %v575
  %577 = vmatmul.f32.gmra.mxu0 %v453
  %v578 = vpop.f32.mrf.mxu0
  %v579 = vadd.f32 %v259, %v578
  %580 = vmatmul.f32.gmra.mxu0 %v455
  %v581 = vpop.f32.mrf.mxu0
  %v582 = vadd.f32 %v262, %v581
  %583 = vmatmul.f32.gmra.mxu0 %v457
  %v584 = vpop.f32.mrf.mxu0
  %v585 = vadd.f32 %v265, %v584
  %586 = vmatmul.f32.gmra.mxu0 %v459
  %v587 = vpop.f32.mrf.mxu0
  %v588 = vadd.f32 %v268, %v587
  %589 = vmatmul.f32.gmra.mxu0 %v461
  %v590 = vpop.f32.mrf.mxu0
  %v591 = vadd.f32 %v271, %v590
  %592 = vmatmul.f32.gmra.mxu0 %v463
  %v593 = vpop.f32.mrf.mxu0
  %v594 = vadd.f32 %v274, %v593
  %595 = vmatmul.f32.gmra.mxu0 %v465
  %v596 = vpop.f32.mrf.mxu0
  %v597 = vadd.f32 %v277, %v596
  %598 = vmatmul.f32.gmra.mxu0 %v467
  %v599 = vpop.f32.mrf.mxu0
  %v600 = vadd.f32 %v280, %v599
  %601 = vmatmul.f32.gmra.mxu0 %v469
  %v602 = vpop.f32.mrf.mxu0
  %v603 = vadd.f32 %v283, %v602
  %604 = vmatmul.f32.gmra.mxu0 %v471
  %v605 = vpop.f32.mrf.mxu0
  %v606 = vadd.f32 %v286, %v605
  %607 = vmatmul.f32.gmra.mxu0 %v473
  %v608 = vpop.f32.mrf.mxu0
  %v609 = vadd.f32 %v289, %v608
  %610 = vmatmul.f32.gmra.mxu0 %v475
  %v611 = vpop.f32.mrf.mxu0
  %v612 = vadd.f32 %v292, %v611
  %613 = vmatmul.f32.gmra.mxu0 %v477
  %v614 = vpop.f32.mrf.mxu0
  %v615 = vadd.f32 %v295, %v614
  %616 = vmatmul.f32.gmra.mxu0 %v479
  %v617 = vpop.f32.mrf.mxu0
  %v618 = vadd.f32 %v298, %v617
  %619 = vmatmul.f32.gmra.mxu0 %v481
  %v620 = vpop.f32.mrf.mxu0
  %v621 = vadd.f32 %v301, %v620
  %622 = vmatmul.f32.gmra.mxu0 %v483
  %v623 = vpop.f32.mrf.mxu0
  %v624 = vadd.f32 %v304, %v623
  %625 = vmatmul.f32.gmra.mxu0 %v485
  %v626 = vpop.f32.mrf.mxu0
  %v627 = vadd.f32 %v307, %v626
  %628 = vdwg.mxu0
  %629 = vmatpush.msra.mxu0 0.0
  %630 = vmatpush.msra.mxu0 0.0
  %631 = vmatpush.msra.mxu0 0.0
  %632 = vmatpush.msra.mxu0 0.0
  %633 = vmatpush.msra.mxu0 0.0
  %634 = vmatpush.msra.mxu0 0.0
  %635 = vmatpush.msra.mxu0 0.0
  %636 = vmatpush.msra.mxu0 0.0
  %637 = vmatpush.msra.mxu0 0.0
  %638 = vmatpush.msra.mxu0 0.0
  %639 = vmatpush.msra.mxu0 0.0
  %640 = vmatpush.msra.mxu0 0.0
  %641 = vmatpush.msra.mxu0 0.0
  %642 = vmatpush.msra.mxu0 0.0
  %643 = vmatpush.msra.mxu0 %v63
  %644 = vmatpush.msra.mxu0 %v59
  %645 = vmatmul.f32.gmra.mxu0 %v451
  %v646 = vpop.f32.mrf.mxu0
  %v647 = vadd.f32 %v327, %v646
  %648 = vmatmul.f32.gmra.mxu0 %v453
  %v649 = vpop.f32.mrf.mxu0
  %v650 = vadd.f32 %v330, %v649
  %651 = vmatmul.f32.gmra.mxu0 %v455
  %v652 = vpop.f32.mrf.mxu0
  %v653 = vadd.f32 %v333, %v652
  %654 = vmatmul.f32.gmra.mxu0 %v457
  %v655 = vpop.f32.mrf.mxu0
  %v656 = vadd.f32 %v336, %v655
  %657 = vmatmul.f32.gmra.mxu0 %v459
  %v658 = vpop.f32.mrf.mxu0
  %v659 = vadd.f32 %v339, %v658
  %660 = vmatmul.f32.gmra.mxu0 %v461
  %v661 = vpop.f32.mrf.mxu0
  %v662 = vadd.f32 %v342, %v661
  %663 = vmatmul.f32.gmra.mxu0 %v463
  %v664 = vpop.f32.mrf.mxu0
  %v665 = vadd.f32 %v345, %v664
  %666 = vmatmul.f32.gmra.mxu0 %v465
  %v667 = vpop.f32.mrf.mxu0
  %v668 = vadd.f32 %v348, %v667
  %669 = vmatmul.f32.gmra.mxu0 %v467
  %v670 = vpop.f32.mrf.mxu0
  %v671 = vadd.f32 %v351, %v670
  %672 = vmatmul.f32.gmra.mxu0 %v469
  %v673 = vpop.f32.mrf.mxu0
  %v674 = vadd.f32 %v354, %v673
  %675 = vmatmul.f32.gmra.mxu0 %v471
  %v676 = vpop.f32.mrf.mxu0
  %v677 = vadd.f32 %v357, %v676
  %678 = vmatmul.f32.gmra.mxu0 %v473
  %v679 = vpop.f32.mrf.mxu0
  %v680 = vadd.f32 %v360, %v679
  %681 = vmatmul.f32.gmra.mxu0 %v475
  %v682 = vpop.f32.mrf.mxu0
  %v683 = vadd.f32 %v363, %v682
  %684 = vmatmul.f32.gmra.mxu0 %v477
  %v685 = vpop.f32.mrf.mxu0
  %v686 = vadd.f32 %v366, %v685
  %687 = vmatmul.f32.gmra.mxu0 %v479
  %v688 = vpop.f32.mrf.mxu0
  %v689 = vadd.f32 %v369, %v688
  %690 = vmatmul.f32.gmra.mxu0 %v481
  %v691 = vpop.f32.mrf.mxu0
  %v692 = vadd.f32 %v372, %v691
  %693 = vmatmul.f32.gmra.mxu0 %v483
  %v694 = vpop.f32.mrf.mxu0
  %v695 = vadd.f32 %v375, %v694
  %696 = vmatmul.f32.gmra.mxu0 %v485
  %v697 = vpop.f32.mrf.mxu0
  %v698 = vadd.f32 %v378, %v697
  %699 = vdwg.mxu0
  %700 = vmatpush.msra.mxu0 0.0
  %701 = vmatpush.msra.mxu0 0.0
  %702 = vmatpush.msra.mxu0 0.0
  %703 = vmatpush.msra.mxu0 0.0
  %704 = vmatpush.msra.mxu0 0.0
  %705 = vmatpush.msra.mxu0 0.0
  %706 = vmatpush.msra.mxu0 0.0
  %707 = vmatpush.msra.mxu0 0.0
  %708 = vmatpush.msra.mxu0 0.0
  %709 = vmatpush.msra.mxu0 0.0
  %710 = vmatpush.msra.mxu0 0.0
  %711 = vmatpush.msra.mxu0 0.0
  %712 = vmatpush.msra.mxu0 0.0
  %713 = vmatpush.msra.mxu0 0.0
  %714 = vmatpush.msra.mxu0 %v64
  %715 = vmatpush.msra.mxu0 %v60
  %716 = vmatmul.f32.gmra.mxu0 %v451
  %v717 = vpop.f32.mrf.mxu0
  %v718 = vadd.f32 %v398, %v717
  %719 = vmatmul.f32.gmra.mxu0 %v453
  %v720 = vpop.f32.mrf.mxu0
  %v721 = vadd.f32 %v401, %v720
  %722 = vmatmul.f32.gmra.mxu0 %v455
  %v723 = vpop.f32.mrf.mxu0
  %v724 = vadd.f32 %v404, %v723
  %725 = vmatmul.f32.gmra.mxu0 %v457
  %v726 = vpop.f32.mrf.mxu0
  %v727 = vadd.f32 %v407, %v726
  %728 = vmatmul.f32.gmra.mxu0 %v459
  %v729 = vpop.f32.mrf.mxu0
  %v730 = vadd.f32 %v410, %v729
  %731 = vmatmul.f32.gmra.mxu0 %v461
  %v732 = vpop.f32.mrf.mxu0
  %v733 = vadd.f32 %v413, %v732
  %734 = vmatmul.f32.gmra.mxu0 %v463
  %v735 = vpop.f32.mrf.mxu0
  %v736 = vadd.f32 %v416, %v735
  %737 = vmatmul.f32.gmra.mxu0 %v465
  %v738 = vpop.f32.mrf.mxu0
  %v739 = vadd.f32 %v419, %v738
  %740 = vmatmul.f32.gmra.mxu0 %v467
  %v741 = vpop.f32.mrf.mxu0
  %v742 = vadd.f32 %v422, %v741
  %743 = vmatmul.f32.gmra.mxu0 %v469
  %v744 = vpop.f32.mrf.mxu0
  %v745 = vadd.f32 %v425, %v744
  %746 = vmatmul.f32.gmra.mxu0 %v471
  %v747 = vpop.f32.mrf.mxu0
  %v748 = vadd.f32 %v428, %v747
  %749 = vmatmul.f32.gmra.mxu0 %v473
  %v750 = vpop.f32.mrf.mxu0
  %v751 = vadd.f32 %v431, %v750
  %752 = vmatmul.f32.gmra.mxu0 %v475
  %v753 = vpop.f32.mrf.mxu0
  %v754 = vadd.f32 %v434, %v753
  %755 = vmatmul.f32.gmra.mxu0 %v477
  %v756 = vpop.f32.mrf.mxu0
  %v757 = vadd.f32 %v437, %v756
  %758 = vmatmul.f32.gmra.mxu0 %v479
  %v759 = vpop.f32.mrf.mxu0
  %v760 = vadd.f32 %v440, %v759
  %761 = vmatmul.f32.gmra.mxu0 %v481
  %v762 = vpop.f32.mrf.mxu0
  %v763 = vadd.f32 %v443, %v762
  %764 = vmatmul.f32.gmra.mxu0 %v483
  %v765 = vpop.f32.mrf.mxu0
  %v766 = vadd.f32 %v446, %v765
  %767 = vmatmul.f32.gmra.mxu0 %v485
  %v768 = vpop.f32.mrf.mxu0
  %v769 = vadd.f32 %v449, %v768
  %770 = vdwg.mxu0
  %v771 = vld [vmem:[%s1 + $0x80] sm:$0xff]
  %v772 = vld [vmem:[%s1 + $0x88] sm:$0xff]
  %v773 = vld [vmem:[%s1 + $0x90] sm:$0xff]
  %v774 = vld [vmem:[%s1 + $0x98] sm:$0xff]
  %v775 = vld [vmem:[%s1 + $0xa0] sm:$0xff]
  %v776 = vld [vmem:[%s1 + $0xa8] sm:$0xff]
  %v777 = vld [vmem:[%s1 + $0xb0] sm:$0xff]
  %v778 = vld [vmem:[%s1 + $0xb8] sm:$0xff]
  %vm779 = vcmask 1045504
  %v780 = vrot.slane %v20, 2
  %v781 = vrot.slane %v21, 2
  %v782 = vsel %vm779, %v780, %v781
  %v783 = vrot.slane %v22, 2
  %v784 = vsel %vm779, %v781, %v783
  %v785 = vrot.slane %v23, 2
  %v786 = vsel %vm779, %v783, %v785
  %v787 = vrot.slane %v24, 2
  %v788 = vsel %vm779, %v785, %v787
  %v789 = vrot.slane %v25, 2
  %v790 = vsel %vm779, %v787, %v789
  %v791 = vrot.slane %v26, 2
  %v792 = vsel %vm779, %v789, %v791
  %v793 = vrot.slane %v27, 2
  %v794 = vsel %vm779, %v791, %v793
  %v795 = vrot.slane %v28, 2
  %v796 = vsel %vm779, %v793, %v795
  %v797 = vrot.slane %v29, 2
  %v798 = vsel %vm779, %v795, %v797
  %v799 = vrot.slane %v30, 2
  %v800 = vsel %vm779, %v797, %v799
  %v801 = vrot.slane %v31, 2
  %v802 = vsel %vm779, %v799, %v801
  %v803 = vrot.slane %v32, 2
  %v804 = vsel %vm779, %v801, %v803
  %v805 = vrot.slane %v33, 2
  %v806 = vsel %vm779, %v803, %v805
  %v807 = vrot.slane %v34, 2
  %v808 = vsel %vm779, %v805, %v807
  %v809 = vrot.slane %v35, 2
  %v810 = vsel %vm779, %v807, %v809
  %v811 = vrot.slane %v36, 2
  %v812 = vsel %vm779, %v809, %v811
  %v813 = vrot.slane %v37, 2
  %v814 = vsel %vm779, %v811, %v813
  %v815 = vrot.slane %v38, 2
  %v816 = vsel %vm779, %v813, %v815
  %v817 = vsel %vm130, %v782, 0
  %v819 = vsel %vm130, %v784, 0
  %v821 = vsel %vm130, %v786, 0
  %v823 = vsel %vm130, %v788, 0
  %v825 = vsel %vm130, %v790, 0
  %v827 = vsel %vm130, %v792, 0
  %v829 = vsel %vm130, %v794, 0
  %v831 = vsel %vm130, %v796, 0
  %v833 = vsel %vm130, %v798, 0
  %v835 = vsel %vm130, %v800, 0
  %v837 = vsel %vm130, %v802, 0
  %v839 = vsel %vm130, %v804, 0
  %v841 = vsel %vm130, %v806, 0
  %v843 = vsel %vm130, %v808, 0
  %v845 = vsel %vm130, %v810, 0
  %v847 = vsel %vm130, %v812, 0
  %v849 = vsel %vm130, %v814, 0
  %v851 = vsel %vm130, %v816, 0
  %853 = vmatpush.msra.mxu0 0.0
  %854 = vmatpush.msra.mxu0 0.0
  %855 = vmatpush.msra.mxu0 0.0
  %856 = vmatpush.msra.mxu0 0.0
  %857 = vmatpush.msra.mxu0 0.0
  %858 = vmatpush.msra.mxu0 0.0
  %859 = vmatpush.msra.mxu0 0.0
  %860 = vmatpush.msra.mxu0 0.0
  %861 = vmatpush.msra.mxu0 0.0
  %862 = vmatpush.msra.mxu0 0.0
  %863 = vmatpush.msra.mxu0 0.0
  %864 = vmatpush.msra.mxu0 0.0
  %865 = vmatpush.msra.mxu0 0.0
  %866 = vmatpush.msra.mxu0 0.0
  %867 = vmatpush.msra.mxu0 %v775
  %868 = vmatpush.msra.mxu0 %v771
  %869 = vmatmul.f32.gmra.mxu0 %v817
  %v870 = vpop.f32.mrf.mxu0
  %v871 = vadd.f32 0.0, %v870
  %872 = vmatmul.f32.gmra.mxu0 %v819
  %v873 = vpop.f32.mrf.mxu0
  %v874 = vadd.f32 0.0, %v873
  %875 = vmatmul.f32.gmra.mxu0 %v821
  %v876 = vpop.f32.mrf.mxu0
  %v877 = vadd.f32 0.0, %v876
  %878 = vmatmul.f32.gmra.mxu0 %v823
  %v879 = vpop.f32.mrf.mxu0
  %v880 = vadd.f32 0.0, %v879
  %881 = vmatmul.f32.gmra.mxu0 %v825
  %v882 = vpop.f32.mrf.mxu0
  %v883 = vadd.f32 0.0, %v882
  %884 = vmatmul.f32.gmra.mxu0 %v827
  %v885 = vpop.f32.mrf.mxu0
  %v886 = vadd.f32 0.0, %v885
  %887 = vmatmul.f32.gmra.mxu0 %v829
  %v888 = vpop.f32.mrf.mxu0
  %v889 = vadd.f32 0.0, %v888
  %890 = vmatmul.f32.gmra.mxu0 %v831
  %v891 = vpop.f32.mrf.mxu0
  %v892 = vadd.f32 0.0, %v891
  %893 = vmatmul.f32.gmra.mxu0 %v833
  %v894 = vpop.f32.mrf.mxu0
  %v895 = vadd.f32 0.0, %v894
  %896 = vmatmul.f32.gmra.mxu0 %v835
  %v897 = vpop.f32.mrf.mxu0
  %v898 = vadd.f32 0.0, %v897
  %899 = vmatmul.f32.gmra.mxu0 %v837
  %v900 = vpop.f32.mrf.mxu0
  %v901 = vadd.f32 0.0, %v900
  %902 = vmatmul.f32.gmra.mxu0 %v839
  %v903 = vpop.f32.mrf.mxu0
  %v904 = vadd.f32 0.0, %v903
  %905 = vmatmul.f32.gmra.mxu0 %v841
  %v906 = vpop.f32.mrf.mxu0
  %v907 = vadd.f32 0.0, %v906
  %908 = vmatmul.f32.gmra.mxu0 %v843
  %v909 = vpop.f32.mrf.mxu0
  %v910 = vadd.f32 0.0, %v909
  %911 = vmatmul.f32.gmra.mxu0 %v845
  %v912 = vpop.f32.mrf.mxu0
  %v913 = vadd.f32 0.0, %v912
  %914 = vmatmul.f32.gmra.mxu0 %v847
  %v915 = vpop.f32.mrf.mxu0
  %v916 = vadd.f32 0.0, %v915
  %917 = vmatmul.f32.gmra.mxu0 %v849
  %v918 = vpop.f32.mrf.mxu0
  %v919 = vadd.f32 0.0, %v918
  %920 = vmatmul.f32.gmra.mxu0 %v851
  %v921 = vpop.f32.mrf.mxu0
  %v922 = vadd.f32 0.0, %v921
  %923 = vdwg.mxu0
  %924 = vmatpush.msra.mxu0 0.0
  %925 = vmatpush.msra.mxu0 0.0
  %926 = vmatpush.msra.mxu0 0.0
  %927 = vmatpush.msra.mxu0 0.0
  %928 = vmatpush.msra.mxu0 0.0
  %929 = vmatpush.msra.mxu0 0.0
  %930 = vmatpush.msra.mxu0 0.0
  %931 = vmatpush.msra.mxu0 0.0
  %932 = vmatpush.msra.mxu0 0.0
  %933 = vmatpush.msra.mxu0 0.0
  %934 = vmatpush.msra.mxu0 0.0
  %935 = vmatpush.msra.mxu0 0.0
  %936 = vmatpush.msra.mxu0 0.0
  %937 = vmatpush.msra.mxu0 0.0
  %938 = vmatpush.msra.mxu0 %v776
  %939 = vmatpush.msra.mxu0 %v772
  %940 = vmatmul.f32.gmra.mxu0 %v817
  %v941 = vpop.f32.mrf.mxu0
  %v942 = vadd.f32 0.0, %v941
  %943 = vmatmul.f32.gmra.mxu0 %v819
  %v944 = vpop.f32.mrf.mxu0
  %v945 = vadd.f32 0.0, %v944
  %946 = vmatmul.f32.gmra.mxu0 %v821
  %v947 = vpop.f32.mrf.mxu0
  %v948 = vadd.f32 0.0, %v947
  %949 = vmatmul.f32.gmra.mxu0 %v823
  %v950 = vpop.f32.mrf.mxu0
  %v951 = vadd.f32 0.0, %v950
  %952 = vmatmul.f32.gmra.mxu0 %v825
  %v953 = vpop.f32.mrf.mxu0
  %v954 = vadd.f32 0.0, %v953
  %955 = vmatmul.f32.gmra.mxu0 %v827
  %v956 = vpop.f32.mrf.mxu0
  %v957 = vadd.f32 0.0, %v956
  %958 = vmatmul.f32.gmra.mxu0 %v829
  %v959 = vpop.f32.mrf.mxu0
  %v960 = vadd.f32 0.0, %v959
  %961 = vmatmul.f32.gmra.mxu0 %v831
  %v962 = vpop.f32.mrf.mxu0
  %v963 = vadd.f32 0.0, %v962
  %964 = vmatmul.f32.gmra.mxu0 %v833
  %v965 = vpop.f32.mrf.mxu0
  %v966 = vadd.f32 0.0, %v965
  %967 = vmatmul.f32.gmra.mxu0 %v835
  %v968 = vpop.f32.mrf.mxu0
  %v969 = vadd.f32 0.0, %v968
  %970 = vmatmul.f32.gmra.mxu0 %v837
  %v971 = vpop.f32.mrf.mxu0
  %v972 = vadd.f32 0.0, %v971
  %973 = vmatmul.f32.gmra.mxu0 %v839
  %v974 = vpop.f32.mrf.mxu0
  %v975 = vadd.f32 0.0, %v974
  %976 = vmatmul.f32.gmra.mxu0 %v841
  %v977 = vpop.f32.mrf.mxu0
  %v978 = vadd.f32 0.0, %v977
  %979 = vmatmul.f32.gmra.mxu0 %v843
  %v980 = vpop.f32.mrf.mxu0
  %v981 = vadd.f32 0.0, %v980
  %982 = vmatmul.f32.gmra.mxu0 %v845
  %v983 = vpop.f32.mrf.mxu0
  %v984 = vadd.f32 0.0, %v983
  %985 = vmatmul.f32.gmra.mxu0 %v847
  %v986 = vpop.f32.mrf.mxu0
  %v987 = vadd.f32 0.0, %v986
  %988 = vmatmul.f32.gmra.mxu0 %v849
  %v989 = vpop.f32.mrf.mxu0
  %v990 = vadd.f32 0.0, %v989
  %991 = vmatmul.f32.gmra.mxu0 %v851
  %v992 = vpop.f32.mrf.mxu0
  %v993 = vadd.f32 0.0, %v992
  %994 = vdwg.mxu0
  %995 = vmatpush.msra.mxu0 0.0
  %996 = vmatpush.msra.mxu0 0.0
  %997 = vmatpush.msra.mxu0 0.0
  %998 = vmatpush.msra.mxu0 0.0
  %999 = vmatpush.msra.mxu0 0.0
  %1000 = vmatpush.msra.mxu0 0.0
  %1001 = vmatpush.msra.mxu0 0.0
  %1002 = vmatpush.msra.mxu0 0.0
  %1003 = vmatpush.msra.mxu0 0.0
  %1004 = vmatpush.msra.mxu0 0.0
  %1005 = vmatpush.msra.mxu0 0.0
  %1006 = vmatpush.msra.mxu0 0.0
  %1007 = vmatpush.msra.mxu0 0.0
  %1008 = vmatpush.msra.mxu0 0.0
  %1009 = vmatpush.msra.mxu0 %v777
  %1010 = vmatpush.msra.mxu0 %v773
  %1011 = vmatmul.f32.gmra.mxu0 %v817
  %v1012 = vpop.f32.mrf.mxu0
  %v1013 = vadd.f32 0.0, %v1012
  %1014 = vmatmul.f32.gmra.mxu0 %v819
  %v1015 = vpop.f32.mrf.mxu0
  %v1016 = vadd.f32 0.0, %v1015
  %1017 = vmatmul.f32.gmra.mxu0 %v821
  %v1018 = vpop.f32.mrf.mxu0
  %v1019 = vadd.f32 0.0, %v1018
  %1020 = vmatmul.f32.gmra.mxu0 %v823
  %v1021 = vpop.f32.mrf.mxu0
  %v1022 = vadd.f32 0.0, %v1021
  %1023 = vmatmul.f32.gmra.mxu0 %v825
  %v1024 = vpop.f32.mrf.mxu0
  %v1025 = vadd.f32 0.0, %v1024
  %1026 = vmatmul.f32.gmra.mxu0 %v827
  %v1027 = vpop.f32.mrf.mxu0
  %v1028 = vadd.f32 0.0, %v1027
  %1029 = vmatmul.f32.gmra.mxu0 %v829
  %v1030 = vpop.f32.mrf.mxu0
  %v1031 = vadd.f32 0.0, %v1030
  %1032 = vmatmul.f32.gmra.mxu0 %v831
  %v1033 = vpop.f32.mrf.mxu0
  %v1034 = vadd.f32 0.0, %v1033
  %1035 = vmatmul.f32.gmra.mxu0 %v833
  %v1036 = vpop.f32.mrf.mxu0
  %v1037 = vadd.f32 0.0, %v1036
  %1038 = vmatmul.f32.gmra.mxu0 %v835
  %v1039 = vpop.f32.mrf.mxu0
  %v1040 = vadd.f32 0.0, %v1039
  %1041 = vmatmul.f32.gmra.mxu0 %v837
  %v1042 = vpop.f32.mrf.mxu0
  %v1043 = vadd.f32 0.0, %v1042
  %1044 = vmatmul.f32.gmra.mxu0 %v839
  %v1045 = vpop.f32.mrf.mxu0
  %v1046 = vadd.f32 0.0, %v1045
  %1047 = vmatmul.f32.gmra.mxu0 %v841
  %v1048 = vpop.f32.mrf.mxu0
  %v1049 = vadd.f32 0.0, %v1048
  %1050 = vmatmul.f32.gmra.mxu0 %v843
  %v1051 = vpop.f32.mrf.mxu0
  %v1052 = vadd.f32 0.0, %v1051
  %1053 = vmatmul.f32.gmra.mxu0 %v845
  %v1054 = vpop.f32.mrf.mxu0
  %v1055 = vadd.f32 0.0, %v1054
  %1056 = vmatmul.f32.gmra.mxu0 %v847
  %v1057 = vpop.f32.mrf.mxu0
  %v1058 = vadd.f32 0.0, %v1057
  %1059 = vmatmul.f32.gmra.mxu0 %v849
  %v1060 = vpop.f32.mrf.mxu0
  %v1061 = vadd.f32 0.0, %v1060
  %1062 = vmatmul.f32.gmra.mxu0 %v851
  %v1063 = vpop.f32.mrf.mxu0
  %v1064 = vadd.f32 0.0, %v1063
  %1065 = vdwg.mxu0
  %1066 = vmatpush.msra.mxu0 0.0
  %1067 = vmatpush.msra.mxu0 0.0
  %1068 = vmatpush.msra.mxu0 0.0
  %1069 = vmatpush.msra.mxu0 0.0
  %1070 = vmatpush.msra.mxu0 0.0
  %1071 = vmatpush.msra.mxu0 0.0
  %1072 = vmatpush.msra.mxu0 0.0
  %1073 = vmatpush.msra.mxu0 0.0
  %1074 = vmatpush.msra.mxu0 0.0
  %1075 = vmatpush.msra.mxu0 0.0
  %1076 = vmatpush.msra.mxu0 0.0
  %1077 = vmatpush.msra.mxu0 0.0
  %1078 = vmatpush.msra.mxu0 0.0
  %1079 = vmatpush.msra.mxu0 0.0
  %1080 = vmatpush.msra.mxu0 %v778
  %1081 = vmatpush.msra.mxu0 %v774
  %1082 = vmatmul.f32.gmra.mxu0 %v817
  %v1083 = vpop.f32.mrf.mxu0
  %v1084 = vadd.f32 0.0, %v1083
  %1085 = vmatmul.f32.gmra.mxu0 %v819
  %v1086 = vpop.f32.mrf.mxu0
  %v1087 = vadd.f32 0.0, %v1086
  %1088 = vmatmul.f32.gmra.mxu0 %v821
  %v1089 = vpop.f32.mrf.mxu0
  %v1090 = vadd.f32 0.0, %v1089
  %1091 = vmatmul.f32.gmra.mxu0 %v823
  %v1092 = vpop.f32.mrf.mxu0
  %v1093 = vadd.f32 0.0, %v1092
  %1094 = vmatmul.f32.gmra.mxu0 %v825
  %v1095 = vpop.f32.mrf.mxu0
  %v1096 = vadd.f32 0.0, %v1095
  %1097 = vmatmul.f32.gmra.mxu0 %v827
  %v1098 = vpop.f32.mrf.mxu0
  %v1099 = vadd.f32 0.0, %v1098
  %1100 = vmatmul.f32.gmra.mxu0 %v829
  %v1101 = vpop.f32.mrf.mxu0
  %v1102 = vadd.f32 0.0, %v1101
  %1103 = vmatmul.f32.gmra.mxu0 %v831
  %v1104 = vpop.f32.mrf.mxu0
  %v1105 = vadd.f32 0.0, %v1104
  %1106 = vmatmul.f32.gmra.mxu0 %v833
  %v1107 = vpop.f32.mrf.mxu0
  %v1108 = vadd.f32 0.0, %v1107
  %1109 = vmatmul.f32.gmra.mxu0 %v835
  %v1110 = vpop.f32.mrf.mxu0
  %v1111 = vadd.f32 0.0, %v1110
  %1112 = vmatmul.f32.gmra.mxu0 %v837
  %v1113 = vpop.f32.mrf.mxu0
  %v1114 = vadd.f32 0.0, %v1113
  %1115 = vmatmul.f32.gmra.mxu0 %v839
  %v1116 = vpop.f32.mrf.mxu0
  %v1117 = vadd.f32 0.0, %v1116
  %1118 = vmatmul.f32.gmra.mxu0 %v841
  %v1119 = vpop.f32.mrf.mxu0
  %v1120 = vadd.f32 0.0, %v1119
  %1121 = vmatmul.f32.gmra.mxu0 %v843
  %v1122 = vpop.f32.mrf.mxu0
  %v1123 = vadd.f32 0.0, %v1122
  %1124 = vmatmul.f32.gmra.mxu0 %v845
  %v1125 = vpop.f32.mrf.mxu0
  %v1126 = vadd.f32 0.0, %v1125
  %1127 = vmatmul.f32.gmra.mxu0 %v847
  %v1128 = vpop.f32.mrf.mxu0
  %v1129 = vadd.f32 0.0, %v1128
  %1130 = vmatmul.f32.gmra.mxu0 %v849
  %v1131 = vpop.f32.mrf.mxu0
  %v1132 = vadd.f32 0.0, %v1131
  %1133 = vmatmul.f32.gmra.mxu0 %v851
  %v1134 = vpop.f32.mrf.mxu0
  %v1135 = vadd.f32 0.0, %v1134
  %1136 = vdwg.mxu0
  %v1137 = vadd.f32 %v505, %v871
  %v1138 = vadd.f32 %v576, %v942
  %v1139 = vadd.f32 %v647, %v1013
  %v1140 = vadd.f32 %v718, %v1084
  %v1141 = vadd.f32 %v508, %v874
  %v1142 = vadd.f32 %v579, %v945
  %v1143 = vadd.f32 %v650, %v1016
  %v1144 = vadd.f32 %v721, %v1087
  %v1145 = vadd.f32 %v511, %v877
  %v1146 = vadd.f32 %v582, %v948
  %v1147 = vadd.f32 %v653, %v1019
  %v1148 = vadd.f32 %v724, %v1090
  %v1149 = vadd.f32 %v514, %v880
  %v1150 = vadd.f32 %v585, %v951
  %v1151 = vadd.f32 %v656, %v1022
  %v1152 = vadd.f32 %v727, %v1093
  %v1153 = vadd.f32 %v517, %v883
  %v1154 = vadd.f32 %v588, %v954
  %v1155 = vadd.f32 %v659, %v1025
  %v1156 = vadd.f32 %v730, %v1096
  %v1157 = vadd.f32 %v520, %v886
  %v1158 = vadd.f32 %v591, %v957
  %v1159 = vadd.f32 %v662, %v1028
  %v1160 = vadd.f32 %v733, %v1099
  %v1161 = vadd.f32 %v523, %v889
  %v1162 = vadd.f32 %v594, %v960
  %v1163 = vadd.f32 %v665, %v1031
  %v1164 = vadd.f32 %v736, %v1102
  %v1165 = vadd.f32 %v526, %v892
  %v1166 = vadd.f32 %v597, %v963
  %v1167 = vadd.f32 %v668, %v1034
  %v1168 = vadd.f32 %v739, %v1105
  %v1169 = vadd.f32 %v529, %v895
  %v1170 = vadd.f32 %v600, %v966
  %v1171 = vadd.f32 %v671, %v1037
  %v1172 = vadd.f32 %v742, %v1108
  %v1173 = vadd.f32 %v532, %v898
  %v1174 = vadd.f32 %v603, %v969
  %v1175 = vadd.f32 %v674, %v1040
  %v1176 = vadd.f32 %v745, %v1111
  %v1177 = vadd.f32 %v535, %v901
  %v1178 = vadd.f32 %v606, %v972
  %v1179 = vadd.f32 %v677, %v1043
  %v1180 = vadd.f32 %v748, %v1114
  %v1181 = vadd.f32 %v538, %v904
  %v1182 = vadd.f32 %v609, %v975
  %v1183 = vadd.f32 %v680, %v1046
  %v1184 = vadd.f32 %v751, %v1117
  %v1185 = vadd.f32 %v541, %v907
  %v1186 = vadd.f32 %v612, %v978
  %v1187 = vadd.f32 %v683, %v1049
  %v1188 = vadd.f32 %v754, %v1120
  %v1189 = vadd.f32 %v544, %v910
  %v1190 = vadd.f32 %v615, %v981
  %v1191 = vadd.f32 %v686, %v1052
  %v1192 = vadd.f32 %v757, %v1123
  %v1193 = vadd.f32 %v547, %v913
  %v1194 = vadd.f32 %v618, %v984
  %v1195 = vadd.f32 %v689, %v1055
  %v1196 = vadd.f32 %v760, %v1126
  %v1197 = vadd.f32 %v550, %v916
  %v1198 = vadd.f32 %v621, %v987
  %v1199 = vadd.f32 %v692, %v1058
  %v1200 = vadd.f32 %v763, %v1129
  %v1201 = vadd.f32 %v553, %v919
  %v1202 = vadd.f32 %v624, %v990
  %v1203 = vadd.f32 %v695, %v1061
  %v1204 = vadd.f32 %v766, %v1132
  %v1205 = vadd.f32 %v556, %v922
  %v1206 = vadd.f32 %v627, %v993
  %v1207 = vadd.f32 %v698, %v1064
  %v1208 = vadd.f32 %v769, %v1135
  %v1209 = vld [vmem:[%s1 + $0xc0] sm:$0xff]
  %v1210 = vld [vmem:[%s1 + $0xc8] sm:$0xff]
  %v1211 = vld [vmem:[%s1 + $0xd0] sm:$0xff]
  %v1212 = vld [vmem:[%s1 + $0xd8] sm:$0xff]
  %v1213 = vld [vmem:[%s1 + $0xe0] sm:$0xff]
  %v1214 = vld [vmem:[%s1 + $0xe8] sm:$0xff]
  %v1215 = vld [vmem:[%s1 + $0xf0] sm:$0xff]
  %v1216 = vld [vmem:[%s1 + $0xf8] sm:$0xff]
  %vm1217 = vcmask 1044480
  %v1218 = vrot.slane %v20, 3
  %v1219 = vrot.slane %v21, 3
  %v1220 = vsel %vm1217, %v1218, %v1219
  %v1221 = vrot.slane %v22, 3
  %v1222 = vsel %vm1217, %v1219, %v1221
  %v1223 = vrot.slane %v23, 3
  %v1224 = vsel %vm1217, %v1221, %v1223
  %v1225 = vrot.slane %v24, 3
  %v1226 = vsel %vm1217, %v1223, %v1225
  %v1227 = vrot.slane %v25, 3
  %v1228 = vsel %vm1217, %v1225, %v1227
  %v1229 = vrot.slane %v26, 3
  %v1230 = vsel %vm1217, %v1227, %v1229
  %v1231 = vrot.slane %v27, 3
  %v1232 = vsel %vm1217, %v1229, %v1231
  %v1233 = vrot.slane %v28, 3
  %v1234 = vsel %vm1217, %v1231, %v1233
  %v1235 = vrot.slane %v29, 3
  %v1236 = vsel %vm1217, %v1233, %v1235
  %v1237 = vrot.slane %v30, 3
  %v1238 = vsel %vm1217, %v1235, %v1237
  %v1239 = vrot.slane %v31, 3
  %v1240 = vsel %vm1217, %v1237, %v1239
  %v1241 = vrot.slane %v32, 3
  %v1242 = vsel %vm1217, %v1239, %v1241
  %v1243 = vrot.slane %v33, 3
  %v1244 = vsel %vm1217, %v1241, %v1243
  %v1245 = vrot.slane %v34, 3
  %v1246 = vsel %vm1217, %v1243, %v1245
  %v1247 = vrot.slane %v35, 3
  %v1248 = vsel %vm1217, %v1245, %v1247
  %v1249 = vrot.slane %v36, 3
  %v1250 = vsel %vm1217, %v1247, %v1249
  %v1251 = vrot.slane %v37, 3
  %v1252 = vsel %vm1217, %v1249, %v1251
  %v1253 = vrot.slane %v38, 3
  %v1254 = vsel %vm1217, %v1251, %v1253
  %v1255 = vsel %vm130, %v1220, 0
  %v1257 = vsel %vm130, %v1222, 0
  %v1259 = vsel %vm130, %v1224, 0
  %v1261 = vsel %vm130, %v1226, 0
  %v1263 = vsel %vm130, %v1228, 0
  %v1265 = vsel %vm130, %v1230, 0
  %v1267 = vsel %vm130, %v1232, 0
  %v1269 = vsel %vm130, %v1234, 0
  %v1271 = vsel %vm130, %v1236, 0
  %v1273 = vsel %vm130, %v1238, 0
  %v1275 = vsel %vm130, %v1240, 0
  %v1277 = vsel %vm130, %v1242, 0
  %v1279 = vsel %vm130, %v1244, 0
  %v1281 = vsel %vm130, %v1246, 0
  %v1283 = vsel %vm130, %v1248, 0
  %v1285 = vsel %vm130, %v1250, 0
  %v1287 = vsel %vm130, %v1252, 0
  %v1289 = vsel %vm130, %v1254, 0
  %1291 = vmatpush.msra.mxu0 0.0
  %1292 = vmatpush.msra.mxu0 0.0
  %1293 = vmatpush.msra.mxu0 0.0
  %1294 = vmatpush.msra.mxu0 0.0
  %1295 = vmatpush.msra.mxu0 0.0
  %1296 = vmatpush.msra.mxu0 0.0
  %1297 = vmatpush.msra.mxu0 0.0
  %1298 = vmatpush.msra.mxu0 0.0
  %1299 = vmatpush.msra.mxu0 0.0
  %1300 = vmatpush.msra.mxu0 0.0
  %1301 = vmatpush.msra.mxu0 0.0
  %1302 = vmatpush.msra.mxu0 0.0
  %1303 = vmatpush.msra.mxu0 0.0
  %1304 = vmatpush.msra.mxu0 0.0
  %1305 = vmatpush.msra.mxu0 %v1213
  %1306 = vmatpush.msra.mxu0 %v1209
  %1307 = vmatmul.f32.gmra.mxu0 %v1255
  %v1308 = vpop.f32.mrf.mxu0
  %v1309 = vadd.f32 0.0, %v1308
  %1310 = vmatmul.f32.gmra.mxu0 %v1257
  %v1311 = vpop.f32.mrf.mxu0
  %v1312 = vadd.f32 0.0, %v1311
  %1313 = vmatmul.f32.gmra.mxu0 %v1259
  %v1314 = vpop.f32.mrf.mxu0
  %v1315 = vadd.f32 0.0, %v1314
  %1316 = vmatmul.f32.gmra.mxu0 %v1261
  %v1317 = vpop.f32.mrf.mxu0
  %v1318 = vadd.f32 0.0, %v1317
  %1319 = vmatmul.f32.gmra.mxu0 %v1263
  %v1320 = vpop.f32.mrf.mxu0
  %v1321 = vadd.f32 0.0, %v1320
  %1322 = vmatmul.f32.gmra.mxu0 %v1265
  %v1323 = vpop.f32.mrf.mxu0
  %v1324 = vadd.f32 0.0, %v1323
  %1325 = vmatmul.f32.gmra.mxu0 %v1267
  %v1326 = vpop.f32.mrf.mxu0
  %v1327 = vadd.f32 0.0, %v1326
  %1328 = vmatmul.f32.gmra.mxu0 %v1269
  %v1329 = vpop.f32.mrf.mxu0
  %v1330 = vadd.f32 0.0, %v1329
  %1331 = vmatmul.f32.gmra.mxu0 %v1271
  %v1332 = vpop.f32.mrf.mxu0
  %v1333 = vadd.f32 0.0, %v1332
  %1334 = vmatmul.f32.gmra.mxu0 %v1273
  %v1335 = vpop.f32.mrf.mxu0
  %v1336 = vadd.f32 0.0, %v1335
  %1337 = vmatmul.f32.gmra.mxu0 %v1275
  %v1338 = vpop.f32.mrf.mxu0
  %v1339 = vadd.f32 0.0, %v1338
  %1340 = vmatmul.f32.gmra.mxu0 %v1277
  %v1341 = vpop.f32.mrf.mxu0
  %v1342 = vadd.f32 0.0, %v1341
  %1343 = vmatmul.f32.gmra.mxu0 %v1279
  %v1344 = vpop.f32.mrf.mxu0
  %v1345 = vadd.f32 0.0, %v1344
  %1346 = vmatmul.f32.gmra.mxu0 %v1281
  %v1347 = vpop.f32.mrf.mxu0
  %v1348 = vadd.f32 0.0, %v1347
  %1349 = vmatmul.f32.gmra.mxu0 %v1283
  %v1350 = vpop.f32.mrf.mxu0
  %v1351 = vadd.f32 0.0, %v1350
  %1352 = vmatmul.f32.gmra.mxu0 %v1285
  %v1353 = vpop.f32.mrf.mxu0
  %v1354 = vadd.f32 0.0, %v1353
  %1355 = vmatmul.f32.gmra.mxu0 %v1287
  %v1356 = vpop.f32.mrf.mxu0
  %v1357 = vadd.f32 0.0, %v1356
  %1358 = vmatmul.f32.gmra.mxu0 %v1289
  %v1359 = vpop.f32.mrf.mxu0
  %v1360 = vadd.f32 0.0, %v1359
  %1361 = vdwg.mxu0
  %1362 = vmatpush.msra.mxu0 0.0
  %1363 = vmatpush.msra.mxu0 0.0
  %1364 = vmatpush.msra.mxu0 0.0
  %1365 = vmatpush.msra.mxu0 0.0
  %1366 = vmatpush.msra.mxu0 0.0
  %1367 = vmatpush.msra.mxu0 0.0
  %1368 = vmatpush.msra.mxu0 0.0
  %1369 = vmatpush.msra.mxu0 0.0
  %1370 = vmatpush.msra.mxu0 0.0
  %1371 = vmatpush.msra.mxu0 0.0
  %1372 = vmatpush.msra.mxu0 0.0
  %1373 = vmatpush.msra.mxu0 0.0
  %1374 = vmatpush.msra.mxu0 0.0
  %1375 = vmatpush.msra.mxu0 0.0
  %1376 = vmatpush.msra.mxu0 %v1214
  %1377 = vmatpush.msra.mxu0 %v1210
  %1378 = vmatmul.f32.gmra.mxu0 %v1255
  %v1379 = vpop.f32.mrf.mxu0
  %v1380 = vadd.f32 0.0, %v1379
  %1381 = vmatmul.f32.gmra.mxu0 %v1257
  %v1382 = vpop.f32.mrf.mxu0
  %v1383 = vadd.f32 0.0, %v1382
  %1384 = vmatmul.f32.gmra.mxu0 %v1259
  %v1385 = vpop.f32.mrf.mxu0
  %v1386 = vadd.f32 0.0, %v1385
  %1387 = vmatmul.f32.gmra.mxu0 %v1261
  %v1388 = vpop.f32.mrf.mxu0
  %v1389 = vadd.f32 0.0, %v1388
  %1390 = vmatmul.f32.gmra.mxu0 %v1263
  %v1391 = vpop.f32.mrf.mxu0
  %v1392 = vadd.f32 0.0, %v1391
  %1393 = vmatmul.f32.gmra.mxu0 %v1265
  %v1394 = vpop.f32.mrf.mxu0
  %v1395 = vadd.f32 0.0, %v1394
  %1396 = vmatmul.f32.gmra.mxu0 %v1267
  %v1397 = vpop.f32.mrf.mxu0
  %v1398 = vadd.f32 0.0, %v1397
  %1399 = vmatmul.f32.gmra.mxu0 %v1269
  %v1400 = vpop.f32.mrf.mxu0
  %v1401 = vadd.f32 0.0, %v1400
  %1402 = vmatmul.f32.gmra.mxu0 %v1271
  %v1403 = vpop.f32.mrf.mxu0
  %v1404 = vadd.f32 0.0, %v1403
  %1405 = vmatmul.f32.gmra.mxu0 %v1273
  %v1406 = vpop.f32.mrf.mxu0
  %v1407 = vadd.f32 0.0, %v1406
  %1408 = vmatmul.f32.gmra.mxu0 %v1275
  %v1409 = vpop.f32.mrf.mxu0
  %v1410 = vadd.f32 0.0, %v1409
  %1411 = vmatmul.f32.gmra.mxu0 %v1277
  %v1412 = vpop.f32.mrf.mxu0
  %v1413 = vadd.f32 0.0, %v1412
  %1414 = vmatmul.f32.gmra.mxu0 %v1279
  %v1415 = vpop.f32.mrf.mxu0
  %v1416 = vadd.f32 0.0, %v1415
  %1417 = vmatmul.f32.gmra.mxu0 %v1281
  %v1418 = vpop.f32.mrf.mxu0
  %v1419 = vadd.f32 0.0, %v1418
  %1420 = vmatmul.f32.gmra.mxu0 %v1283
  %v1421 = vpop.f32.mrf.mxu0
  %v1422 = vadd.f32 0.0, %v1421
  %1423 = vmatmul.f32.gmra.mxu0 %v1285
  %v1424 = vpop.f32.mrf.mxu0
  %v1425 = vadd.f32 0.0, %v1424
  %1426 = vmatmul.f32.gmra.mxu0 %v1287
  %v1427 = vpop.f32.mrf.mxu0
  %v1428 = vadd.f32 0.0, %v1427
  %1429 = vmatmul.f32.gmra.mxu0 %v1289
  %v1430 = vpop.f32.mrf.mxu0
  %v1431 = vadd.f32 0.0, %v1430
  %1432 = vdwg.mxu0
  %1433 = vmatpush.msra.mxu0 0.0
  %1434 = vmatpush.msra.mxu0 0.0
  %1435 = vmatpush.msra.mxu0 0.0
  %1436 = vmatpush.msra.mxu0 0.0
  %1437 = vmatpush.msra.mxu0 0.0
  %1438 = vmatpush.msra.mxu0 0.0
  %1439 = vmatpush.msra.mxu0 0.0
  %1440 = vmatpush.msra.mxu0 0.0
  %1441 = vmatpush.msra.mxu0 0.0
  %1442 = vmatpush.msra.mxu0 0.0
  %1443 = vmatpush.msra.mxu0 0.0
  %1444 = vmatpush.msra.mxu0 0.0
  %1445 = vmatpush.msra.mxu0 0.0
  %1446 = vmatpush.msra.mxu0 0.0
  %1447 = vmatpush.msra.mxu0 %v1215
  %1448 = vmatpush.msra.mxu0 %v1211
  %1449 = vmatmul.f32.gmra.mxu0 %v1255
  %v1450 = vpop.f32.mrf.mxu0
  %v1451 = vadd.f32 0.0, %v1450
  %1452 = vmatmul.f32.gmra.mxu0 %v1257
  %v1453 = vpop.f32.mrf.mxu0
  %v1454 = vadd.f32 0.0, %v1453
  %1455 = vmatmul.f32.gmra.mxu0 %v1259
  %v1456 = vpop.f32.mrf.mxu0
  %v1457 = vadd.f32 0.0, %v1456
  %1458 = vmatmul.f32.gmra.mxu0 %v1261
  %v1459 = vpop.f32.mrf.mxu0
  %v1460 = vadd.f32 0.0, %v1459
  %1461 = vmatmul.f32.gmra.mxu0 %v1263
  %v1462 = vpop.f32.mrf.mxu0
  %v1463 = vadd.f32 0.0, %v1462
  %1464 = vmatmul.f32.gmra.mxu0 %v1265
  %v1465 = vpop.f32.mrf.mxu0
  %v1466 = vadd.f32 0.0, %v1465
  %1467 = vmatmul.f32.gmra.mxu0 %v1267
  %v1468 = vpop.f32.mrf.mxu0
  %v1469 = vadd.f32 0.0, %v1468
  %1470 = vmatmul.f32.gmra.mxu0 %v1269
  %v1471 = vpop.f32.mrf.mxu0
  %v1472 = vadd.f32 0.0, %v1471
  %1473 = vmatmul.f32.gmra.mxu0 %v1271
  %v1474 = vpop.f32.mrf.mxu0
  %v1475 = vadd.f32 0.0, %v1474
  %1476 = vmatmul.f32.gmra.mxu0 %v1273
  %v1477 = vpop.f32.mrf.mxu0
  %v1478 = vadd.f32 0.0, %v1477
  %1479 = vmatmul.f32.gmra.mxu0 %v1275
  %v1480 = vpop.f32.mrf.mxu0
  %v1481 = vadd.f32 0.0, %v1480
  %1482 = vmatmul.f32.gmra.mxu0 %v1277
  %v1483 = vpop.f32.mrf.mxu0
  %v1484 = vadd.f32 0.0, %v1483
  %1485 = vmatmul.f32.gmra.mxu0 %v1279
  %v1486 = vpop.f32.mrf.mxu0
  %v1487 = vadd.f32 0.0, %v1486
  %1488 = vmatmul.f32.gmra.mxu0 %v1281
  %v1489 = vpop.f32.mrf.mxu0
  %v1490 = vadd.f32 0.0, %v1489
  %1491 = vmatmul.f32.gmra.mxu0 %v1283
  %v1492 = vpop.f32.mrf.mxu0
  %v1493 = vadd.f32 0.0, %v1492
  %1494 = vmatmul.f32.gmra.mxu0 %v1285
  %v1495 = vpop.f32.mrf.mxu0
  %v1496 = vadd.f32 0.0, %v1495
  %1497 = vmatmul.f32.gmra.mxu0 %v1287
  %v1498 = vpop.f32.mrf.mxu0
  %v1499 = vadd.f32 0.0, %v1498
  %1500 = vmatmul.f32.gmra.mxu0 %v1289
  %v1501 = vpop.f32.mrf.mxu0
  %v1502 = vadd.f32 0.0, %v1501
  %1503 = vdwg.mxu0
  %1504 = vmatpush.msra.mxu0 0.0
  %1505 = vmatpush.msra.mxu0 0.0
  %1506 = vmatpush.msra.mxu0 0.0
  %1507 = vmatpush.msra.mxu0 0.0
  %1508 = vmatpush.msra.mxu0 0.0
  %1509 = vmatpush.msra.mxu0 0.0
  %1510 = vmatpush.msra.mxu0 0.0
  %1511 = vmatpush.msra.mxu0 0.0
  %1512 = vmatpush.msra.mxu0 0.0
  %1513 = vmatpush.msra.mxu0 0.0
  %1514 = vmatpush.msra.mxu0 0.0
  %1515 = vmatpush.msra.mxu0 0.0
  %1516 = vmatpush.msra.mxu0 0.0
  %1517 = vmatpush.msra.mxu0 0.0
  %1518 = vmatpush.msra.mxu0 %v1216
  %1519 = vmatpush.msra.mxu0 %v1212
  %1520 = vmatmul.f32.gmra.mxu0 %v1255
  %v1521 = vpop.f32.mrf.mxu0
  %v1522 = vadd.f32 0.0, %v1521
  %1523 = vmatmul.f32.gmra.mxu0 %v1257
  %v1524 = vpop.f32.mrf.mxu0
  %v1525 = vadd.f32 0.0, %v1524
  %1526 = vmatmul.f32.gmra.mxu0 %v1259
  %v1527 = vpop.f32.mrf.mxu0
  %v1528 = vadd.f32 0.0, %v1527
  %1529 = vmatmul.f32.gmra.mxu0 %v1261
  %v1530 = vpop.f32.mrf.mxu0
  %v1531 = vadd.f32 0.0, %v1530
  %1532 = vmatmul.f32.gmra.mxu0 %v1263
  %v1533 = vpop.f32.mrf.mxu0
  %v1534 = vadd.f32 0.0, %v1533
  %1535 = vmatmul.f32.gmra.mxu0 %v1265
  %v1536 = vpop.f32.mrf.mxu0
  %v1537 = vadd.f32 0.0, %v1536
  %1538 = vmatmul.f32.gmra.mxu0 %v1267
  %v1539 = vpop.f32.mrf.mxu0
  %v1540 = vadd.f32 0.0, %v1539
  %1541 = vmatmul.f32.gmra.mxu0 %v1269
  %v1542 = vpop.f32.mrf.mxu0
  %v1543 = vadd.f32 0.0, %v1542
  %1544 = vmatmul.f32.gmra.mxu0 %v1271
  %v1545 = vpop.f32.mrf.mxu0
  %v1546 = vadd.f32 0.0, %v1545
  %1547 = vmatmul.f32.gmra.mxu0 %v1273
  %v1548 = vpop.f32.mrf.mxu0
  %v1549 = vadd.f32 0.0, %v1548
  %1550 = vmatmul.f32.gmra.mxu0 %v1275
  %v1551 = vpop.f32.mrf.mxu0
  %v1552 = vadd.f32 0.0, %v1551
  %1553 = vmatmul.f32.gmra.mxu0 %v1277
  %v1554 = vpop.f32.mrf.mxu0
  %v1555 = vadd.f32 0.0, %v1554
  %1556 = vmatmul.f32.gmra.mxu0 %v1279
  %v1557 = vpop.f32.mrf.mxu0
  %v1558 = vadd.f32 0.0, %v1557
  %1559 = vmatmul.f32.gmra.mxu0 %v1281
  %v1560 = vpop.f32.mrf.mxu0
  %v1561 = vadd.f32 0.0, %v1560
  %1562 = vmatmul.f32.gmra.mxu0 %v1283
  %v1563 = vpop.f32.mrf.mxu0
  %v1564 = vadd.f32 0.0, %v1563
  %1565 = vmatmul.f32.gmra.mxu0 %v1285
  %v1566 = vpop.f32.mrf.mxu0
  %v1567 = vadd.f32 0.0, %v1566
  %1568 = vmatmul.f32.gmra.mxu0 %v1287
  %v1569 = vpop.f32.mrf.mxu0
  %v1570 = vadd.f32 0.0, %v1569
  %1571 = vmatmul.f32.gmra.mxu0 %v1289
  %v1572 = vpop.f32.mrf.mxu0
  %v1573 = vadd.f32 0.0, %v1572
  %1574 = vdwg.mxu0
  %v1575 = vadd.f32 %v1137, %v1309
  %v1576 = vadd.f32 %v1138, %v1380
  %v1577 = vadd.f32 %v1139, %v1451
  %v1578 = vadd.f32 %v1140, %v1522
  %v1579 = vadd.f32 %v1141, %v1312
  %v1580 = vadd.f32 %v1142, %v1383
  %v1581 = vadd.f32 %v1143, %v1454
  %v1582 = vadd.f32 %v1144, %v1525
  %v1583 = vadd.f32 %v1145, %v1315
  %v1584 = vadd.f32 %v1146, %v1386
  %v1585 = vadd.f32 %v1147, %v1457
  %v1586 = vadd.f32 %v1148, %v1528
  %v1587 = vadd.f32 %v1149, %v1318
  %v1588 = vadd.f32 %v1150, %v1389
  %v1589 = vadd.f32 %v1151, %v1460
  %v1590 = vadd.f32 %v1152, %v1531
  %v1591 = vadd.f32 %v1153, %v1321
  %v1592 = vadd.f32 %v1154, %v1392
  %v1593 = vadd.f32 %v1155, %v1463
  %v1594 = vadd.f32 %v1156, %v1534
  %v1595 = vadd.f32 %v1157, %v1324
  %v1596 = vadd.f32 %v1158, %v1395
  %v1597 = vadd.f32 %v1159, %v1466
  %v1598 = vadd.f32 %v1160, %v1537
  %v1599 = vadd.f32 %v1161, %v1327
  %v1600 = vadd.f32 %v1162, %v1398
  %v1601 = vadd.f32 %v1163, %v1469
  %v1602 = vadd.f32 %v1164, %v1540
  %v1603 = vadd.f32 %v1165, %v1330
  %v1604 = vadd.f32 %v1166, %v1401
  %v1605 = vadd.f32 %v1167, %v1472
  %v1606 = vadd.f32 %v1168, %v1543
  %v1607 = vadd.f32 %v1169, %v1333
  %v1608 = vadd.f32 %v1170, %v1404
  %v1609 = vadd.f32 %v1171, %v1475
  %v1610 = vadd.f32 %v1172, %v1546
  %v1611 = vadd.f32 %v1173, %v1336
  %v1612 = vadd.f32 %v1174, %v1407
  %v1613 = vadd.f32 %v1175, %v1478
  %v1614 = vadd.f32 %v1176, %v1549
  %v1615 = vadd.f32 %v1177, %v1339
  %v1616 = vadd.f32 %v1178, %v1410
  %v1617 = vadd.f32 %v1179, %v1481
  %v1618 = vadd.f32 %v1180, %v1552
  %v1619 = vadd.f32 %v1181, %v1342
  %v1620 = vadd.f32 %v1182, %v1413
  %v1621 = vadd.f32 %v1183, %v1484
  %v1622 = vadd.f32 %v1184, %v1555
  %v1623 = vadd.f32 %v1185, %v1345
  %v1624 = vadd.f32 %v1186, %v1416
  %v1625 = vadd.f32 %v1187, %v1487
  %v1626 = vadd.f32 %v1188, %v1558
  %v1627 = vadd.f32 %v1189, %v1348
  %v1628 = vadd.f32 %v1190, %v1419
  %v1629 = vadd.f32 %v1191, %v1490
  %v1630 = vadd.f32 %v1192, %v1561
  %v1631 = vadd.f32 %v1193, %v1351
  %v1632 = vadd.f32 %v1194, %v1422
  %v1633 = vadd.f32 %v1195, %v1493
  %v1634 = vadd.f32 %v1196, %v1564
  %v1635 = vadd.f32 %v1197, %v1354
  %v1636 = vadd.f32 %v1198, %v1425
  %v1637 = vadd.f32 %v1199, %v1496
  %v1638 = vadd.f32 %v1200, %v1567
  %v1639 = vadd.f32 %v1201, %v1357
  %v1640 = vadd.f32 %v1202, %v1428
  %v1641 = vadd.f32 %v1203, %v1499
  %v1642 = vadd.f32 %v1204, %v1570
  %v1643 = vadd.f32 %v1205, %v1360
  %v1644 = vadd.f32 %v1206, %v1431
  %v1645 = vadd.f32 %v1207, %v1502
  %v1646 = vadd.f32 %v1208, %v1573
  %v1647 = vld [vmem:[%s1 + $0x100] sm:$0xff]
  %v1648 = vld [vmem:[%s1 + $0x108] sm:$0xff]
  %v1649 = vld [vmem:[%s1 + $0x110] sm:$0xff]
  %v1650 = vld [vmem:[%s1 + $0x118] sm:$0xff]
  %v1651 = vld [vmem:[%s1 + $0x120] sm:$0xff]
  %v1652 = vld [vmem:[%s1 + $0x128] sm:$0xff]
  %v1653 = vld [vmem:[%s1 + $0x130] sm:$0xff]
  %v1654 = vld [vmem:[%s1 + $0x138] sm:$0xff]
  %vm1655 = vcmask 1043456
  %v1656 = vrot.slane %v20, 4
  %v1657 = vrot.slane %v21, 4
  %v1658 = vsel %vm1655, %v1656, %v1657
  %v1659 = vrot.slane %v22, 4
  %v1660 = vsel %vm1655, %v1657, %v1659
  %v1661 = vrot.slane %v23, 4
  %v1662 = vsel %vm1655, %v1659, %v1661
  %v1663 = vrot.slane %v24, 4
  %v1664 = vsel %vm1655, %v1661, %v1663
  %v1665 = vrot.slane %v25, 4
  %v1666 = vsel %vm1655, %v1663, %v1665
  %v1667 = vrot.slane %v26, 4
  %v1668 = vsel %vm1655, %v1665, %v1667
  %v1669 = vrot.slane %v27, 4
  %v1670 = vsel %vm1655, %v1667, %v1669
  %v1671 = vrot.slane %v28, 4
  %v1672 = vsel %vm1655, %v1669, %v1671
  %v1673 = vrot.slane %v29, 4
  %v1674 = vsel %vm1655, %v1671, %v1673
  %v1675 = vrot.slane %v30, 4
  %v1676 = vsel %vm1655, %v1673, %v1675
  %v1677 = vrot.slane %v31, 4
  %v1678 = vsel %vm1655, %v1675, %v1677
  %v1679 = vrot.slane %v32, 4
  %v1680 = vsel %vm1655, %v1677, %v1679
  %v1681 = vrot.slane %v33, 4
  %v1682 = vsel %vm1655, %v1679, %v1681
  %v1683 = vrot.slane %v34, 4
  %v1684 = vsel %vm1655, %v1681, %v1683
  %v1685 = vrot.slane %v35, 4
  %v1686 = vsel %vm1655, %v1683, %v1685
  %v1687 = vrot.slane %v36, 4
  %v1688 = vsel %vm1655, %v1685, %v1687
  %v1689 = vrot.slane %v37, 4
  %v1690 = vsel %vm1655, %v1687, %v1689
  %v1691 = vrot.slane %v38, 4
  %v1692 = vsel %vm1655, %v1689, %v1691
  %v1693 = vsel %vm130, %v1658, 0
  %v1695 = vsel %vm130, %v1660, 0
  %v1697 = vsel %vm130, %v1662, 0
  %v1699 = vsel %vm130, %v1664, 0
  %v1701 = vsel %vm130, %v1666, 0
  %v1703 = vsel %vm130, %v1668, 0
  %v1705 = vsel %vm130, %v1670, 0
  %v1707 = vsel %vm130, %v1672, 0
  %v1709 = vsel %vm130, %v1674, 0
  %v1711 = vsel %vm130, %v1676, 0
  %v1713 = vsel %vm130, %v1678, 0
  %v1715 = vsel %vm130, %v1680, 0
  %v1717 = vsel %vm130, %v1682, 0
  %v1719 = vsel %vm130, %v1684, 0
  %v1721 = vsel %vm130, %v1686, 0
  %v1723 = vsel %vm130, %v1688, 0
  %v1725 = vsel %vm130, %v1690, 0
  %v1727 = vsel %vm130, %v1692, 0
  %1729 = vmatpush.msra.mxu0 0.0
  %1730 = vmatpush.msra.mxu0 0.0
  %1731 = vmatpush.msra.mxu0 0.0
  %1732 = vmatpush.msra.mxu0 0.0
  %1733 = vmatpush.msra.mxu0 0.0
  %1734 = vmatpush.msra.mxu0 0.0
  %1735 = vmatpush.msra.mxu0 0.0
  %1736 = vmatpush.msra.mxu0 0.0
  %1737 = vmatpush.msra.mxu0 0.0
  %1738 = vmatpush.msra.mxu0 0.0
  %1739 = vmatpush.msra.mxu0 0.0
  %1740 = vmatpush.msra.mxu0 0.0
  %1741 = vmatpush.msra.mxu0 0.0
  %1742 = vmatpush.msra.mxu0 0.0
  %1743 = vmatpush.msra.mxu0 %v1651
  %1744 = vmatpush.msra.mxu0 %v1647
  %1745 = vmatmul.f32.gmra.mxu0 %v1693
  %v1746 = vpop.f32.mrf.mxu0
  %v1747 = vadd.f32 0.0, %v1746
  %1748 = vmatmul.f32.gmra.mxu0 %v1695
  %v1749 = vpop.f32.mrf.mxu0
  %v1750 = vadd.f32 0.0, %v1749
  %1751 = vmatmul.f32.gmra.mxu0 %v1697
  %v1752 = vpop.f32.mrf.mxu0
  %v1753 = vadd.f32 0.0, %v1752
  %1754 = vmatmul.f32.gmra.mxu0 %v1699
  %v1755 = vpop.f32.mrf.mxu0
  %v1756 = vadd.f32 0.0, %v1755
  %1757 = vmatmul.f32.gmra.mxu0 %v1701
  %v1758 = vpop.f32.mrf.mxu0
  %v1759 = vadd.f32 0.0, %v1758
  %1760 = vmatmul.f32.gmra.mxu0 %v1703
  %v1761 = vpop.f32.mrf.mxu0
  %v1762 = vadd.f32 0.0, %v1761
  %1763 = vmatmul.f32.gmra.mxu0 %v1705
  %v1764 = vpop.f32.mrf.mxu0
  %v1765 = vadd.f32 0.0, %v1764
  %1766 = vmatmul.f32.gmra.mxu0 %v1707
  %v1767 = vpop.f32.mrf.mxu0
  %v1768 = vadd.f32 0.0, %v1767
  %1769 = vmatmul.f32.gmra.mxu0 %v1709
  %v1770 = vpop.f32.mrf.mxu0
  %v1771 = vadd.f32 0.0, %v1770
  %1772 = vmatmul.f32.gmra.mxu0 %v1711
  %v1773 = vpop.f32.mrf.mxu0
  %v1774 = vadd.f32 0.0, %v1773
  %1775 = vmatmul.f32.gmra.mxu0 %v1713
  %v1776 = vpop.f32.mrf.mxu0
  %v1777 = vadd.f32 0.0, %v1776
  %1778 = vmatmul.f32.gmra.mxu0 %v1715
  %v1779 = vpop.f32.mrf.mxu0
  %v1780 = vadd.f32 0.0, %v1779
  %1781 = vmatmul.f32.gmra.mxu0 %v1717
  %v1782 = vpop.f32.mrf.mxu0
  %v1783 = vadd.f32 0.0, %v1782
  %1784 = vmatmul.f32.gmra.mxu0 %v1719
  %v1785 = vpop.f32.mrf.mxu0
  %v1786 = vadd.f32 0.0, %v1785
  %1787 = vmatmul.f32.gmra.mxu0 %v1721
  %v1788 = vpop.f32.mrf.mxu0
  %v1789 = vadd.f32 0.0, %v1788
  %1790 = vmatmul.f32.gmra.mxu0 %v1723
  %v1791 = vpop.f32.mrf.mxu0
  %v1792 = vadd.f32 0.0, %v1791
  %1793 = vmatmul.f32.gmra.mxu0 %v1725
  %v1794 = vpop.f32.mrf.mxu0
  %v1795 = vadd.f32 0.0, %v1794
  %1796 = vmatmul.f32.gmra.mxu0 %v1727
  %v1797 = vpop.f32.mrf.mxu0
  %v1798 = vadd.f32 0.0, %v1797
  %1799 = vdwg.mxu0
  %1800 = vmatpush.msra.mxu0 0.0
  %1801 = vmatpush.msra.mxu0 0.0
  %1802 = vmatpush.msra.mxu0 0.0
  %1803 = vmatpush.msra.mxu0 0.0
  %1804 = vmatpush.msra.mxu0 0.0
  %1805 = vmatpush.msra.mxu0 0.0
  %1806 = vmatpush.msra.mxu0 0.0
  %1807 = vmatpush.msra.mxu0 0.0
  %1808 = vmatpush.msra.mxu0 0.0
  %1809 = vmatpush.msra.mxu0 0.0
  %1810 = vmatpush.msra.mxu0 0.0
  %1811 = vmatpush.msra.mxu0 0.0
  %1812 = vmatpush.msra.mxu0 0.0
  %1813 = vmatpush.msra.mxu0 0.0
  %1814 = vmatpush.msra.mxu0 %v1652
  %1815 = vmatpush.msra.mxu0 %v1648
  %1816 = vmatmul.f32.gmra.mxu0 %v1693
  %v1817 = vpop.f32.mrf.mxu0
  %v1818 = vadd.f32 0.0, %v1817
  %1819 = vmatmul.f32.gmra.mxu0 %v1695
  %v1820 = vpop.f32.mrf.mxu0
  %v1821 = vadd.f32 0.0, %v1820
  %1822 = vmatmul.f32.gmra.mxu0 %v1697
  %v1823 = vpop.f32.mrf.mxu0
  %v1824 = vadd.f32 0.0, %v1823
  %1825 = vmatmul.f32.gmra.mxu0 %v1699
  %v1826 = vpop.f32.mrf.mxu0
  %v1827 = vadd.f32 0.0, %v1826
  %1828 = vmatmul.f32.gmra.mxu0 %v1701
  %v1829 = vpop.f32.mrf.mxu0
  %v1830 = vadd.f32 0.0, %v1829
  %1831 = vmatmul.f32.gmra.mxu0 %v1703
  %v1832 = vpop.f32.mrf.mxu0
  %v1833 = vadd.f32 0.0, %v1832
  %1834 = vmatmul.f32.gmra.mxu0 %v1705
  %v1835 = vpop.f32.mrf.mxu0
  %v1836 = vadd.f32 0.0, %v1835
  %1837 = vmatmul.f32.gmra.mxu0 %v1707
  %v1838 = vpop.f32.mrf.mxu0
  %v1839 = vadd.f32 0.0, %v1838
  %1840 = vmatmul.f32.gmra.mxu0 %v1709
  %v1841 = vpop.f32.mrf.mxu0
  %v1842 = vadd.f32 0.0, %v1841
  %1843 = vmatmul.f32.gmra.mxu0 %v1711
  %v1844 = vpop.f32.mrf.mxu0
  %v1845 = vadd.f32 0.0, %v1844
  %1846 = vmatmul.f32.gmra.mxu0 %v1713
  %v1847 = vpop.f32.mrf.mxu0
  %v1848 = vadd.f32 0.0, %v1847
  %1849 = vmatmul.f32.gmra.mxu0 %v1715
  %v1850 = vpop.f32.mrf.mxu0
  %v1851 = vadd.f32 0.0, %v1850
  %1852 = vmatmul.f32.gmra.mxu0 %v1717
  %v1853 = vpop.f32.mrf.mxu0
  %v1854 = vadd.f32 0.0, %v1853
  %1855 = vmatmul.f32.gmra.mxu0 %v1719
  %v1856 = vpop.f32.mrf.mxu0
  %v1857 = vadd.f32 0.0, %v1856
  %1858 = vmatmul.f32.gmra.mxu0 %v1721
  %v1859 = vpop.f32.mrf.mxu0
  %v1860 = vadd.f32 0.0, %v1859
  %1861 = vmatmul.f32.gmra.mxu0 %v1723
  %v1862 = vpop.f32.mrf.mxu0
  %v1863 = vadd.f32 0.0, %v1862
  %1864 = vmatmul.f32.gmra.mxu0 %v1725
  %v1865 = vpop.f32.mrf.mxu0
  %v1866 = vadd.f32 0.0, %v1865
  %1867 = vmatmul.f32.gmra.mxu0 %v1727
  %v1868 = vpop.f32.mrf.mxu0
  %v1869 = vadd.f32 0.0, %v1868
  %1870 = vdwg.mxu0
  %1871 = vmatpush.msra.mxu0 0.0
  %1872 = vmatpush.msra.mxu0 0.0
  %1873 = vmatpush.msra.mxu0 0.0
  %1874 = vmatpush.msra.mxu0 0.0
  %1875 = vmatpush.msra.mxu0 0.0
  %1876 = vmatpush.msra.mxu0 0.0
  %1877 = vmatpush.msra.mxu0 0.0
  %1878 = vmatpush.msra.mxu0 0.0
  %1879 = vmatpush.msra.mxu0 0.0
  %1880 = vmatpush.msra.mxu0 0.0
  %1881 = vmatpush.msra.mxu0 0.0
  %1882 = vmatpush.msra.mxu0 0.0
  %1883 = vmatpush.msra.mxu0 0.0
  %1884 = vmatpush.msra.mxu0 0.0
  %1885 = vmatpush.msra.mxu0 %v1653
  %1886 = vmatpush.msra.mxu0 %v1649
  %1887 = vmatmul.f32.gmra.mxu0 %v1693
  %v1888 = vpop.f32.mrf.mxu0
  %v1889 = vadd.f32 0.0, %v1888
  %1890 = vmatmul.f32.gmra.mxu0 %v1695
  %v1891 = vpop.f32.mrf.mxu0
  %v1892 = vadd.f32 0.0, %v1891
  %1893 = vmatmul.f32.gmra.mxu0 %v1697
  %v1894 = vpop.f32.mrf.mxu0
  %v1895 = vadd.f32 0.0, %v1894
  %1896 = vmatmul.f32.gmra.mxu0 %v1699
  %v1897 = vpop.f32.mrf.mxu0
  %v1898 = vadd.f32 0.0, %v1897
  %1899 = vmatmul.f32.gmra.mxu0 %v1701
  %v1900 = vpop.f32.mrf.mxu0
  %v1901 = vadd.f32 0.0, %v1900
  %1902 = vmatmul.f32.gmra.mxu0 %v1703
  %v1903 = vpop.f32.mrf.mxu0
  %v1904 = vadd.f32 0.0, %v1903
  %1905 = vmatmul.f32.gmra.mxu0 %v1705
  %v1906 = vpop.f32.mrf.mxu0
  %v1907 = vadd.f32 0.0, %v1906
  %1908 = vmatmul.f32.gmra.mxu0 %v1707
  %v1909 = vpop.f32.mrf.mxu0
  %v1910 = vadd.f32 0.0, %v1909
  %1911 = vmatmul.f32.gmra.mxu0 %v1709
  %v1912 = vpop.f32.mrf.mxu0
  %v1913 = vadd.f32 0.0, %v1912
  %1914 = vmatmul.f32.gmra.mxu0 %v1711
  %v1915 = vpop.f32.mrf.mxu0
  %v1916 = vadd.f32 0.0, %v1915
  %1917 = vmatmul.f32.gmra.mxu0 %v1713
  %v1918 = vpop.f32.mrf.mxu0
  %v1919 = vadd.f32 0.0, %v1918
  %1920 = vmatmul.f32.gmra.mxu0 %v1715
  %v1921 = vpop.f32.mrf.mxu0
  %v1922 = vadd.f32 0.0, %v1921
  %1923 = vmatmul.f32.gmra.mxu0 %v1717
  %v1924 = vpop.f32.mrf.mxu0
  %v1925 = vadd.f32 0.0, %v1924
  %1926 = vmatmul.f32.gmra.mxu0 %v1719
  %v1927 = vpop.f32.mrf.mxu0
  %v1928 = vadd.f32 0.0, %v1927
  %1929 = vmatmul.f32.gmra.mxu0 %v1721
  %v1930 = vpop.f32.mrf.mxu0
  %v1931 = vadd.f32 0.0, %v1930
  %1932 = vmatmul.f32.gmra.mxu0 %v1723
  %v1933 = vpop.f32.mrf.mxu0
  %v1934 = vadd.f32 0.0, %v1933
  %1935 = vmatmul.f32.gmra.mxu0 %v1725
  %v1936 = vpop.f32.mrf.mxu0
  %v1937 = vadd.f32 0.0, %v1936
  %1938 = vmatmul.f32.gmra.mxu0 %v1727
  %v1939 = vpop.f32.mrf.mxu0
  %v1940 = vadd.f32 0.0, %v1939
  %1941 = vdwg.mxu0
  %1942 = vmatpush.msra.mxu0 0.0
  %1943 = vmatpush.msra.mxu0 0.0
  %1944 = vmatpush.msra.mxu0 0.0
  %1945 = vmatpush.msra.mxu0 0.0
  %1946 = vmatpush.msra.mxu0 0.0
  %1947 = vmatpush.msra.mxu0 0.0
  %1948 = vmatpush.msra.mxu0 0.0
  %1949 = vmatpush.msra.mxu0 0.0
  %1950 = vmatpush.msra.mxu0 0.0
  %1951 = vmatpush.msra.mxu0 0.0
  %1952 = vmatpush.msra.mxu0 0.0
  %1953 = vmatpush.msra.mxu0 0.0
  %1954 = vmatpush.msra.mxu0 0.0
  %1955 = vmatpush.msra.mxu0 0.0
  %1956 = vmatpush.msra.mxu0 %v1654
  %1957 = vmatpush.msra.mxu0 %v1650
  %1958 = vmatmul.f32.gmra.mxu0 %v1693
  %v1959 = vpop.f32.mrf.mxu0
  %v1960 = vadd.f32 0.0, %v1959
  %1961 = vmatmul.f32.gmra.mxu0 %v1695
  %v1962 = vpop.f32.mrf.mxu0
  %v1963 = vadd.f32 0.0, %v1962
  %1964 = vmatmul.f32.gmra.mxu0 %v1697
  %v1965 = vpop.f32.mrf.mxu0
  %v1966 = vadd.f32 0.0, %v1965
  %1967 = vmatmul.f32.gmra.mxu0 %v1699
  %v1968 = vpop.f32.mrf.mxu0
  %v1969 = vadd.f32 0.0, %v1968
  %1970 = vmatmul.f32.gmra.mxu0 %v1701
  %v1971 = vpop.f32.mrf.mxu0
  %v1972 = vadd.f32 0.0, %v1971
  %1973 = vmatmul.f32.gmra.mxu0 %v1703
  %v1974 = vpop.f32.mrf.mxu0
  %v1975 = vadd.f32 0.0, %v1974
  %1976 = vmatmul.f32.gmra.mxu0 %v1705
  %v1977 = vpop.f32.mrf.mxu0
  %v1978 = vadd.f32 0.0, %v1977
  %1979 = vmatmul.f32.gmra.mxu0 %v1707
  %v1980 = vpop.f32.mrf.mxu0
  %v1981 = vadd.f32 0.0, %v1980
  %1982 = vmatmul.f32.gmra.mxu0 %v1709
  %v1983 = vpop.f32.mrf.mxu0
  %v1984 = vadd.f32 0.0, %v1983
  %1985 = vmatmul.f32.gmra.mxu0 %v1711
  %v1986 = vpop.f32.mrf.mxu0
  %v1987 = vadd.f32 0.0, %v1986
  %1988 = vmatmul.f32.gmra.mxu0 %v1713
  %v1989 = vpop.f32.mrf.mxu0
  %v1990 = vadd.f32 0.0, %v1989
  %1991 = vmatmul.f32.gmra.mxu0 %v1715
  %v1992 = vpop.f32.mrf.mxu0
  %v1993 = vadd.f32 0.0, %v1992
  %1994 = vmatmul.f32.gmra.mxu0 %v1717
  %v1995 = vpop.f32.mrf.mxu0
  %v1996 = vadd.f32 0.0, %v1995
  %1997 = vmatmul.f32.gmra.mxu0 %v1719
  %v1998 = vpop.f32.mrf.mxu0
  %v1999 = vadd.f32 0.0, %v1998
  %2000 = vmatmul.f32.gmra.mxu0 %v1721
  %v2001 = vpop.f32.mrf.mxu0
  %v2002 = vadd.f32 0.0, %v2001
  %2003 = vmatmul.f32.gmra.mxu0 %v1723
  %v2004 = vpop.f32.mrf.mxu0
  %v2005 = vadd.f32 0.0, %v2004
  %2006 = vmatmul.f32.gmra.mxu0 %v1725
  %v2007 = vpop.f32.mrf.mxu0
  %v2008 = vadd.f32 0.0, %v2007
  %2009 = vmatmul.f32.gmra.mxu0 %v1727
  %v2010 = vpop.f32.mrf.mxu0
  %v2011 = vadd.f32 0.0, %v2010
  %2012 = vdwg.mxu0
  %v2013 = vadd.f32 %v1575, %v1747
  %v2014 = vadd.f32 %v1576, %v1818
  %v2015 = vadd.f32 %v1577, %v1889
  %v2016 = vadd.f32 %v1578, %v1960
  %v2017 = vadd.f32 %v1579, %v1750
  %v2018 = vadd.f32 %v1580, %v1821
  %v2019 = vadd.f32 %v1581, %v1892
  %v2020 = vadd.f32 %v1582, %v1963
  %v2021 = vadd.f32 %v1583, %v1753
  %v2022 = vadd.f32 %v1584, %v1824
  %v2023 = vadd.f32 %v1585, %v1895
  %v2024 = vadd.f32 %v1586, %v1966
  %v2025 = vadd.f32 %v1587, %v1756
  %v2026 = vadd.f32 %v1588, %v1827
  %v2027 = vadd.f32 %v1589, %v1898
  %v2028 = vadd.f32 %v1590, %v1969
  %v2029 = vadd.f32 %v1591, %v1759
  %v2030 = vadd.f32 %v1592, %v1830
  %v2031 = vadd.f32 %v1593, %v1901
  %v2032 = vadd.f32 %v1594, %v1972
  %v2033 = vadd.f32 %v1595, %v1762
  %v2034 = vadd.f32 %v1596, %v1833
  %v2035 = vadd.f32 %v1597, %v1904
  %v2036 = vadd.f32 %v1598, %v1975
  %v2037 = vadd.f32 %v1599, %v1765
  %v2038 = vadd.f32 %v1600, %v1836
  %v2039 = vadd.f32 %v1601, %v1907
  %v2040 = vadd.f32 %v1602, %v1978
  %v2041 = vadd.f32 %v1603, %v1768
  %v2042 = vadd.f32 %v1604, %v1839
  %v2043 = vadd.f32 %v1605, %v1910
  %v2044 = vadd.f32 %v1606, %v1981
  %v2045 = vadd.f32 %v1607, %v1771
  %v2046 = vadd.f32 %v1608, %v1842
  %v2047 = vadd.f32 %v1609, %v1913
  %v2048 = vadd.f32 %v1610, %v1984
  %v2049 = vadd.f32 %v1611, %v1774
  %v2050 = vadd.f32 %v1612, %v1845
  %v2051 = vadd.f32 %v1613, %v1916
  %v2052 = vadd.f32 %v1614, %v1987
  %v2053 = vadd.f32 %v1615, %v1777
  %v2054 = vadd.f32 %v1616, %v1848
  %v2055 = vadd.f32 %v1617, %v1919
  %v2056 = vadd.f32 %v1618, %v1990
  %v2057 = vadd.f32 %v1619, %v1780
  %v2058 = vadd.f32 %v1620, %v1851
  %v2059 = vadd.f32 %v1621, %v1922
  %v2060 = vadd.f32 %v1622, %v1993
  %v2061 = vadd.f32 %v1623, %v1783
  %v2062 = vadd.f32 %v1624, %v1854
  %v2063 = vadd.f32 %v1625, %v1925
  %v2064 = vadd.f32 %v1626, %v1996
  %v2065 = vadd.f32 %v1627, %v1786
  %v2066 = vadd.f32 %v1628, %v1857
  %v2067 = vadd.f32 %v1629, %v1928
  %v2068 = vadd.f32 %v1630, %v1999
  %v2069 = vadd.f32 %v1631, %v1789
  %v2070 = vadd.f32 %v1632, %v1860
  %v2071 = vadd.f32 %v1633, %v1931
  %v2072 = vadd.f32 %v1634, %v2002
  %v2073 = vadd.f32 %v1635, %v1792
  %v2074 = vadd.f32 %v1636, %v1863
  %v2075 = vadd.f32 %v1637, %v1934
  %v2076 = vadd.f32 %v1638, %v2005
  %v2077 = vadd.f32 %v1639, %v1795
  %v2078 = vadd.f32 %v1640, %v1866
  %v2079 = vadd.f32 %v1641, %v1937
  %v2080 = vadd.f32 %v1642, %v2008
  %v2081 = vadd.f32 %v1643, %v1798
  %v2082 = vadd.f32 %v1644, %v1869
  %v2083 = vadd.f32 %v1645, %v1940
  %v2084 = vadd.f32 %v1646, %v2011
  %v2085 = vld [vmem:[%s1 + $0x140] sm:$0xff]
  %v2086 = vld [vmem:[%s1 + $0x148] sm:$0xff]
  %v2087 = vld [vmem:[%s1 + $0x150] sm:$0xff]
  %v2088 = vld [vmem:[%s1 + $0x158] sm:$0xff]
  %v2089 = vld [vmem:[%s1 + $0x160] sm:$0xff]
  %v2090 = vld [vmem:[%s1 + $0x168] sm:$0xff]
  %v2091 = vld [vmem:[%s1 + $0x170] sm:$0xff]
  %v2092 = vld [vmem:[%s1 + $0x178] sm:$0xff]
  %vm2093 = vcmask 1042432
  %v2094 = vrot.slane %v20, 5
  %v2095 = vrot.slane %v21, 5
  %v2096 = vsel %vm2093, %v2094, %v2095
  %v2097 = vrot.slane %v22, 5
  %v2098 = vsel %vm2093, %v2095, %v2097
  %v2099 = vrot.slane %v23, 5
  %v2100 = vsel %vm2093, %v2097, %v2099
  %v2101 = vrot.slane %v24, 5
  %v2102 = vsel %vm2093, %v2099, %v2101
  %v2103 = vrot.slane %v25, 5
  %v2104 = vsel %vm2093, %v2101, %v2103
  %v2105 = vrot.slane %v26, 5
  %v2106 = vsel %vm2093, %v2103, %v2105
  %v2107 = vrot.slane %v27, 5
  %v2108 = vsel %vm2093, %v2105, %v2107
  %v2109 = vrot.slane %v28, 5
  %v2110 = vsel %vm2093, %v2107, %v2109
  %v2111 = vrot.slane %v29, 5
  %v2112 = vsel %vm2093, %v2109, %v2111
  %v2113 = vrot.slane %v30, 5
  %v2114 = vsel %vm2093, %v2111, %v2113
  %v2115 = vrot.slane %v31, 5
  %v2116 = vsel %vm2093, %v2113, %v2115
  %v2117 = vrot.slane %v32, 5
  %v2118 = vsel %vm2093, %v2115, %v2117
  %v2119 = vrot.slane %v33, 5
  %v2120 = vsel %vm2093, %v2117, %v2119
  %v2121 = vrot.slane %v34, 5
  %v2122 = vsel %vm2093, %v2119, %v2121
  %v2123 = vrot.slane %v35, 5
  %v2124 = vsel %vm2093, %v2121, %v2123
  %v2125 = vrot.slane %v36, 5
  %v2126 = vsel %vm2093, %v2123, %v2125
  %v2127 = vrot.slane %v37, 5
  %v2128 = vsel %vm2093, %v2125, %v2127
  %v2129 = vrot.slane %v38, 5
  %v2130 = vsel %vm2093, %v2127, %v2129
  %v2131 = vsel %vm130, %v2096, 0
  %v2133 = vsel %vm130, %v2098, 0
  %v2135 = vsel %vm130, %v2100, 0
  %v2137 = vsel %vm130, %v2102, 0
  %v2139 = vsel %vm130, %v2104, 0
  %v2141 = vsel %vm130, %v2106, 0
  %v2143 = vsel %vm130, %v2108, 0
  %v2145 = vsel %vm130, %v2110, 0
  %v2147 = vsel %vm130, %v2112, 0
  %v2149 = vsel %vm130, %v2114, 0
  %v2151 = vsel %vm130, %v2116, 0
  %v2153 = vsel %vm130, %v2118, 0
  %v2155 = vsel %vm130, %v2120, 0
  %v2157 = vsel %vm130, %v2122, 0
  %v2159 = vsel %vm130, %v2124, 0
  %v2161 = vsel %vm130, %v2126, 0
  %v2163 = vsel %vm130, %v2128, 0
  %v2165 = vsel %vm130, %v2130, 0
  %2167 = vmatpush.msra.mxu0 0.0
  %2168 = vmatpush.msra.mxu0 0.0
  %2169 = vmatpush.msra.mxu0 0.0
  %2170 = vmatpush.msra.mxu0 0.0
  %2171 = vmatpush.msra.mxu0 0.0
  %2172 = vmatpush.msra.mxu0 0.0
  %2173 = vmatpush.msra.mxu0 0.0
  %2174 = vmatpush.msra.mxu0 0.0
  %2175 = vmatpush.msra.mxu0 0.0
  %2176 = vmatpush.msra.mxu0 0.0
  %2177 = vmatpush.msra.mxu0 0.0
  %2178 = vmatpush.msra.mxu0 0.0
  %2179 = vmatpush.msra.mxu0 0.0
  %2180 = vmatpush.msra.mxu0 0.0
  %2181 = vmatpush.msra.mxu0 %v2089
  %2182 = vmatpush.msra.mxu0 %v2085
  %2183 = vmatmul.f32.gmra.mxu0 %v2131
  %v2184 = vpop.f32.mrf.mxu0
  %v2185 = vadd.f32 0.0, %v2184
  %2186 = vmatmul.f32.gmra.mxu0 %v2133
  %v2187 = vpop.f32.mrf.mxu0
  %v2188 = vadd.f32 0.0, %v2187
  %2189 = vmatmul.f32.gmra.mxu0 %v2135
  %v2190 = vpop.f32.mrf.mxu0
  %v2191 = vadd.f32 0.0, %v2190
  %2192 = vmatmul.f32.gmra.mxu0 %v2137
  %v2193 = vpop.f32.mrf.mxu0
  %v2194 = vadd.f32 0.0, %v2193
  %2195 = vmatmul.f32.gmra.mxu0 %v2139
  %v2196 = vpop.f32.mrf.mxu0
  %v2197 = vadd.f32 0.0, %v2196
  %2198 = vmatmul.f32.gmra.mxu0 %v2141
  %v2199 = vpop.f32.mrf.mxu0
  %v2200 = vadd.f32 0.0, %v2199
  %2201 = vmatmul.f32.gmra.mxu0 %v2143
  %v2202 = vpop.f32.mrf.mxu0
  %v2203 = vadd.f32 0.0, %v2202
  %2204 = vmatmul.f32.gmra.mxu0 %v2145
  %v2205 = vpop.f32.mrf.mxu0
  %v2206 = vadd.f32 0.0, %v2205
  %2207 = vmatmul.f32.gmra.mxu0 %v2147
  %v2208 = vpop.f32.mrf.mxu0
  %v2209 = vadd.f32 0.0, %v2208
  %2210 = vmatmul.f32.gmra.mxu0 %v2149
  %v2211 = vpop.f32.mrf.mxu0
  %v2212 = vadd.f32 0.0, %v2211
  %2213 = vmatmul.f32.gmra.mxu0 %v2151
  %v2214 = vpop.f32.mrf.mxu0
  %v2215 = vadd.f32 0.0, %v2214
  %2216 = vmatmul.f32.gmra.mxu0 %v2153
  %v2217 = vpop.f32.mrf.mxu0
  %v2218 = vadd.f32 0.0, %v2217
  %2219 = vmatmul.f32.gmra.mxu0 %v2155
  %v2220 = vpop.f32.mrf.mxu0
  %v2221 = vadd.f32 0.0, %v2220
  %2222 = vmatmul.f32.gmra.mxu0 %v2157
  %v2223 = vpop.f32.mrf.mxu0
  %v2224 = vadd.f32 0.0, %v2223
  %2225 = vmatmul.f32.gmra.mxu0 %v2159
  %v2226 = vpop.f32.mrf.mxu0
  %v2227 = vadd.f32 0.0, %v2226
  %2228 = vmatmul.f32.gmra.mxu0 %v2161
  %v2229 = vpop.f32.mrf.mxu0
  %v2230 = vadd.f32 0.0, %v2229
  %2231 = vmatmul.f32.gmra.mxu0 %v2163
  %v2232 = vpop.f32.mrf.mxu0
  %v2233 = vadd.f32 0.0, %v2232
  %2234 = vmatmul.f32.gmra.mxu0 %v2165
  %v2235 = vpop.f32.mrf.mxu0
  %v2236 = vadd.f32 0.0, %v2235
  %2237 = vdwg.mxu0
  %2238 = vmatpush.msra.mxu0 0.0
  %2239 = vmatpush.msra.mxu0 0.0
  %2240 = vmatpush.msra.mxu0 0.0
  %2241 = vmatpush.msra.mxu0 0.0
  %2242 = vmatpush.msra.mxu0 0.0
  %2243 = vmatpush.msra.mxu0 0.0
  %2244 = vmatpush.msra.mxu0 0.0
  %2245 = vmatpush.msra.mxu0 0.0
  %2246 = vmatpush.msra.mxu0 0.0
  %2247 = vmatpush.msra.mxu0 0.0
  %2248 = vmatpush.msra.mxu0 0.0
  %2249 = vmatpush.msra.mxu0 0.0
  %2250 = vmatpush.msra.mxu0 0.0
  %2251 = vmatpush.msra.mxu0 0.0
  %2252 = vmatpush.msra.mxu0 %v2090
  %2253 = vmatpush.msra.mxu0 %v2086
  %2254 = vmatmul.f32.gmra.mxu0 %v2131
  %v2255 = vpop.f32.mrf.mxu0
  %v2256 = vadd.f32 0.0, %v2255
  %2257 = vmatmul.f32.gmra.mxu0 %v2133
  %v2258 = vpop.f32.mrf.mxu0
  %v2259 = vadd.f32 0.0, %v2258
  %2260 = vmatmul.f32.gmra.mxu0 %v2135
  %v2261 = vpop.f32.mrf.mxu0
  %v2262 = vadd.f32 0.0, %v2261
  %2263 = vmatmul.f32.gmra.mxu0 %v2137
  %v2264 = vpop.f32.mrf.mxu0
  %v2265 = vadd.f32 0.0, %v2264
  %2266 = vmatmul.f32.gmra.mxu0 %v2139
  %v2267 = vpop.f32.mrf.mxu0
  %v2268 = vadd.f32 0.0, %v2267
  %2269 = vmatmul.f32.gmra.mxu0 %v2141
  %v2270 = vpop.f32.mrf.mxu0
  %v2271 = vadd.f32 0.0, %v2270
  %2272 = vmatmul.f32.gmra.mxu0 %v2143
  %v2273 = vpop.f32.mrf.mxu0
  %v2274 = vadd.f32 0.0, %v2273
  %2275 = vmatmul.f32.gmra.mxu0 %v2145
  %v2276 = vpop.f32.mrf.mxu0
  %v2277 = vadd.f32 0.0, %v2276
  %2278 = vmatmul.f32.gmra.mxu0 %v2147
  %v2279 = vpop.f32.mrf.mxu0
  %v2280 = vadd.f32 0.0, %v2279
  %2281 = vmatmul.f32.gmra.mxu0 %v2149
  %v2282 = vpop.f32.mrf.mxu0
  %v2283 = vadd.f32 0.0, %v2282
  %2284 = vmatmul.f32.gmra.mxu0 %v2151
  %v2285 = vpop.f32.mrf.mxu0
  %v2286 = vadd.f32 0.0, %v2285
  %2287 = vmatmul.f32.gmra.mxu0 %v2153
  %v2288 = vpop.f32.mrf.mxu0
  %v2289 = vadd.f32 0.0, %v2288
  %2290 = vmatmul.f32.gmra.mxu0 %v2155
  %v2291 = vpop.f32.mrf.mxu0
  %v2292 = vadd.f32 0.0, %v2291
  %2293 = vmatmul.f32.gmra.mxu0 %v2157
  %v2294 = vpop.f32.mrf.mxu0
  %v2295 = vadd.f32 0.0, %v2294
  %2296 = vmatmul.f32.gmra.mxu0 %v2159
  %v2297 = vpop.f32.mrf.mxu0
  %v2298 = vadd.f32 0.0, %v2297
  %2299 = vmatmul.f32.gmra.mxu0 %v2161
  %v2300 = vpop.f32.mrf.mxu0
  %v2301 = vadd.f32 0.0, %v2300
  %2302 = vmatmul.f32.gmra.mxu0 %v2163
  %v2303 = vpop.f32.mrf.mxu0
  %v2304 = vadd.f32 0.0, %v2303
  %2305 = vmatmul.f32.gmra.mxu0 %v2165
  %v2306 = vpop.f32.mrf.mxu0
  %v2307 = vadd.f32 0.0, %v2306
  %2308 = vdwg.mxu0
  %2309 = vmatpush.msra.mxu0 0.0
  %2310 = vmatpush.msra.mxu0 0.0
  %2311 = vmatpush.msra.mxu0 0.0
  %2312 = vmatpush.msra.mxu0 0.0
  %2313 = vmatpush.msra.mxu0 0.0
  %2314 = vmatpush.msra.mxu0 0.0
  %2315 = vmatpush.msra.mxu0 0.0
  %2316 = vmatpush.msra.mxu0 0.0
  %2317 = vmatpush.msra.mxu0 0.0
  %2318 = vmatpush.msra.mxu0 0.0
  %2319 = vmatpush.msra.mxu0 0.0
  %2320 = vmatpush.msra.mxu0 0.0
  %2321 = vmatpush.msra.mxu0 0.0
  %2322 = vmatpush.msra.mxu0 0.0
  %2323 = vmatpush.msra.mxu0 %v2091
  %2324 = vmatpush.msra.mxu0 %v2087
  %2325 = vmatmul.f32.gmra.mxu0 %v2131
  %v2326 = vpop.f32.mrf.mxu0
  %v2327 = vadd.f32 0.0, %v2326
  %2328 = vmatmul.f32.gmra.mxu0 %v2133
  %v2329 = vpop.f32.mrf.mxu0
  %v2330 = vadd.f32 0.0, %v2329
  %2331 = vmatmul.f32.gmra.mxu0 %v2135
  %v2332 = vpop.f32.mrf.mxu0
  %v2333 = vadd.f32 0.0, %v2332
  %2334 = vmatmul.f32.gmra.mxu0 %v2137
  %v2335 = vpop.f32.mrf.mxu0
  %v2336 = vadd.f32 0.0, %v2335
  %2337 = vmatmul.f32.gmra.mxu0 %v2139
  %v2338 = vpop.f32.mrf.mxu0
  %v2339 = vadd.f32 0.0, %v2338
  %2340 = vmatmul.f32.gmra.mxu0 %v2141
  %v2341 = vpop.f32.mrf.mxu0
  %v2342 = vadd.f32 0.0, %v2341
  %2343 = vmatmul.f32.gmra.mxu0 %v2143
  %v2344 = vpop.f32.mrf.mxu0
  %v2345 = vadd.f32 0.0, %v2344
  %2346 = vmatmul.f32.gmra.mxu0 %v2145
  %v2347 = vpop.f32.mrf.mxu0
  %v2348 = vadd.f32 0.0, %v2347
  %2349 = vmatmul.f32.gmra.mxu0 %v2147
  %v2350 = vpop.f32.mrf.mxu0
  %v2351 = vadd.f32 0.0, %v2350
  %2352 = vmatmul.f32.gmra.mxu0 %v2149
  %v2353 = vpop.f32.mrf.mxu0
  %v2354 = vadd.f32 0.0, %v2353
  %2355 = vmatmul.f32.gmra.mxu0 %v2151
  %v2356 = vpop.f32.mrf.mxu0
  %v2357 = vadd.f32 0.0, %v2356
  %2358 = vmatmul.f32.gmra.mxu0 %v2153
  %v2359 = vpop.f32.mrf.mxu0
  %v2360 = vadd.f32 0.0, %v2359
  %2361 = vmatmul.f32.gmra.mxu0 %v2155
  %v2362 = vpop.f32.mrf.mxu0
  %v2363 = vadd.f32 0.0, %v2362
  %2364 = vmatmul.f32.gmra.mxu0 %v2157
  %v2365 = vpop.f32.mrf.mxu0
  %v2366 = vadd.f32 0.0, %v2365
  %2367 = vmatmul.f32.gmra.mxu0 %v2159
  %v2368 = vpop.f32.mrf.mxu0
  %v2369 = vadd.f32 0.0, %v2368
  %2370 = vmatmul.f32.gmra.mxu0 %v2161
  %v2371 = vpop.f32.mrf.mxu0
  %v2372 = vadd.f32 0.0, %v2371
  %2373 = vmatmul.f32.gmra.mxu0 %v2163
  %v2374 = vpop.f32.mrf.mxu0
  %v2375 = vadd.f32 0.0, %v2374
  %2376 = vmatmul.f32.gmra.mxu0 %v2165
  %v2377 = vpop.f32.mrf.mxu0
  %v2378 = vadd.f32 0.0, %v2377
  %2379 = vdwg.mxu0
  %2380 = vmatpush.msra.mxu0 0.0
  %2381 = vmatpush.msra.mxu0 0.0
  %2382 = vmatpush.msra.mxu0 0.0
  %2383 = vmatpush.msra.mxu0 0.0
  %2384 = vmatpush.msra.mxu0 0.0
  %2385 = vmatpush.msra.mxu0 0.0
  %2386 = vmatpush.msra.mxu0 0.0
  %2387 = vmatpush.msra.mxu0 0.0
  %2388 = vmatpush.msra.mxu0 0.0
  %2389 = vmatpush.msra.mxu0 0.0
  %2390 = vmatpush.msra.mxu0 0.0
  %2391 = vmatpush.msra.mxu0 0.0
  %2392 = vmatpush.msra.mxu0 0.0
  %2393 = vmatpush.msra.mxu0 0.0
  %2394 = vmatpush.msra.mxu0 %v2092
  %2395 = vmatpush.msra.mxu0 %v2088
  %2396 = vmatmul.f32.gmra.mxu0 %v2131
  %v2397 = vpop.f32.mrf.mxu0
  %v2398 = vadd.f32 0.0, %v2397
  %2399 = vmatmul.f32.gmra.mxu0 %v2133
  %v2400 = vpop.f32.mrf.mxu0
  %v2401 = vadd.f32 0.0, %v2400
  %2402 = vmatmul.f32.gmra.mxu0 %v2135
  %v2403 = vpop.f32.mrf.mxu0
  %v2404 = vadd.f32 0.0, %v2403
  %2405 = vmatmul.f32.gmra.mxu0 %v2137
  %v2406 = vpop.f32.mrf.mxu0
  %v2407 = vadd.f32 0.0, %v2406
  %2408 = vmatmul.f32.gmra.mxu0 %v2139
  %v2409 = vpop.f32.mrf.mxu0
  %v2410 = vadd.f32 0.0, %v2409
  %2411 = vmatmul.f32.gmra.mxu0 %v2141
  %v2412 = vpop.f32.mrf.mxu0
  %v2413 = vadd.f32 0.0, %v2412
  %2414 = vmatmul.f32.gmra.mxu0 %v2143
  %v2415 = vpop.f32.mrf.mxu0
  %v2416 = vadd.f32 0.0, %v2415
  %2417 = vmatmul.f32.gmra.mxu0 %v2145
  %v2418 = vpop.f32.mrf.mxu0
  %v2419 = vadd.f32 0.0, %v2418
  %2420 = vmatmul.f32.gmra.mxu0 %v2147
  %v2421 = vpop.f32.mrf.mxu0
  %v2422 = vadd.f32 0.0, %v2421
  %2423 = vmatmul.f32.gmra.mxu0 %v2149
  %v2424 = vpop.f32.mrf.mxu0
  %v2425 = vadd.f32 0.0, %v2424
  %2426 = vmatmul.f32.gmra.mxu0 %v2151
  %v2427 = vpop.f32.mrf.mxu0
  %v2428 = vadd.f32 0.0, %v2427
  %2429 = vmatmul.f32.gmra.mxu0 %v2153
  %v2430 = vpop.f32.mrf.mxu0
  %v2431 = vadd.f32 0.0, %v2430
  %2432 = vmatmul.f32.gmra.mxu0 %v2155
  %v2433 = vpop.f32.mrf.mxu0
  %v2434 = vadd.f32 0.0, %v2433
  %2435 = vmatmul.f32.gmra.mxu0 %v2157
  %v2436 = vpop.f32.mrf.mxu0
  %v2437 = vadd.f32 0.0, %v2436
  %2438 = vmatmul.f32.gmra.mxu0 %v2159
  %v2439 = vpop.f32.mrf.mxu0
  %v2440 = vadd.f32 0.0, %v2439
  %2441 = vmatmul.f32.gmra.mxu0 %v2161
  %v2442 = vpop.f32.mrf.mxu0
  %v2443 = vadd.f32 0.0, %v2442
  %2444 = vmatmul.f32.gmra.mxu0 %v2163
  %v2445 = vpop.f32.mrf.mxu0
  %v2446 = vadd.f32 0.0, %v2445
  %2447 = vmatmul.f32.gmra.mxu0 %v2165
  %v2448 = vpop.f32.mrf.mxu0
  %v2449 = vadd.f32 0.0, %v2448
  %2450 = vdwg.mxu0
  %v2451 = vadd.f32 %v2013, %v2185
  %v2452 = vadd.f32 %v2014, %v2256
  %v2453 = vadd.f32 %v2015, %v2327
  %v2454 = vadd.f32 %v2016, %v2398
  %v2455 = vadd.f32 %v2017, %v2188
  %v2456 = vadd.f32 %v2018, %v2259
  %v2457 = vadd.f32 %v2019, %v2330
  %v2458 = vadd.f32 %v2020, %v2401
  %v2459 = vadd.f32 %v2021, %v2191
  %v2460 = vadd.f32 %v2022, %v2262
  %v2461 = vadd.f32 %v2023, %v2333
  %v2462 = vadd.f32 %v2024, %v2404
  %v2463 = vadd.f32 %v2025, %v2194
  %v2464 = vadd.f32 %v2026, %v2265
  %v2465 = vadd.f32 %v2027, %v2336
  %v2466 = vadd.f32 %v2028, %v2407
  %v2467 = vadd.f32 %v2029, %v2197
  %v2468 = vadd.f32 %v2030, %v2268
  %v2469 = vadd.f32 %v2031, %v2339
  %v2470 = vadd.f32 %v2032, %v2410
  %v2471 = vadd.f32 %v2033, %v2200
  %v2472 = vadd.f32 %v2034, %v2271
  %v2473 = vadd.f32 %v2035, %v2342
  %v2474 = vadd.f32 %v2036, %v2413
  %v2475 = vadd.f32 %v2037, %v2203
  %v2476 = vadd.f32 %v2038, %v2274
  %v2477 = vadd.f32 %v2039, %v2345
  %v2478 = vadd.f32 %v2040, %v2416
  %v2479 = vadd.f32 %v2041, %v2206
  %v2480 = vadd.f32 %v2042, %v2277
  %v2481 = vadd.f32 %v2043, %v2348
  %v2482 = vadd.f32 %v2044, %v2419
  %v2483 = vadd.f32 %v2045, %v2209
  %v2484 = vadd.f32 %v2046, %v2280
  %v2485 = vadd.f32 %v2047, %v2351
  %v2486 = vadd.f32 %v2048, %v2422
  %v2487 = vadd.f32 %v2049, %v2212
  %v2488 = vadd.f32 %v2050, %v2283
  %v2489 = vadd.f32 %v2051, %v2354
  %v2490 = vadd.f32 %v2052, %v2425
  %v2491 = vadd.f32 %v2053, %v2215
  %v2492 = vadd.f32 %v2054, %v2286
  %v2493 = vadd.f32 %v2055, %v2357
  %v2494 = vadd.f32 %v2056, %v2428
  %v2495 = vadd.f32 %v2057, %v2218
  %v2496 = vadd.f32 %v2058, %v2289
  %v2497 = vadd.f32 %v2059, %v2360
  %v2498 = vadd.f32 %v2060, %v2431
  %v2499 = vadd.f32 %v2061, %v2221
  %v2500 = vadd.f32 %v2062, %v2292
  %v2501 = vadd.f32 %v2063, %v2363
  %v2502 = vadd.f32 %v2064, %v2434
  %v2503 = vadd.f32 %v2065, %v2224
  %v2504 = vadd.f32 %v2066, %v2295
  %v2505 = vadd.f32 %v2067, %v2366
  %v2506 = vadd.f32 %v2068, %v2437
  %v2507 = vadd.f32 %v2069, %v2227
  %v2508 = vadd.f32 %v2070, %v2298
  %v2509 = vadd.f32 %v2071, %v2369
  %v2510 = vadd.f32 %v2072, %v2440
  %v2511 = vadd.f32 %v2073, %v2230
  %v2512 = vadd.f32 %v2074, %v2301
  %v2513 = vadd.f32 %v2075, %v2372
  %v2514 = vadd.f32 %v2076, %v2443
  %v2515 = vadd.f32 %v2077, %v2233
  %v2516 = vadd.f32 %v2078, %v2304
  %v2517 = vadd.f32 %v2079, %v2375
  %v2518 = vadd.f32 %v2080, %v2446
  %v2519 = vadd.f32 %v2081, %v2236
  %v2520 = vadd.f32 %v2082, %v2307
  %v2521 = vadd.f32 %v2083, %v2378
  %v2522 = vadd.f32 %v2084, %v2449
  %vm2523 = vcmp.lt.s32.totalorder %v39, 60
  %vm2524 = vcmp.lt.s32.totalorder %v40, 60
  %vm2525 = vcmp.lt.s32.totalorder %v41, 60
  %vm2526 = vcmp.lt.s32.totalorder %v42, 60
  %vm2527 = vcmp.lt.s32.totalorder %v43, 60
  %vm2528 = vcmp.lt.s32.totalorder %v44, 60
  %vm2529 = vcmp.lt.s32.totalorder %v45, 60
  %vm2530 = vcmp.lt.s32.totalorder %v46, 60
  %vm2531 = vcmp.lt.s32.totalorder %v47, 60
  %vm2532 = vcmp.lt.s32.totalorder %v48, 60
  %vm2533 = vcmp.lt.s32.totalorder %v49, 60
  %vm2534 = vcmp.lt.s32.totalorder %v50, 60
  %vm2535 = vcmp.lt.s32.totalorder %v51, 60
  %vm2536 = vcmp.lt.s32.totalorder %v52, 60
  %vm2537 = vcmp.lt.s32.totalorder %v53, 60
  %vm2538 = vcmp.lt.s32.totalorder %v54, 60
  %vm2539 = vcmp.lt.s32.totalorder %v55, 60
  %vm2540 = vcmp.lt.s32.totalorder %v56, 60
  %v2541 = vsel %vm2523, 1, 0
  %v2542 = vsel %vm2524, 1, 0
  %v2543 = vsel %vm2525, 1, 0
  %v2544 = vsel %vm2526, 1, 0
  %v2545 = vsel %vm2527, 1, 0
  %v2546 = vsel %vm2528, 1, 0
  %v2547 = vsel %vm2529, 1, 0
  %v2548 = vsel %vm2530, 1, 0
  %v2549 = vsel %vm2531, 1, 0
  %v2550 = vsel %vm2532, 1, 0
  %v2551 = vsel %vm2533, 1, 0
  %v2552 = vsel %vm2534, 1, 0
  %v2553 = vsel %vm2535, 1, 0
  %v2554 = vsel %vm2536, 1, 0
  %v2555 = vsel %vm2537, 1, 0
  %v2556 = vsel %vm2538, 1, 0
  %v2557 = vsel %vm2539, 1, 0
  %v2558 = vsel %vm2540, 1, 0
  %v2559 = vcvt.s32.f32 %v2541
  %v2560 = vcvt.s32.f32 %v2542
  %v2561 = vcvt.s32.f32 %v2543
  %v2562 = vcvt.s32.f32 %v2544
  %v2563 = vcvt.s32.f32 %v2545
  %v2564 = vcvt.s32.f32 %v2546
  %v2565 = vcvt.s32.f32 %v2547
  %v2566 = vcvt.s32.f32 %v2548
  %v2567 = vcvt.s32.f32 %v2549
  %v2568 = vcvt.s32.f32 %v2550
  %v2569 = vcvt.s32.f32 %v2551
  %v2570 = vcvt.s32.f32 %v2552
  %v2571 = vcvt.s32.f32 %v2553
  %v2572 = vcvt.s32.f32 %v2554
  %v2573 = vcvt.s32.f32 %v2555
  %v2574 = vcvt.s32.f32 %v2556
  %v2575 = vcvt.s32.f32 %v2557
  %v2576 = vcvt.s32.f32 %v2558
  %2578 = vset.pattern.permute.xlu0 0
  %2579 = vperm.xlu0 %2578, %v2559
  %v2580 = vpop.permute.xlu0 %2579
  %2583 = vset.pattern.permute.xlu0 0
  %2584 = vperm.xlu0 %2583, %v2560
  %v2585 = vpop.permute.xlu0 %2584
  %2588 = vset.pattern.permute.xlu0 0
  %2589 = vperm.xlu0 %2588, %v2561
  %v2590 = vpop.permute.xlu0 %2589
  %2593 = vset.pattern.permute.xlu0 0
  %2594 = vperm.xlu0 %2593, %v2562
  %v2595 = vpop.permute.xlu0 %2594
  %2598 = vset.pattern.permute.xlu0 0
  %2599 = vperm.xlu0 %2598, %v2563
  %v2600 = vpop.permute.xlu0 %2599
  %2603 = vset.pattern.permute.xlu0 0
  %2604 = vperm.xlu0 %2603, %v2564
  %v2605 = vpop.permute.xlu0 %2604
  %2608 = vset.pattern.permute.xlu0 0
  %2609 = vperm.xlu0 %2608, %v2565
  %v2610 = vpop.permute.xlu0 %2609
  %2613 = vset.pattern.permute.xlu0 0
  %2614 = vperm.xlu0 %2613, %v2566
  %v2615 = vpop.permute.xlu0 %2614
  %2618 = vset.pattern.permute.xlu0 0
  %2619 = vperm.xlu0 %2618, %v2567
  %v2620 = vpop.permute.xlu0 %2619
  %2623 = vset.pattern.permute.xlu0 0
  %2624 = vperm.xlu0 %2623, %v2568
  %v2625 = vpop.permute.xlu0 %2624
  %2628 = vset.pattern.permute.xlu0 0
  %2629 = vperm.xlu0 %2628, %v2569
  %v2630 = vpop.permute.xlu0 %2629
  %2633 = vset.pattern.permute.xlu0 0
  %2634 = vperm.xlu0 %2633, %v2570
  %v2635 = vpop.permute.xlu0 %2634
  %2638 = vset.pattern.permute.xlu0 0
  %2639 = vperm.xlu0 %2638, %v2571
  %v2640 = vpop.permute.xlu0 %2639
  %2643 = vset.pattern.permute.xlu0 0
  %2644 = vperm.xlu0 %2643, %v2572
  %v2645 = vpop.permute.xlu0 %2644
  %2648 = vset.pattern.permute.xlu0 0
  %2649 = vperm.xlu0 %2648, %v2573
  %v2650 = vpop.permute.xlu0 %2649
  %2653 = vset.pattern.permute.xlu0 0
  %2654 = vperm.xlu0 %2653, %v2574
  %v2655 = vpop.permute.xlu0 %2654
  %2658 = vset.pattern.permute.xlu0 0
  %2659 = vperm.xlu0 %2658, %v2575
  %v2660 = vpop.permute.xlu0 %2659
  %2663 = vset.pattern.permute.xlu0 0
  %2664 = vperm.xlu0 %2663, %v2576
  %v2665 = vpop.permute.xlu0 %2664
  %v2667 = vmul.f32 %v2451, %v2580
  %v2668 = vmul.f32 %v2455, %v2585
  %v2669 = vmul.f32 %v2459, %v2590
  %v2670 = vmul.f32 %v2463, %v2595
  %v2671 = vmul.f32 %v2467, %v2600
  %v2672 = vmul.f32 %v2471, %v2605
  %v2673 = vmul.f32 %v2475, %v2610
  %v2674 = vmul.f32 %v2479, %v2615
  %v2675 = vmul.f32 %v2483, %v2620
  %v2676 = vmul.f32 %v2487, %v2625
  %v2677 = vmul.f32 %v2491, %v2630
  %v2678 = vmul.f32 %v2495, %v2635
  %v2679 = vmul.f32 %v2499, %v2640
  %v2680 = vmul.f32 %v2503, %v2645
  %v2681 = vmul.f32 %v2507, %v2650
  %v2682 = vmul.f32 %v2511, %v2655
  %v2683 = vmul.f32 %v2515, %v2660
  %v2684 = vmul.f32 %v2519, %v2665
  %v2685 = vadd.f32 %v2667, %v2668
  %v2686 = vadd.f32 %v2685, %v2669
  %v2687 = vadd.f32 %v2686, %v2670
  %v2688 = vadd.f32 %v2687, %v2671
  %v2689 = vadd.f32 %v2688, %v2672
  %v2690 = vadd.f32 %v2689, %v2673
  %v2691 = vadd.f32 %v2690, %v2674
  %v2692 = vadd.f32 %v2691, %v2675
  %v2693 = vadd.f32 %v2692, %v2676
  %v2694 = vadd.f32 %v2693, %v2677
  %v2695 = vadd.f32 %v2694, %v2678
  %v2696 = vadd.f32 %v2695, %v2679
  %v2697 = vadd.f32 %v2696, %v2680
  %v2698 = vadd.f32 %v2697, %v2681
  %v2699 = vadd.f32 %v2698, %v2682
  %v2700 = vadd.f32 %v2699, %v2683
  %v2701 = vadd.f32 %v2700, %v2684
  %v2702 = vrot.slane %v2701, 4
  %v2703 = vadd.f32 %v2701, %v2702
  %v2704 = vrot.slane %v2703, 2
  %v2705 = vadd.f32 %v2703, %v2704
  %v2706 = vrot.slane %v2705, 1
  %v2707 = vadd.f32 %v2705, %v2706
  %v2708 = vmul.f32 %v2667, %v2451
  %v2709 = vmul.f32 %v2668, %v2455
  %v2710 = vmul.f32 %v2669, %v2459
  %v2711 = vmul.f32 %v2670, %v2463
  %v2712 = vmul.f32 %v2671, %v2467
  %v2713 = vmul.f32 %v2672, %v2471
  %v2714 = vmul.f32 %v2673, %v2475
  %v2715 = vmul.f32 %v2674, %v2479
  %v2716 = vmul.f32 %v2675, %v2483
  %v2717 = vmul.f32 %v2676, %v2487
  %v2718 = vmul.f32 %v2677, %v2491
  %v2719 = vmul.f32 %v2678, %v2495
  %v2720 = vmul.f32 %v2679, %v2499
  %v2721 = vmul.f32 %v2680, %v2503
  %v2722 = vmul.f32 %v2681, %v2507
  %v2723 = vmul.f32 %v2682, %v2511
  %v2724 = vmul.f32 %v2683, %v2515
  %v2725 = vmul.f32 %v2684, %v2519
  %v2726 = vadd.f32 %v2708, %v2709
  %v2727 = vadd.f32 %v2726, %v2710
  %v2728 = vadd.f32 %v2727, %v2711
  %v2729 = vadd.f32 %v2728, %v2712
  %v2730 = vadd.f32 %v2729, %v2713
  %v2731 = vadd.f32 %v2730, %v2714
  %v2732 = vadd.f32 %v2731, %v2715
  %v2733 = vadd.f32 %v2732, %v2716
  %v2734 = vadd.f32 %v2733, %v2717
  %v2735 = vadd.f32 %v2734, %v2718
  %v2736 = vadd.f32 %v2735, %v2719
  %v2737 = vadd.f32 %v2736, %v2720
  %v2738 = vadd.f32 %v2737, %v2721
  %v2739 = vadd.f32 %v2738, %v2722
  %v2740 = vadd.f32 %v2739, %v2723
  %v2741 = vadd.f32 %v2740, %v2724
  %v2742 = vadd.f32 %v2741, %v2725
  %v2743 = vrot.slane %v2742, 4
  %v2744 = vadd.f32 %v2742, %v2743
  %v2745 = vrot.slane %v2744, 2
  %v2746 = vadd.f32 %v2744, %v2745
  %v2747 = vrot.slane %v2746, 1
  %v2748 = vadd.f32 %v2746, %v2747
  %vm2749 = vcmp.lt.s32.totalorder %v39, 59
  %vm2750 = vcmp.lt.s32.totalorder %v40, 59
  %vm2751 = vcmp.lt.s32.totalorder %v41, 59
  %vm2752 = vcmp.lt.s32.totalorder %v42, 59
  %vm2753 = vcmp.lt.s32.totalorder %v43, 59
  %vm2754 = vcmp.lt.s32.totalorder %v44, 59
  %vm2755 = vcmp.lt.s32.totalorder %v45, 59
  %vm2756 = vcmp.lt.s32.totalorder %v46, 59
  %vm2757 = vcmp.lt.s32.totalorder %v47, 59
  %vm2758 = vcmp.lt.s32.totalorder %v48, 59
  %vm2759 = vcmp.lt.s32.totalorder %v49, 59
  %vm2760 = vcmp.lt.s32.totalorder %v50, 59
  %vm2761 = vcmp.lt.s32.totalorder %v51, 59
  %vm2762 = vcmp.lt.s32.totalorder %v52, 59
  %vm2763 = vcmp.lt.s32.totalorder %v53, 59
  %vm2764 = vcmp.lt.s32.totalorder %v54, 59
  %vm2765 = vcmp.lt.s32.totalorder %v55, 59
  %vm2766 = vcmp.lt.s32.totalorder %v56, 59
  %v2767 = vsel %vm2749, 1, 0
  %v2768 = vsel %vm2750, 1, 0
  %v2769 = vsel %vm2751, 1, 0
  %v2770 = vsel %vm2752, 1, 0
  %v2771 = vsel %vm2753, 1, 0
  %v2772 = vsel %vm2754, 1, 0
  %v2773 = vsel %vm2755, 1, 0
  %v2774 = vsel %vm2756, 1, 0
  %v2775 = vsel %vm2757, 1, 0
  %v2776 = vsel %vm2758, 1, 0
  %v2777 = vsel %vm2759, 1, 0
  %v2778 = vsel %vm2760, 1, 0
  %v2779 = vsel %vm2761, 1, 0
  %v2780 = vsel %vm2762, 1, 0
  %v2781 = vsel %vm2763, 1, 0
  %v2782 = vsel %vm2764, 1, 0
  %v2783 = vsel %vm2765, 1, 0
  %v2784 = vsel %vm2766, 1, 0
  %v2785 = vcvt.s32.f32 %v2767
  %v2786 = vcvt.s32.f32 %v2768
  %v2787 = vcvt.s32.f32 %v2769
  %v2788 = vcvt.s32.f32 %v2770
  %v2789 = vcvt.s32.f32 %v2771
  %v2790 = vcvt.s32.f32 %v2772
  %v2791 = vcvt.s32.f32 %v2773
  %v2792 = vcvt.s32.f32 %v2774
  %v2793 = vcvt.s32.f32 %v2775
  %v2794 = vcvt.s32.f32 %v2776
  %v2795 = vcvt.s32.f32 %v2777
  %v2796 = vcvt.s32.f32 %v2778
  %v2797 = vcvt.s32.f32 %v2779
  %v2798 = vcvt.s32.f32 %v2780
  %v2799 = vcvt.s32.f32 %v2781
  %v2800 = vcvt.s32.f32 %v2782
  %v2801 = vcvt.s32.f32 %v2783
  %v2802 = vcvt.s32.f32 %v2784
  %2804 = vset.pattern.permute.xlu0 0
  %2805 = vperm.xlu0 %2804, %v2785
  %v2806 = vpop.permute.xlu0 %2805
  %2809 = vset.pattern.permute.xlu0 0
  %2810 = vperm.xlu0 %2809, %v2786
  %v2811 = vpop.permute.xlu0 %2810
  %2814 = vset.pattern.permute.xlu0 0
  %2815 = vperm.xlu0 %2814, %v2787
  %v2816 = vpop.permute.xlu0 %2815
  %2819 = vset.pattern.permute.xlu0 0
  %2820 = vperm.xlu0 %2819, %v2788
  %v2821 = vpop.permute.xlu0 %2820
  %2824 = vset.pattern.permute.xlu0 0
  %2825 = vperm.xlu0 %2824, %v2789
  %v2826 = vpop.permute.xlu0 %2825
  %2829 = vset.pattern.permute.xlu0 0
  %2830 = vperm.xlu0 %2829, %v2790
  %v2831 = vpop.permute.xlu0 %2830
  %2834 = vset.pattern.permute.xlu0 0
  %2835 = vperm.xlu0 %2834, %v2791
  %v2836 = vpop.permute.xlu0 %2835
  %2839 = vset.pattern.permute.xlu0 0
  %2840 = vperm.xlu0 %2839, %v2792
  %v2841 = vpop.permute.xlu0 %2840
  %2844 = vset.pattern.permute.xlu0 0
  %2845 = vperm.xlu0 %2844, %v2793
  %v2846 = vpop.permute.xlu0 %2845
  %2849 = vset.pattern.permute.xlu0 0
  %2850 = vperm.xlu0 %2849, %v2794
  %v2851 = vpop.permute.xlu0 %2850
  %2854 = vset.pattern.permute.xlu0 0
  %2855 = vperm.xlu0 %2854, %v2795
  %v2856 = vpop.permute.xlu0 %2855
  %2859 = vset.pattern.permute.xlu0 0
  %2860 = vperm.xlu0 %2859, %v2796
  %v2861 = vpop.permute.xlu0 %2860
  %2864 = vset.pattern.permute.xlu0 0
  %2865 = vperm.xlu0 %2864, %v2797
  %v2866 = vpop.permute.xlu0 %2865
  %2869 = vset.pattern.permute.xlu0 0
  %2870 = vperm.xlu0 %2869, %v2798
  %v2871 = vpop.permute.xlu0 %2870
  %2874 = vset.pattern.permute.xlu0 0
  %2875 = vperm.xlu0 %2874, %v2799
  %v2876 = vpop.permute.xlu0 %2875
  %2879 = vset.pattern.permute.xlu0 0
  %2880 = vperm.xlu0 %2879, %v2800
  %v2881 = vpop.permute.xlu0 %2880
  %2884 = vset.pattern.permute.xlu0 0
  %2885 = vperm.xlu0 %2884, %v2801
  %v2886 = vpop.permute.xlu0 %2885
  %2889 = vset.pattern.permute.xlu0 0
  %2890 = vperm.xlu0 %2889, %v2802
  %v2891 = vpop.permute.xlu0 %2890
  %v2893 = vmul.f32 %v2452, %v2806
  %v2894 = vmul.f32 %v2456, %v2811
  %v2895 = vmul.f32 %v2460, %v2816
  %v2896 = vmul.f32 %v2464, %v2821
  %v2897 = vmul.f32 %v2468, %v2826
  %v2898 = vmul.f32 %v2472, %v2831
  %v2899 = vmul.f32 %v2476, %v2836
  %v2900 = vmul.f32 %v2480, %v2841
  %v2901 = vmul.f32 %v2484, %v2846
  %v2902 = vmul.f32 %v2488, %v2851
  %v2903 = vmul.f32 %v2492, %v2856
  %v2904 = vmul.f32 %v2496, %v2861
  %v2905 = vmul.f32 %v2500, %v2866
  %v2906 = vmul.f32 %v2504, %v2871
  %v2907 = vmul.f32 %v2508, %v2876
  %v2908 = vmul.f32 %v2512, %v2881
  %v2909 = vmul.f32 %v2516, %v2886
  %v2910 = vmul.f32 %v2520, %v2891
  %v2911 = vadd.f32 %v2893, %v2894
  %v2912 = vadd.f32 %v2911, %v2895
  %v2913 = vadd.f32 %v2912, %v2896
  %v2914 = vadd.f32 %v2913, %v2897
  %v2915 = vadd.f32 %v2914, %v2898
  %v2916 = vadd.f32 %v2915, %v2899
  %v2917 = vadd.f32 %v2916, %v2900
  %v2918 = vadd.f32 %v2917, %v2901
  %v2919 = vadd.f32 %v2918, %v2902
  %v2920 = vadd.f32 %v2919, %v2903
  %v2921 = vadd.f32 %v2920, %v2904
  %v2922 = vadd.f32 %v2921, %v2905
  %v2923 = vadd.f32 %v2922, %v2906
  %v2924 = vadd.f32 %v2923, %v2907
  %v2925 = vadd.f32 %v2924, %v2908
  %v2926 = vadd.f32 %v2925, %v2909
  %v2927 = vadd.f32 %v2926, %v2910
  %v2928 = vrot.slane %v2927, 4
  %v2929 = vadd.f32 %v2927, %v2928
  %v2930 = vrot.slane %v2929, 2
  %v2931 = vadd.f32 %v2929, %v2930
  %v2932 = vrot.slane %v2931, 1
  %v2933 = vadd.f32 %v2931, %v2932
  %v2934 = vmul.f32 %v2893, %v2452
  %v2935 = vmul.f32 %v2894, %v2456
  %v2936 = vmul.f32 %v2895, %v2460
  %v2937 = vmul.f32 %v2896, %v2464
  %v2938 = vmul.f32 %v2897, %v2468
  %v2939 = vmul.f32 %v2898, %v2472
  %v2940 = vmul.f32 %v2899, %v2476
  %v2941 = vmul.f32 %v2900, %v2480
  %v2942 = vmul.f32 %v2901, %v2484
  %v2943 = vmul.f32 %v2902, %v2488
  %v2944 = vmul.f32 %v2903, %v2492
  %v2945 = vmul.f32 %v2904, %v2496
  %v2946 = vmul.f32 %v2905, %v2500
  %v2947 = vmul.f32 %v2906, %v2504
  %v2948 = vmul.f32 %v2907, %v2508
  %v2949 = vmul.f32 %v2908, %v2512
  %v2950 = vmul.f32 %v2909, %v2516
  %v2951 = vmul.f32 %v2910, %v2520
  %v2952 = vadd.f32 %v2934, %v2935
  %v2953 = vadd.f32 %v2952, %v2936
  %v2954 = vadd.f32 %v2953, %v2937
  %v2955 = vadd.f32 %v2954, %v2938
  %v2956 = vadd.f32 %v2955, %v2939
  %v2957 = vadd.f32 %v2956, %v2940
  %v2958 = vadd.f32 %v2957, %v2941
  %v2959 = vadd.f32 %v2958, %v2942
  %v2960 = vadd.f32 %v2959, %v2943
  %v2961 = vadd.f32 %v2960, %v2944
  %v2962 = vadd.f32 %v2961, %v2945
  %v2963 = vadd.f32 %v2962, %v2946
  %v2964 = vadd.f32 %v2963, %v2947
  %v2965 = vadd.f32 %v2964, %v2948
  %v2966 = vadd.f32 %v2965, %v2949
  %v2967 = vadd.f32 %v2966, %v2950
  %v2968 = vadd.f32 %v2967, %v2951
  %v2969 = vrot.slane %v2968, 4
  %v2970 = vadd.f32 %v2968, %v2969
  %v2971 = vrot.slane %v2970, 2
  %v2972 = vadd.f32 %v2970, %v2971
  %v2973 = vrot.slane %v2972, 1
  %v2974 = vadd.f32 %v2972, %v2973
  %v2975 = vadd.f32 %v2707, %v2933
  %v2976 = vadd.f32 %v2748, %v2974
  %v2977 = vmul.f32 %v2453, %v2806
  %v2978 = vmul.f32 %v2457, %v2811
  %v2979 = vmul.f32 %v2461, %v2816
  %v2980 = vmul.f32 %v2465, %v2821
  %v2981 = vmul.f32 %v2469, %v2826
  %v2982 = vmul.f32 %v2473, %v2831
  %v2983 = vmul.f32 %v2477, %v2836
  %v2984 = vmul.f32 %v2481, %v2841
  %v2985 = vmul.f32 %v2485, %v2846
  %v2986 = vmul.f32 %v2489, %v2851
  %v2987 = vmul.f32 %v2493, %v2856
  %v2988 = vmul.f32 %v2497, %v2861
  %v2989 = vmul.f32 %v2501, %v2866
  %v2990 = vmul.f32 %v2505, %v2871
  %v2991 = vmul.f32 %v2509, %v2876
  %v2992 = vmul.f32 %v2513, %v2881
  %v2993 = vmul.f32 %v2517, %v2886
  %v2994 = vmul.f32 %v2521, %v2891
  %v2995 = vadd.f32 %v2977, %v2978
  %v2996 = vadd.f32 %v2995, %v2979
  %v2997 = vadd.f32 %v2996, %v2980
  %v2998 = vadd.f32 %v2997, %v2981
  %v2999 = vadd.f32 %v2998, %v2982
  %v3000 = vadd.f32 %v2999, %v2983
  %v3001 = vadd.f32 %v3000, %v2984
  %v3002 = vadd.f32 %v3001, %v2985
  %v3003 = vadd.f32 %v3002, %v2986
  %v3004 = vadd.f32 %v3003, %v2987
  %v3005 = vadd.f32 %v3004, %v2988
  %v3006 = vadd.f32 %v3005, %v2989
  %v3007 = vadd.f32 %v3006, %v2990
  %v3008 = vadd.f32 %v3007, %v2991
  %v3009 = vadd.f32 %v3008, %v2992
  %v3010 = vadd.f32 %v3009, %v2993
  %v3011 = vadd.f32 %v3010, %v2994
  %v3012 = vrot.slane %v3011, 4
  %v3013 = vadd.f32 %v3011, %v3012
  %v3014 = vrot.slane %v3013, 2
  %v3015 = vadd.f32 %v3013, %v3014
  %v3016 = vrot.slane %v3015, 1
  %v3017 = vadd.f32 %v3015, %v3016
  %v3018 = vmul.f32 %v2977, %v2453
  %v3019 = vmul.f32 %v2978, %v2457
  %v3020 = vmul.f32 %v2979, %v2461
  %v3021 = vmul.f32 %v2980, %v2465
  %v3022 = vmul.f32 %v2981, %v2469
  %v3023 = vmul.f32 %v2982, %v2473
  %v3024 = vmul.f32 %v2983, %v2477
  %v3025 = vmul.f32 %v2984, %v2481
  %v3026 = vmul.f32 %v2985, %v2485
  %v3027 = vmul.f32 %v2986, %v2489
  %v3028 = vmul.f32 %v2987, %v2493
  %v3029 = vmul.f32 %v2988, %v2497
  %v3030 = vmul.f32 %v2989, %v2501
  %v3031 = vmul.f32 %v2990, %v2505
  %v3032 = vmul.f32 %v2991, %v2509
  %v3033 = vmul.f32 %v2992, %v2513
  %v3034 = vmul.f32 %v2993, %v2517
  %v3035 = vmul.f32 %v2994, %v2521
  %v3036 = vadd.f32 %v3018, %v3019
  %v3037 = vadd.f32 %v3036, %v3020
  %v3038 = vadd.f32 %v3037, %v3021
  %v3039 = vadd.f32 %v3038, %v3022
  %v3040 = vadd.f32 %v3039, %v3023
  %v3041 = vadd.f32 %v3040, %v3024
  %v3042 = vadd.f32 %v3041, %v3025
  %v3043 = vadd.f32 %v3042, %v3026
  %v3044 = vadd.f32 %v3043, %v3027
  %v3045 = vadd.f32 %v3044, %v3028
  %v3046 = vadd.f32 %v3045, %v3029
  %v3047 = vadd.f32 %v3046, %v3030
  %v3048 = vadd.f32 %v3047, %v3031
  %v3049 = vadd.f32 %v3048, %v3032
  %v3050 = vadd.f32 %v3049, %v3033
  %v3051 = vadd.f32 %v3050, %v3034
  %v3052 = vadd.f32 %v3051, %v3035
  %v3053 = vrot.slane %v3052, 4
  %v3054 = vadd.f32 %v3052, %v3053
  %v3055 = vrot.slane %v3054, 2
  %v3056 = vadd.f32 %v3054, %v3055
  %v3057 = vrot.slane %v3056, 1
  %v3058 = vadd.f32 %v3056, %v3057
  %v3059 = vadd.f32 %v2975, %v3017
  %v3060 = vadd.f32 %v2976, %v3058
  %v3061 = vmul.f32 %v2454, %v2806
  %v3062 = vmul.f32 %v2458, %v2811
  %v3063 = vmul.f32 %v2462, %v2816
  %v3064 = vmul.f32 %v2466, %v2821
  %v3065 = vmul.f32 %v2470, %v2826
  %v3066 = vmul.f32 %v2474, %v2831
  %v3067 = vmul.f32 %v2478, %v2836
  %v3068 = vmul.f32 %v2482, %v2841
  %v3069 = vmul.f32 %v2486, %v2846
  %v3070 = vmul.f32 %v2490, %v2851
  %v3071 = vmul.f32 %v2494, %v2856
  %v3072 = vmul.f32 %v2498, %v2861
  %v3073 = vmul.f32 %v2502, %v2866
  %v3074 = vmul.f32 %v2506, %v2871
  %v3075 = vmul.f32 %v2510, %v2876
  %v3076 = vmul.f32 %v2514, %v2881
  %v3077 = vmul.f32 %v2518, %v2886
  %v3078 = vmul.f32 %v2522, %v2891
  %v3079 = vadd.f32 %v3061, %v3062
  %v3080 = vadd.f32 %v3079, %v3063
  %v3081 = vadd.f32 %v3080, %v3064
  %v3082 = vadd.f32 %v3081, %v3065
  %v3083 = vadd.f32 %v3082, %v3066
  %v3084 = vadd.f32 %v3083, %v3067
  %v3085 = vadd.f32 %v3084, %v3068
  %v3086 = vadd.f32 %v3085, %v3069
  %v3087 = vadd.f32 %v3086, %v3070
  %v3088 = vadd.f32 %v3087, %v3071
  %v3089 = vadd.f32 %v3088, %v3072
  %v3090 = vadd.f32 %v3089, %v3073
  %v3091 = vadd.f32 %v3090, %v3074
  %v3092 = vadd.f32 %v3091, %v3075
  %v3093 = vadd.f32 %v3092, %v3076
  %v3094 = vadd.f32 %v3093, %v3077
  %v3095 = vadd.f32 %v3094, %v3078
  %v3096 = vrot.slane %v3095, 4
  %v3097 = vadd.f32 %v3095, %v3096
  %v3098 = vrot.slane %v3097, 2
  %v3099 = vadd.f32 %v3097, %v3098
  %v3100 = vrot.slane %v3099, 1
  %v3101 = vadd.f32 %v3099, %v3100
  %v3102 = vmul.f32 %v3061, %v2454
  %v3103 = vmul.f32 %v3062, %v2458
  %v3104 = vmul.f32 %v3063, %v2462
  %v3105 = vmul.f32 %v3064, %v2466
  %v3106 = vmul.f32 %v3065, %v2470
  %v3107 = vmul.f32 %v3066, %v2474
  %v3108 = vmul.f32 %v3067, %v2478
  %v3109 = vmul.f32 %v3068, %v2482
  %v3110 = vmul.f32 %v3069, %v2486
  %v3111 = vmul.f32 %v3070, %v2490
  %v3112 = vmul.f32 %v3071, %v2494
  %v3113 = vmul.f32 %v3072, %v2498
  %v3114 = vmul.f32 %v3073, %v2502
  %v3115 = vmul.f32 %v3074, %v2506
  %v3116 = vmul.f32 %v3075, %v2510
  %v3117 = vmul.f32 %v3076, %v2514
  %v3118 = vmul.f32 %v3077, %v2518
  %v3119 = vmul.f32 %v3078, %v2522
  %v3120 = vadd.f32 %v3102, %v3103
  %v3121 = vadd.f32 %v3120, %v3104
  %v3122 = vadd.f32 %v3121, %v3105
  %v3123 = vadd.f32 %v3122, %v3106
  %v3124 = vadd.f32 %v3123, %v3107
  %v3125 = vadd.f32 %v3124, %v3108
  %v3126 = vadd.f32 %v3125, %v3109
  %v3127 = vadd.f32 %v3126, %v3110
  %v3128 = vadd.f32 %v3127, %v3111
  %v3129 = vadd.f32 %v3128, %v3112
  %v3130 = vadd.f32 %v3129, %v3113
  %v3131 = vadd.f32 %v3130, %v3114
  %v3132 = vadd.f32 %v3131, %v3115
  %v3133 = vadd.f32 %v3132, %v3116
  %v3134 = vadd.f32 %v3133, %v3117
  %v3135 = vadd.f32 %v3134, %v3118
  %v3136 = vadd.f32 %v3135, %v3119
  %v3137 = vrot.slane %v3136, 4
  %v3138 = vadd.f32 %v3136, %v3137
  %v3139 = vrot.slane %v3138, 2
  %v3140 = vadd.f32 %v3138, %v3139
  %v3141 = vrot.slane %v3140, 1
  %v3142 = vadd.f32 %v3140, %v3141
  %v3143 = vadd.f32 %v3059, %v3101
  %v3144 = vadd.f32 %v3060, %v3142
  %v3145 = vmul.f32 %v3143, 0.0021097045
  %v3146 = vmul.f32 %v3144, 0.0021097045
  %v3147 = vmul.f32 %v3145, %v3145
  %v3148 = vsub.f32 %v3146, %v3147
  %v3149 = vld [vmem:[%s3] sm:$0x1]
  %v3150 = vadd.f32 %v3148, 1e-05
  %v3151 = vrsqrt.pop %v3150
  %v3152 = vmul.f32 %v3151, %v3150
  %v3153 = vmul.f32 %v3152, %v3151
  %v3154 = vmul.f32 0.5, %v3153
  %v3155 = vsub.f32 1.5, %v3154
  %v3156 = vmul.f32 %v3151, %v3155
  %vm3157 = vweird.f32 %v3150
  %vm3158 = vweird.f32 %v3151
  %vm3159 = vmor %vm3157, %vm3158
  %v3160 = vsel %vm3159, %v3151, %v3156
  %v3161 = vmul.f32 %v3149, %v3160
  %v3162 = vld [vmem:[%s4] sm:$0x1]
  %v3163 = vmul.f32 %v3145, %v3161
  %v3164 = vsub.f32 %v3162, %v3163
  %v3166 = vperm.slane %v3161, 0
  %v3168 = vmul.f32 %v2451, %v3166
  %v3169 = vmul.f32 %v2455, %v3166
  %v3170 = vmul.f32 %v2459, %v3166
  %v3171 = vmul.f32 %v2463, %v3166
  %v3172 = vmul.f32 %v2467, %v3166
  %v3173 = vmul.f32 %v2471, %v3166
  %v3174 = vmul.f32 %v2475, %v3166
  %v3175 = vmul.f32 %v2479, %v3166
  %v3176 = vmul.f32 %v2483, %v3166
  %v3177 = vmul.f32 %v2487, %v3166
  %v3178 = vmul.f32 %v2491, %v3166
  %v3179 = vmul.f32 %v2495, %v3166
  %v3180 = vmul.f32 %v2499, %v3166
  %v3181 = vmul.f32 %v2503, %v3166
  %v3182 = vmul.f32 %v2507, %v3166
  %v3183 = vmul.f32 %v2511, %v3166
  %v3184 = vmul.f32 %v2515, %v3166
  %v3185 = vmul.f32 %v2519, %v3166
  %v3187 = vperm.slane %v3164, 0
  %v3189 = vadd.f32 %v3168, %v3187
  %v3190 = vadd.f32 %v3169, %v3187
  %v3191 = vadd.f32 %v3170, %v3187
  %v3192 = vadd.f32 %v3171, %v3187
  %v3193 = vadd.f32 %v3172, %v3187
  %v3194 = vadd.f32 %v3173, %v3187
  %v3195 = vadd.f32 %v3174, %v3187
  %v3196 = vadd.f32 %v3175, %v3187
  %v3197 = vadd.f32 %v3176, %v3187
  %v3198 = vadd.f32 %v3177, %v3187
  %v3199 = vadd.f32 %v3178, %v3187
  %v3200 = vadd.f32 %v3179, %v3187
  %v3201 = vadd.f32 %v3180, %v3187
  %v3202 = vadd.f32 %v3181, %v3187
  %v3203 = vadd.f32 %v3182, %v3187
  %v3204 = vadd.f32 %v3183, %v3187
  %v3205 = vadd.f32 %v3184, %v3187
  %v3206 = vadd.f32 %v3185, %v3187
  %v3207 = vmul.f32 %v2452, %v3166
  %v3208 = vmul.f32 %v2456, %v3166
  %v3209 = vmul.f32 %v2460, %v3166
  %v3210 = vmul.f32 %v2464, %v3166
  %v3211 = vmul.f32 %v2468, %v3166
  %v3212 = vmul.f32 %v2472, %v3166
  %v3213 = vmul.f32 %v2476, %v3166
  %v3214 = vmul.f32 %v2480, %v3166
  %v3215 = vmul.f32 %v2484, %v3166
  %v3216 = vmul.f32 %v2488, %v3166
  %v3217 = vmul.f32 %v2492, %v3166
  %v3218 = vmul.f32 %v2496, %v3166
  %v3219 = vmul.f32 %v2500, %v3166
  %v3220 = vmul.f32 %v2504, %v3166
  %v3221 = vmul.f32 %v2508, %v3166
  %v3222 = vmul.f32 %v2512, %v3166
  %v3223 = vmul.f32 %v2516, %v3166
  %v3224 = vmul.f32 %v2520, %v3166
  %v3225 = vadd.f32 %v3207, %v3187
  %v3226 = vadd.f32 %v3208, %v3187
  %v3227 = vadd.f32 %v3209, %v3187
  %v3228 = vadd.f32 %v3210, %v3187
  %v3229 = vadd.f32 %v3211, %v3187
  %v3230 = vadd.f32 %v3212, %v3187
  %v3231 = vadd.f32 %v3213, %v3187
  %v3232 = vadd.f32 %v3214, %v3187
  %v3233 = vadd.f32 %v3215, %v3187
  %v3234 = vadd.f32 %v3216, %v3187
  %v3235 = vadd.f32 %v3217, %v3187
  %v3236 = vadd.f32 %v3218, %v3187
  %v3237 = vadd.f32 %v3219, %v3187
  %v3238 = vadd.f32 %v3220, %v3187
  %v3239 = vadd.f32 %v3221, %v3187
  %v3240 = vadd.f32 %v3222, %v3187
  %v3241 = vadd.f32 %v3223, %v3187
  %v3242 = vadd.f32 %v3224, %v3187
  %v3243 = vmax.f32 %v3189, %v3225
  %v3244 = vmax.f32 %v3190, %v3226
  %v3245 = vmax.f32 %v3191, %v3227
  %v3246 = vmax.f32 %v3192, %v3228
  %v3247 = vmax.f32 %v3193, %v3229
  %v3248 = vmax.f32 %v3194, %v3230
  %v3249 = vmax.f32 %v3195, %v3231
  %v3250 = vmax.f32 %v3196, %v3232
  %v3251 = vmax.f32 %v3197, %v3233
  %v3252 = vmax.f32 %v3198, %v3234
  %v3253 = vmax.f32 %v3199, %v3235
  %v3254 = vmax.f32 %v3200, %v3236
  %v3255 = vmax.f32 %v3201, %v3237
  %v3256 = vmax.f32 %v3202, %v3238
  %v3257 = vmax.f32 %v3203, %v3239
  %v3258 = vmax.f32 %v3204, %v3240
  %v3259 = vmax.f32 %v3205, %v3241
  %v3260 = vmax.f32 %v3206, %v3242
  %v3261 = vmul.f32 %v2453, %v3166
  %v3262 = vmul.f32 %v2457, %v3166
  %v3263 = vmul.f32 %v2461, %v3166
  %v3264 = vmul.f32 %v2465, %v3166
  %v3265 = vmul.f32 %v2469, %v3166
  %v3266 = vmul.f32 %v2473, %v3166
  %v3267 = vmul.f32 %v2477, %v3166
  %v3268 = vmul.f32 %v2481, %v3166
  %v3269 = vmul.f32 %v2485, %v3166
  %v3270 = vmul.f32 %v2489, %v3166
  %v3271 = vmul.f32 %v2493, %v3166
  %v3272 = vmul.f32 %v2497, %v3166
  %v3273 = vmul.f32 %v2501, %v3166
  %v3274 = vmul.f32 %v2505, %v3166
  %v3275 = vmul.f32 %v2509, %v3166
  %v3276 = vmul.f32 %v2513, %v3166
  %v3277 = vmul.f32 %v2517, %v3166
  %v3278 = vmul.f32 %v2521, %v3166
  %v3279 = vadd.f32 %v3261, %v3187
  %v3280 = vadd.f32 %v3262, %v3187
  %v3281 = vadd.f32 %v3263, %v3187
  %v3282 = vadd.f32 %v3264, %v3187
  %v3283 = vadd.f32 %v3265, %v3187
  %v3284 = vadd.f32 %v3266, %v3187
  %v3285 = vadd.f32 %v3267, %v3187
  %v3286 = vadd.f32 %v3268, %v3187
  %v3287 = vadd.f32 %v3269, %v3187
  %v3288 = vadd.f32 %v3270, %v3187
  %v3289 = vadd.f32 %v3271, %v3187
  %v3290 = vadd.f32 %v3272, %v3187
  %v3291 = vadd.f32 %v3273, %v3187
  %v3292 = vadd.f32 %v3274, %v3187
  %v3293 = vadd.f32 %v3275, %v3187
  %v3294 = vadd.f32 %v3276, %v3187
  %v3295 = vadd.f32 %v3277, %v3187
  %v3296 = vadd.f32 %v3278, %v3187
  %v3297 = vmax.f32 %v3243, %v3279
  %v3298 = vmax.f32 %v3244, %v3280
  %v3299 = vmax.f32 %v3245, %v3281
  %v3300 = vmax.f32 %v3246, %v3282
  %v3301 = vmax.f32 %v3247, %v3283
  %v3302 = vmax.f32 %v3248, %v3284
  %v3303 = vmax.f32 %v3249, %v3285
  %v3304 = vmax.f32 %v3250, %v3286
  %v3305 = vmax.f32 %v3251, %v3287
  %v3306 = vmax.f32 %v3252, %v3288
  %v3307 = vmax.f32 %v3253, %v3289
  %v3308 = vmax.f32 %v3254, %v3290
  %v3309 = vmax.f32 %v3255, %v3291
  %v3310 = vmax.f32 %v3256, %v3292
  %v3311 = vmax.f32 %v3257, %v3293
  %v3312 = vmax.f32 %v3258, %v3294
  %v3313 = vmax.f32 %v3259, %v3295
  %v3314 = vmax.f32 %v3260, %v3296
  %v3315 = vmul.f32 %v2454, %v3166
  %v3316 = vmul.f32 %v2458, %v3166
  %v3317 = vmul.f32 %v2462, %v3166
  %v3318 = vmul.f32 %v2466, %v3166
  %v3319 = vmul.f32 %v2470, %v3166
  %v3320 = vmul.f32 %v2474, %v3166
  %v3321 = vmul.f32 %v2478, %v3166
  %v3322 = vmul.f32 %v2482, %v3166
  %v3323 = vmul.f32 %v2486, %v3166
  %v3324 = vmul.f32 %v2490, %v3166
  %v3325 = vmul.f32 %v2494, %v3166
  %v3326 = vmul.f32 %v2498, %v3166
  %v3327 = vmul.f32 %v2502, %v3166
  %v3328 = vmul.f32 %v2506, %v3166
  %v3329 = vmul.f32 %v2510, %v3166
  %v3330 = vmul.f32 %v2514, %v3166
  %v3331 = vmul.f32 %v2518, %v3166
  %v3332 = vmul.f32 %v2522, %v3166
  %v3333 = vadd.f32 %v3315, %v3187
  %v3334 = vadd.f32 %v3316, %v3187
  %v3335 = vadd.f32 %v3317, %v3187
  %v3336 = vadd.f32 %v3318, %v3187
  %v3337 = vadd.f32 %v3319, %v3187
  %v3338 = vadd.f32 %v3320, %v3187
  %v3339 = vadd.f32 %v3321, %v3187
  %v3340 = vadd.f32 %v3322, %v3187
  %v3341 = vadd.f32 %v3323, %v3187
  %v3342 = vadd.f32 %v3324, %v3187
  %v3343 = vadd.f32 %v3325, %v3187
  %v3344 = vadd.f32 %v3326, %v3187
  %v3345 = vadd.f32 %v3327, %v3187
  %v3346 = vadd.f32 %v3328, %v3187
  %v3347 = vadd.f32 %v3329, %v3187
  %v3348 = vadd.f32 %v3330, %v3187
  %v3349 = vadd.f32 %v3331, %v3187
  %v3350 = vadd.f32 %v3332, %v3187
  %v3351 = vmax.f32 %v3297, %v3333
  %v3352 = vmax.f32 %v3298, %v3334
  %v3353 = vmax.f32 %v3299, %v3335
  %v3354 = vmax.f32 %v3300, %v3336
  %v3355 = vmax.f32 %v3301, %v3337
  %v3356 = vmax.f32 %v3302, %v3338
  %v3357 = vmax.f32 %v3303, %v3339
  %v3358 = vmax.f32 %v3304, %v3340
  %v3359 = vmax.f32 %v3305, %v3341
  %v3360 = vmax.f32 %v3306, %v3342
  %v3361 = vmax.f32 %v3307, %v3343
  %v3362 = vmax.f32 %v3308, %v3344
  %v3363 = vmax.f32 %v3309, %v3345
  %v3364 = vmax.f32 %v3310, %v3346
  %v3365 = vmax.f32 %v3311, %v3347
  %v3366 = vmax.f32 %v3312, %v3348
  %v3367 = vmax.f32 %v3313, %v3349
  %v3368 = vmax.f32 %v3314, %v3350
  %v3369 = vmax.f32 %v3351, 0.0
  %v3370 = vmax.f32 %v3352, 0.0
  %v3371 = vmax.f32 %v3353, 0.0
  %v3372 = vmax.f32 %v3354, 0.0
  %v3373 = vmax.f32 %v3355, 0.0
  %v3374 = vmax.f32 %v3356, 0.0
  %v3375 = vmax.f32 %v3357, 0.0
  %v3376 = vmax.f32 %v3358, 0.0
  %v3377 = vmax.f32 %v3359, 0.0
  %v3378 = vmax.f32 %v3360, 0.0
  %v3379 = vmax.f32 %v3361, 0.0
  %v3380 = vmax.f32 %v3362, 0.0
  %v3381 = vmax.f32 %v3363, 0.0
  %v3382 = vmax.f32 %v3364, 0.0
  %v3383 = vmax.f32 %v3365, 0.0
  %v3384 = vmax.f32 %v3366, 0.0
  %v3385 = vmax.f32 %v3367, 0.0
  %v3386 = vmax.f32 %v3368, 0.0
  %3387 = vst [vmem:[%s5] sm:$0xff] %v3369
  %3388 = vst [vmem:[%s5 + $0x8] sm:$0xff] %v3370
  %3389 = vst [vmem:[%s5 + $0x10] sm:$0xff] %v3371
  %3390 = vst [vmem:[%s5 + $0x18] sm:$0xff] %v3372
  %3391 = vst [vmem:[%s5 + $0x20] sm:$0xff] %v3373
  %3392 = vst [vmem:[%s5 + $0x28] sm:$0xff] %v3374
  %3393 = vst [vmem:[%s5 + $0x30] sm:$0xff] %v3375
  %3394 = vst [vmem:[%s5 + $0x38] sm:$0xff] %v3376
  %3395 = vst [vmem:[%s5 + $0x40] sm:$0xff] %v3377
  %3396 = vst [vmem:[%s5 + $0x48] sm:$0xff] %v3378
  %3397 = vst [vmem:[%s5 + $0x50] sm:$0xff] %v3379
  %3398 = vst [vmem:[%s5 + $0x58] sm:$0xff] %v3380
  %3399 = vst [vmem:[%s5 + $0x60] sm:$0xff] %v3381
  %3400 = vst [vmem:[%s5 + $0x68] sm:$0xff] %v3382
  %3401 = vst [vmem:[%s5 + $0x70] sm:$0xff] %v3383
  %3402 = vst [vmem:[%s5 + $0x78] sm:$0xff] %v3384
  %3403 = vst [vmem:[%s5 + $0x80] sm:$0xff] %v3385
  %3404 = vst [vmem:[%s5 + $0x88] sm:$0xff] %v3386
  // Predicated region
  $region22: #{resnet34_head_pallas.1} parent=0 // pred_check
    _
  $region23: #{resnet34_head_pallas.1} parent=0 // pred_check_branch
    %3406 = sbr.rel (0) target = $region25
  $region24: #{resnet34_head_pallas.1} parent=0 // pred_region
    _
  $region25: #{resnet34_head_pallas.1} parent=0 // pred_fallthru
    _
  // Predicated region
  $region26: #{resnet34_head_pallas.1} parent=0 // pred_check
    _
  $region27: #{resnet34_head_pallas.1} parent=0 // pred_check_branch
    %3408 = sbr.rel (0) target = $region29
  $region28: #{resnet34_head_pallas.1} parent=0 // pred_region
    _
  $region29: #{resnet34_head_pallas.1} parent=0 // pred_fallthru
    _

</llo_original>
